<compile_context>
chip_gen: v6e
topology: v6e:2x2x1
jax: 0.10.0
libtpu: 0.0.40
codegen_flags: <defaults>
</compile_context>

<pallas_src>
import math
from functools import partial

import jax
import jax.numpy as jnp
from jax.experimental import pallas as pl
from jax.experimental.pallas import tpu as pltpu

C_PAD = 128   # classifier logits padded to a full lane width for a dense store


# ----------------------------- in-kernel helpers -----------------------------

def _layernorm(x, g, b, eps=1e-5):
    # PyTorch LayerNorm: biased variance, eps inside the sqrt.
    mean = jnp.mean(x, axis=-1, keepdims=True)
    var = jnp.mean((x - mean) ** 2, axis=-1, keepdims=True)
    return (x - mean) * jax.lax.rsqrt(var + eps) * g + b


def _gelu(x):
    # torch.nn.GELU() default = exact (erf-based) GELU.
    return 0.5 * x * (1.0 + jax.lax.erf(x * (1.0 / math.sqrt(2.0))))


# --------------------------- fused forward kernel -----------------------------
# One kernel invocation == the whole forward pass for the whole batch:
#   [embedded input] -> L x TransformerBlock -> final LayerNorm -> classifier.

def fused_transformer_kernel(x_ref, bias_ref,
                             w_qkv_ref, b_qkv_ref, wo_ref, bo_ref,
                             ln_g_ref, ln_b_ref,
                             w1_ref, b1_ref, w2_ref, b2_ref,
                             nl_g_ref, nl_b_ref, fc_w_ref, fc_b_ref,
                             out_ref):
    B, T, D = x_ref.shape
    L, _, three_hdk = w_qkv_ref.shape          # (layers, d_model, 3*H*dk)
    Hdk = three_hdk // 3
    BH = bias_ref.shape[0]                     # batch * heads
    H = BH // B
    dk = Hdk // H
    f32 = jnp.float32

    x = x_ref[...].reshape(B * T, D)           # (B*T, D) activations, VMEM-resident
    bias = bias_ref[...]                       # (B*H, 1, T) additive attention-mask bias

    def to_heads(t2d):                         # (B*T, H*dk) -> (B*H, T, dk)
        return t2d.reshape(B, T, H, dk).transpose(0, 2, 1, 3).reshape(BH, T, dk)

    for li in range(L):                        # static unroll; all weights stay in VMEM
        # ---- fused QKV projection: a single (B*T, D) @ (D, 3*H*dk) matmul ----
        # (1/sqrt(dk) is already folded into the Q columns of w_qkv / b_qkv.)
        qkv = jnp.dot(x, w_qkv_ref[li], preferred_element_type=f32) + b_qkv_ref[li]
        q = to_heads(qkv[:, 0:Hdk])
        k = to_heads(qkv[:, Hdk:2 * Hdk])
        v = to_heads(qkv[:, 2 * Hdk:3 * Hdk])

        # ---- scaled-dot-product attention, heads batched on the leading dim ----
        s = jnp.einsum('nqd,nkd->nqk', q, k, preferred_element_type=f32) + bias
        m = jnp.max(s, axis=-1, keepdims=True)
        p = jnp.exp(s - m)
        p = p / jnp.sum(p, axis=-1, keepdims=True)          # exact divide (parity)
        ctx = jnp.einsum('nqk,nkd->nqd', p, v, preferred_element_type=f32)  # (BH, T, dk)

        # ---- output projection: one (B*T, H*dk) @ (H*dk, D) matmul ----
        ctx2d = ctx.reshape(B, H, T, dk).transpose(0, 2, 1, 3).reshape(B * T, Hdk)
        mha = jnp.dot(ctx2d, wo_ref[li], preferred_element_type=f32) + bo_ref[li]

        # ---- TransformerBlock: norm1(ff(norm1(mha + x)) + x)  (norm1 used twice,
        #      both residuals taken from the pre-attention x — matches reference) ----
        g, b = ln_g_ref[li], ln_b_ref[li]
        n1 = _layernorm(mha + x, g, b)
        ff = jnp.dot(n1, w1_ref[li], preferred_element_type=f32) + b1_ref[li]
        ff = _gelu(ff)
        ff = jnp.dot(ff, w2_ref[li], preferred_element_type=f32) + b2_ref[li]
        x = _layernorm(ff + x, g, b)

    # ---- final LayerNorm on the CLS token + classifier (single 2-D matmul) ----
    cls = x.reshape(B, T, D)[:, 0, :]                        # (B, D)
    ncls = _layernorm(cls, nl_g_ref[...], nl_b_ref[...])
    out_ref[...] = (jnp.dot(ncls, fc_w_ref[...], preferred_element_type=f32)
                    + fc_b_ref[...])                         # (B, C_PAD) lane-dense store


# --------------------------------- wrapper ------------------------------------

def transformer_forward(params, input_ids, attention_mask, *, n_heads):
    lp = params["layers"]
    L, D, _ = lp["w_qkv"].shape
    B, T = input_ids.shape
    H = n_heads
    C = params["fc_w"].shape[-1]

    # Embedding lookup + position encoding (glue, plain JAX).
    x = jnp.take(params["embed"], input_ids, axis=0) + params["pe"][:, :T, :]
    # TODO(synk): dropout layers (p=0.1) are identity in eval-mode forward.

    # Additive attention-mask bias over key positions, broadcast over heads
    # (tiny: B*H*T floats; weights themselves are NOT broadcast).
    neg = jnp.where(attention_mask == 0, jnp.float32(-1e30), jnp.float32(0.0))
    bias = jnp.broadcast_to(neg[:, None, None, :], (B, H, 1, T)).reshape(B * H, 1, T)

    # Pad the classifier to a full 128-lane output so the kernel's only HBM
    # store is lane-dense; sliced back to (B, C) below.
    fc_w = jnp.zeros((D, C_PAD), jnp.float32).at[:, :C].set(params["fc_w"])
    fc_b = jnp.zeros((1, C_PAD), jnp.float32).at[:, :C].set(params["fc_b"])

    operands = (
        x, bias,
        lp["w_qkv"], lp["b_qkv"], lp["wo"], lp["bo"],
        lp["ln_g"], lp["ln_b"],
        lp["w1"], lp["b1"], lp["w2"], lp["b2"],
        params["nl_g"], params["nl_b"], fc_w, fc_b,
    )

    vmem = pl.BlockSpec(memory_space=pltpu.MemorySpace.VMEM)
    out = pl.pallas_call(
        fused_transformer_kernel,
        out_shape=jax.ShapeDtypeStruct((B, C_PAD), jnp.float32),
        in_specs=[vmem] * len(operands),
        out_specs=vmem,
    )(*operands)
    return out[:, :C]                                                   # (B, 2)


# ------------------------------ parameter setup -------------------------------

def init_params(key, *, d_model, d_key, n_heads, n_layers, vocab_size, max_len):
    D, dk, H, L = d_model, d_key, n_heads, n_layers
    Hdk, Dff = H * dk, 4 * d_model
    q_scale = 1.0 / math.sqrt(dk)     # folded into the Q projection once, here

    def dense(k, fan_in, fan_out):
        kw, kb = jax.random.split(k)
        w = jax.random.normal(kw, (fan_in, fan_out), jnp.float32) * 0.05
        b = jax.random.normal(kb, (1, fan_out), jnp.float32) * 0.05
        return w, b

    keys = jax.random.split(key, L + 2)
    acc = {n: [] for n in ("w_qkv", "b_qkv", "wo", "bo", "ln_g", "ln_b",
                           "w1", "b1", "w2", "b2")}
    for li in range(L):
        ks = jax.random.split(keys[li], 6)
        wq, bq = dense(ks[0], D, Hdk)
        wk, bk = dense(ks[1], D, Hdk)
        wv, bv = dense(ks[2], D, Hdk)
        wo, bo = dense(ks[3], Hdk, D)
        w1, b1 = dense(ks[4], D, Dff)
        w2, b2 = dense(ks[5], Dff, D)
        # Fused QKV weight (Q pre-scaled by 1/sqrt(dk)); head h owns columns
        # [h*dk:(h+1)*dk] of each of the Q/K/V slabs (same layout as torch .view).
        acc["w_qkv"].append(jnp.concatenate([wq * q_scale, wk, wv], axis=1))  # (D, 3*Hdk)
        acc["b_qkv"].append(jnp.concatenate([bq * q_scale, bk, bv], axis=1))  # (1, 3*Hdk)
        acc["wo"].append(wo)                                                  # (Hdk, D)
        acc["bo"].append(bo)                                                  # (1, D)
        acc["ln_g"].append(jnp.ones((1, D), jnp.float32))
        acc["ln_b"].append(jnp.zeros((1, D), jnp.float32))
        acc["w1"].append(w1); acc["b1"].append(b1)
        acc["w2"].append(w2); acc["b2"].append(b2)
    layers = {n: jnp.stack(v) for n, v in acc.items()}

    k_emb, k_fc = keys[L], keys[L + 1]
    embed = jax.random.normal(k_emb, (vocab_size + 2, D), jnp.float32) * 0.05
    fc_w, fc_b = dense(k_fc, D, 2)

    # Sinusoidal position encoding (same formula as PositionEncoding.__init__).
    pos = jnp.arange(max_len, dtype=jnp.float32)[:, None]
    div = jnp.exp(jnp.arange(0, D, 2, dtype=jnp.float32) * (-math.log(10000.0) / D))
    pe = jnp.zeros((1, max_len, D), jnp.float32)
    pe = pe.at[0, :, 0::2].set(jnp.sin(pos * div))
    pe = pe.at[0, :, 1::2].set(jnp.cos(pos * div))

    return dict(layers=layers, embed=embed, pe=pe,
                nl_g=jnp.ones((1, D), jnp.float32),
                nl_b=jnp.zeros((1, D), jnp.float32),
                fc_w=fc_w, fc_b=fc_b)


# ----------------------------------- main --------------------------------------

if __name__ == "__main__":
    d_model, d_key, n_heads, n_layers = 32, 8, 4, 2
    vocab_size, max_len = 50, 16
    batch, seq = 2, 8

    key = jax.random.PRNGKey(0)
    k_param, k_ids = jax.random.split(key)
    params = init_params(k_param, d_model=d_model, d_key=d_key, n_heads=n_heads,
                         n_layers=n_layers, vocab_size=vocab_size, max_len=max_len)

    input_ids = jax.random.randint(k_ids, (batch, seq), 0, vocab_size + 2, dtype=jnp.int32)
    attention_mask = jnp.array([[1, 1, 1, 1, 1, 1, 0, 0],
                                [1, 1, 1, 1, 1, 1, 1, 1]], dtype=jnp.int32)

    fwd = jax.jit(partial(transformer_forward, n_heads=n_heads))
    logits = fwd(params, input_ids, attention_mask)
    jax.block_until_ready(logits)
    assert logits.shape == (batch, 2) and logits.dtype == jnp.float32
    print("KERNEL_OK")
</pallas_src>

<mosaic_0001>
module attributes {stable_mosaic.version = 11 : i64} {
  func.func @fused_transformer_kernel(%arg0: memref<2x8x32xf32, #tpu.memory_space<vmem>>, %arg1: memref<8x1x8xf32, #tpu.memory_space<vmem>>, %arg2: memref<2x32x96xf32, #tpu.memory_space<vmem>>, %arg3: memref<2x1x96xf32, #tpu.memory_space<vmem>>, %arg4: memref<2x32x32xf32, #tpu.memory_space<vmem>>, %arg5: memref<2x1x32xf32, #tpu.memory_space<vmem>>, %arg6: memref<2x1x32xf32, #tpu.memory_space<vmem>>, %arg7: memref<2x1x32xf32, #tpu.memory_space<vmem>>, %arg8: memref<2x32x128xf32, #tpu.memory_space<vmem>>, %arg9: memref<2x1x128xf32, #tpu.memory_space<vmem>>, %arg10: memref<2x128x32xf32, #tpu.memory_space<vmem>>, %arg11: memref<2x1x32xf32, #tpu.memory_space<vmem>>, %arg12: memref<1x32xf32, #tpu.memory_space<vmem>>, %arg13: memref<1x32xf32, #tpu.memory_space<vmem>>, %arg14: memref<32x128xf32, #tpu.memory_space<vmem>>, %arg15: memref<1x128xf32, #tpu.memory_space<vmem>>, %arg16: memref<2x128xf32, #tpu.memory_space<vmem>>) attributes {dimension_semantics = [], scalar_prefetch = 0 : i64, scratch_operands = 0 : i64, tpu.core_type = #tpu.core_type<tc>} {
    %c0 = arith.constant 0 : index
    %c0_0 = arith.constant 0 : index
    %c0_1 = arith.constant 0 : index
    %0 = vector.load %arg0[%c0, %c0_0, %c0_1] : memref<2x8x32xf32, #tpu.memory_space<vmem>>, vector<2x8x32xf32>
    %1 = vector.shape_cast %0 : vector<2x8x32xf32> to vector<16x32xf32>
    %c0_2 = arith.constant 0 : index
    %c0_3 = arith.constant 0 : index
    %c0_4 = arith.constant 0 : index
    %2 = vector.load %arg1[%c0_2, %c0_3, %c0_4] : memref<8x1x8xf32, #tpu.memory_space<vmem>>, vector<8x1x8xf32>
    %c0_5 = arith.constant 0 : index
    %c0_6 = arith.constant 0 : index
    %c0_7 = arith.constant 0 : index
    %3 = vector.load %arg2[%c0_5, %c0_6, %c0_7] : memref<2x32x96xf32, #tpu.memory_space<vmem>>, vector<1x32x96xf32>
    %4 = vector.shape_cast %3 : vector<1x32x96xf32> to vector<32x96xf32>
    %cst = arith.constant dense<0.000000e+00> : vector<16x96xf32>
    %5 = tpu.matmul %1, %4, %cst {dimension_numbers = #tpu.dot_dimension_numbers<[1], [0], [0], [1], [0, 0, 1, 1], [], []>} : vector<16x32xf32>, vector<32x96xf32>, vector<16x96xf32> -> vector<16x96xf32>
    %c0_8 = arith.constant 0 : index
    %c0_9 = arith.constant 0 : index
    %c0_10 = arith.constant 0 : index
    %6 = vector.load %arg3[%c0_8, %c0_9, %c0_10] : memref<2x1x96xf32, #tpu.memory_space<vmem>>, vector<1x1x96xf32>
    %7 = vector.shape_cast %6 : vector<1x1x96xf32> to vector<1x96xf32>
    %8 = vector.broadcast %7 : vector<1x96xf32> to vector<16x96xf32>
    %9 = arith.addf %5, %8 : vector<16x96xf32>
    %10 = vector.extract_strided_slice %9 {offsets = [0, 0], sizes = [16, 32], strides = [1, 1]} : vector<16x96xf32> to vector<16x32xf32>
    %11 = vector.shape_cast %10 : vector<16x32xf32> to vector<2x8x4x8xf32>
    %12 = tpu.transpose %11, [0, 2, 1, 3] : vector<2x8x4x8xf32> -> vector<2x4x8x8xf32>
    %13 = vector.shape_cast %12 : vector<2x4x8x8xf32> to vector<8x8x8xf32>
    %14 = vector.extract_strided_slice %9 {offsets = [0, 32], sizes = [16, 32], strides = [1, 1]} : vector<16x96xf32> to vector<16x32xf32>
    %15 = vector.shape_cast %14 : vector<16x32xf32> to vector<2x8x4x8xf32>
    %16 = tpu.transpose %15, [0, 2, 1, 3] : vector<2x8x4x8xf32> -> vector<2x4x8x8xf32>
    %17 = vector.shape_cast %16 : vector<2x4x8x8xf32> to vector<8x8x8xf32>
    %18 = vector.extract_strided_slice %9 {offsets = [0, 64], sizes = [16, 32], strides = [1, 1]} : vector<16x96xf32> to vector<16x32xf32>
    %19 = vector.shape_cast %18 : vector<16x32xf32> to vector<2x8x4x8xf32>
    %20 = tpu.transpose %19, [0, 2, 1, 3] : vector<2x8x4x8xf32> -> vector<2x4x8x8xf32>
    %21 = vector.shape_cast %20 : vector<2x4x8x8xf32> to vector<8x8x8xf32>
    "tpu.trace_start"() <{level = 10 : i32, message = "nqd,nkd->nqk"}> : () -> ()
    %cst_11 = arith.constant dense<0.000000e+00> : vector<8x8x8xf32>
    %22 = tpu.matmul %13, %17, %cst_11 {dimension_numbers = #tpu.dot_dimension_numbers<[2], [2], [1], [1], [0, 0, 0, 1, 1, 1], [0], [0]>} : vector<8x8x8xf32>, vector<8x8x8xf32>, vector<8x8x8xf32> -> vector<8x8x8xf32>
    "tpu.trace_stop"() : () -> ()
    %23 = vector.broadcast %2 : vector<8x1x8xf32> to vector<8x8x8xf32>
    %24 = arith.addf %22, %23 : vector<8x8x8xf32>
    %cst_12 = arith.constant dense<0xFF800000> : vector<8x8xf32>
    %25 = vector.multi_reduction <maximumf>, %24, %cst_12 [2] : vector<8x8x8xf32> to vector<8x8xf32>
    %26 = vector.shape_cast %25 : vector<8x8xf32> to vector<8x8x1xf32>
    %27 = vector.broadcast %26 : vector<8x8x1xf32> to vector<8x8x8xf32>
    %28 = arith.subf %24, %27 : vector<8x8x8xf32>
    %29 = math.exp %28 : vector<8x8x8xf32>
    %cst_13 = arith.constant dense<0.000000e+00> : vector<8x8xf32>
    %30 = vector.multi_reduction <add>, %29, %cst_13 [2] : vector<8x8x8xf32> to vector<8x8xf32>
    %31 = vector.shape_cast %30 : vector<8x8xf32> to vector<8x8x1xf32>
    %32 = vector.broadcast %31 : vector<8x8x1xf32> to vector<8x8x8xf32>
    %33 = arith.divf %29, %32 : vector<8x8x8xf32>
    "tpu.trace_start"() <{level = 10 : i32, message = "nqk,nkd->nqd"}> : () -> ()
    %cst_14 = arith.constant dense<0.000000e+00> : vector<8x8x8xf32>
    %34 = tpu.matmul %33, %21, %cst_14 {dimension_numbers = #tpu.dot_dimension_numbers<[2], [1], [1], [2], [0, 0, 0, 1, 1, 2], [0], [0]>} : vector<8x8x8xf32>, vector<8x8x8xf32>, vector<8x8x8xf32> -> vector<8x8x8xf32>
    "tpu.trace_stop"() : () -> ()
    %35 = vector.shape_cast %34 : vector<8x8x8xf32> to vector<2x4x8x8xf32>
    %36 = tpu.transpose %35, [0, 2, 1, 3] : vector<2x4x8x8xf32> -> vector<2x8x4x8xf32>
    %37 = vector.shape_cast %36 : vector<2x8x4x8xf32> to vector<16x32xf32>
    %c0_15 = arith.constant 0 : index
    %c0_16 = arith.constant 0 : index
    %c0_17 = arith.constant 0 : index
    %38 = vector.load %arg4[%c0_15, %c0_16, %c0_17] : memref<2x32x32xf32, #tpu.memory_space<vmem>>, vector<1x32x32xf32>
    %39 = vector.shape_cast %38 : vector<1x32x32xf32> to vector<32x32xf32>
    %cst_18 = arith.constant dense<0.000000e+00> : vector<16x32xf32>
    %40 = tpu.matmul %37, %39, %cst_18 {dimension_numbers = #tpu.dot_dimension_numbers<[1], [0], [0], [1], [0, 0, 1, 1], [], []>} : vector<16x32xf32>, vector<32x32xf32>, vector<16x32xf32> -> vector<16x32xf32>
    %c0_19 = arith.constant 0 : index
    %c0_20 = arith.constant 0 : index
    %c0_21 = arith.constant 0 : index
    %41 = vector.load %arg5[%c0_19, %c0_20, %c0_21] : memref<2x1x32xf32, #tpu.memory_space<vmem>>, vector<1x1x32xf32>
    %42 = vector.shape_cast %41 : vector<1x1x32xf32> to vector<1x32xf32>
    %43 = vector.broadcast %42 : vector<1x32xf32> to vector<16x32xf32>
    %44 = arith.addf %40, %43 : vector<16x32xf32>
    %c0_22 = arith.constant 0 : index
    %c0_23 = arith.constant 0 : index
    %c0_24 = arith.constant 0 : index
    %45 = vector.load %arg6[%c0_22, %c0_23, %c0_24] : memref<2x1x32xf32, #tpu.memory_space<vmem>>, vector<1x1x32xf32>
    %46 = vector.shape_cast %45 : vector<1x1x32xf32> to vector<1x32xf32>
    %c0_25 = arith.constant 0 : index
    %c0_26 = arith.constant 0 : index
    %c0_27 = arith.constant 0 : index
    %47 = vector.load %arg7[%c0_25, %c0_26, %c0_27] : memref<2x1x32xf32, #tpu.memory_space<vmem>>, vector<1x1x32xf32>
    %48 = vector.shape_cast %47 : vector<1x1x32xf32> to vector<1x32xf32>
    %49 = arith.addf %44, %1 : vector<16x32xf32>
    %cst_28 = arith.constant dense<0.000000e+00> : vector<16xf32>
    %50 = vector.multi_reduction <add>, %49, %cst_28 [1] : vector<16x32xf32> to vector<16xf32>
    %51 = vector.shape_cast %50 : vector<16xf32> to vector<16x1xf32>
    %cst_29 = arith.constant 3.200000e+01 : f32
    %52 = vector.broadcast %cst_29 : f32 to vector<16x1xf32>
    %53 = arith.divf %51, %52 : vector<16x1xf32>
    %54 = vector.broadcast %53 : vector<16x1xf32> to vector<16x32xf32>
    %55 = arith.subf %49, %54 : vector<16x32xf32>
    %56 = arith.mulf %55, %55 : vector<16x32xf32>
    %cst_30 = arith.constant dense<0.000000e+00> : vector<16xf32>
    %57 = vector.multi_reduction <add>, %56, %cst_30 [1] : vector<16x32xf32> to vector<16xf32>
    %58 = vector.shape_cast %57 : vector<16xf32> to vector<16x1xf32>
    %cst_31 = arith.constant 3.200000e+01 : f32
    %59 = vector.broadcast %cst_31 : f32 to vector<16x1xf32>
    %60 = arith.divf %58, %59 : vector<16x1xf32>
    %61 = vector.broadcast %53 : vector<16x1xf32> to vector<16x32xf32>
    %62 = arith.subf %49, %61 : vector<16x32xf32>
    %cst_32 = arith.constant 9.99999974E-6 : f32
    %63 = vector.broadcast %cst_32 : f32 to vector<16x1xf32>
    %64 = arith.addf %60, %63 : vector<16x1xf32>
    %65 = math.rsqrt %64 : vector<16x1xf32>
    %66 = vector.broadcast %65 : vector<16x1xf32> to vector<16x32xf32>
    %67 = arith.mulf %62, %66 : vector<16x32xf32>
    %68 = vector.broadcast %46 : vector<1x32xf32> to vector<16x32xf32>
    %69 = arith.mulf %67, %68 : vector<16x32xf32>
    %70 = vector.broadcast %48 : vector<1x32xf32> to vector<16x32xf32>
    %71 = arith.addf %69, %70 : vector<16x32xf32>
    %c0_33 = arith.constant 0 : index
    %c0_34 = arith.constant 0 : index
    %c0_35 = arith.constant 0 : index
    %72 = vector.load %arg8[%c0_33, %c0_34, %c0_35] : memref<2x32x128xf32, #tpu.memory_space<vmem>>, vector<1x32x128xf32>
    %73 = vector.shape_cast %72 : vector<1x32x128xf32> to vector<32x128xf32>
    %cst_36 = arith.constant dense<0.000000e+00> : vector<16x128xf32>
    %74 = tpu.matmul %71, %73, %cst_36 {dimension_numbers = #tpu.dot_dimension_numbers<[1], [0], [0], [1], [0, 0, 1, 1], [], []>} : vector<16x32xf32>, vector<32x128xf32>, vector<16x128xf32> -> vector<16x128xf32>
    %c0_37 = arith.constant 0 : index
    %c0_38 = arith.constant 0 : index
    %c0_39 = arith.constant 0 : index
    %75 = vector.load %arg9[%c0_37, %c0_38, %c0_39] : memref<2x1x128xf32, #tpu.memory_space<vmem>>, vector<1x1x128xf32>
    %76 = vector.shape_cast %75 : vector<1x1x128xf32> to vector<1x128xf32>
    %77 = vector.broadcast %76 : vector<1x128xf32> to vector<16x128xf32>
    %78 = arith.addf %74, %77 : vector<16x128xf32>
    %cst_40 = arith.constant 5.000000e-01 : f32
    %79 = vector.broadcast %cst_40 : f32 to vector<16x128xf32>
    %80 = arith.mulf %79, %78 : vector<16x128xf32>
    %cst_41 = arith.constant 0.707106769 : f32
    %81 = vector.broadcast %cst_41 : f32 to vector<16x128xf32>
    %82 = arith.mulf %78, %81 : vector<16x128xf32>
    %83 = math.erf %82 : vector<16x128xf32>
    %cst_42 = arith.constant 1.000000e+00 : f32
    %84 = vector.broadcast %cst_42 : f32 to vector<16x128xf32>
    %85 = arith.addf %84, %83 : vector<16x128xf32>
    %86 = arith.mulf %80, %85 : vector<16x128xf32>
    %c0_43 = arith.constant 0 : index
    %c0_44 = arith.constant 0 : index
    %c0_45 = arith.constant 0 : index
    %87 = vector.load %arg10[%c0_43, %c0_44, %c0_45] : memref<2x128x32xf32, #tpu.memory_space<vmem>>, vector<1x128x32xf32>
    %88 = vector.shape_cast %87 : vector<1x128x32xf32> to vector<128x32xf32>
    %cst_46 = arith.constant dense<0.000000e+00> : vector<16x32xf32>
    %89 = tpu.matmul %86, %88, %cst_46 {dimension_numbers = #tpu.dot_dimension_numbers<[1], [0], [0], [1], [0, 0, 1, 1], [], []>} : vector<16x128xf32>, vector<128x32xf32>, vector<16x32xf32> -> vector<16x32xf32>
    %c0_47 = arith.constant 0 : index
    %c0_48 = arith.constant 0 : index
    %c0_49 = arith.constant 0 : index
    %90 = vector.load %arg11[%c0_47, %c0_48, %c0_49] : memref<2x1x32xf32, #tpu.memory_space<vmem>>, vector<1x1x32xf32>
    %91 = vector.shape_cast %90 : vector<1x1x32xf32> to vector<1x32xf32>
    %92 = vector.broadcast %91 : vector<1x32xf32> to vector<16x32xf32>
    %93 = arith.addf %89, %92 : vector<16x32xf32>
    %94 = arith.addf %93, %1 : vector<16x32xf32>
    %cst_50 = arith.constant dense<0.000000e+00> : vector<16xf32>
    %95 = vector.multi_reduction <add>, %94, %cst_50 [1] : vector<16x32xf32> to vector<16xf32>
    %96 = vector.shape_cast %95 : vector<16xf32> to vector<16x1xf32>
    %cst_51 = arith.constant 3.200000e+01 : f32
    %97 = vector.broadcast %cst_51 : f32 to vector<16x1xf32>
    %98 = arith.divf %96, %97 : vector<16x1xf32>
    %99 = vector.broadcast %98 : vector<16x1xf32> to vector<16x32xf32>
    %100 = arith.subf %94, %99 : vector<16x32xf32>
    %101 = arith.mulf %100, %100 : vector<16x32xf32>
    %cst_52 = arith.constant dense<0.000000e+00> : vector<16xf32>
    %102 = vector.multi_reduction <add>, %101, %cst_52 [1] : vector<16x32xf32> to vector<16xf32>
    %103 = vector.shape_cast %102 : vector<16xf32> to vector<16x1xf32>
    %cst_53 = arith.constant 3.200000e+01 : f32
    %104 = vector.broadcast %cst_53 : f32 to vector<16x1xf32>
    %105 = arith.divf %103, %104 : vector<16x1xf32>
    %106 = vector.broadcast %98 : vector<16x1xf32> to vector<16x32xf32>
    %107 = arith.subf %94, %106 : vector<16x32xf32>
    %cst_54 = arith.constant 9.99999974E-6 : f32
    %108 = vector.broadcast %cst_54 : f32 to vector<16x1xf32>
    %109 = arith.addf %105, %108 : vector<16x1xf32>
    %110 = math.rsqrt %109 : vector<16x1xf32>
    %111 = vector.broadcast %110 : vector<16x1xf32> to vector<16x32xf32>
    %112 = arith.mulf %107, %111 : vector<16x32xf32>
    %113 = vector.broadcast %46 : vector<1x32xf32> to vector<16x32xf32>
    %114 = arith.mulf %112, %113 : vector<16x32xf32>
    %115 = vector.broadcast %48 : vector<1x32xf32> to vector<16x32xf32>
    %116 = arith.addf %114, %115 : vector<16x32xf32>
    %c1 = arith.constant 1 : index
    %c0_55 = arith.constant 0 : index
    %c0_56 = arith.constant 0 : index
    %117 = vector.load %arg2[%c1, %c0_55, %c0_56] : memref<2x32x96xf32, #tpu.memory_space<vmem>>, vector<1x32x96xf32>
    %118 = vector.shape_cast %117 : vector<1x32x96xf32> to vector<32x96xf32>
    %cst_57 = arith.constant dense<0.000000e+00> : vector<16x96xf32>
    %119 = tpu.matmul %116, %118, %cst_57 {dimension_numbers = #tpu.dot_dimension_numbers<[1], [0], [0], [1], [0, 0, 1, 1], [], []>} : vector<16x32xf32>, vector<32x96xf32>, vector<16x96xf32> -> vector<16x96xf32>
    %c1_58 = arith.constant 1 : index
    %c0_59 = arith.constant 0 : index
    %c0_60 = arith.constant 0 : index
    %120 = vector.load %arg3[%c1_58, %c0_59, %c0_60] : memref<2x1x96xf32, #tpu.memory_space<vmem>>, vector<1x1x96xf32>
    %121 = vector.shape_cast %120 : vector<1x1x96xf32> to vector<1x96xf32>
    %122 = vector.broadcast %121 : vector<1x96xf32> to vector<16x96xf32>
    %123 = arith.addf %119, %122 : vector<16x96xf32>
    %124 = vector.extract_strided_slice %123 {offsets = [0, 0], sizes = [16, 32], strides = [1, 1]} : vector<16x96xf32> to vector<16x32xf32>
    %125 = vector.shape_cast %124 : vector<16x32xf32> to vector<2x8x4x8xf32>
    %126 = tpu.transpose %125, [0, 2, 1, 3] : vector<2x8x4x8xf32> -> vector<2x4x8x8xf32>
    %127 = vector.shape_cast %126 : vector<2x4x8x8xf32> to vector<8x8x8xf32>
    %128 = vector.extract_strided_slice %123 {offsets = [0, 32], sizes = [16, 32], strides = [1, 1]} : vector<16x96xf32> to vector<16x32xf32>
    %129 = vector.shape_cast %128 : vector<16x32xf32> to vector<2x8x4x8xf32>
    %130 = tpu.transpose %129, [0, 2, 1, 3] : vector<2x8x4x8xf32> -> vector<2x4x8x8xf32>
    %131 = vector.shape_cast %130 : vector<2x4x8x8xf32> to vector<8x8x8xf32>
    %132 = vector.extract_strided_slice %123 {offsets = [0, 64], sizes = [16, 32], strides = [1, 1]} : vector<16x96xf32> to vector<16x32xf32>
    %133 = vector.shape_cast %132 : vector<16x32xf32> to vector<2x8x4x8xf32>
    %134 = tpu.transpose %133, [0, 2, 1, 3] : vector<2x8x4x8xf32> -> vector<2x4x8x8xf32>
    %135 = vector.shape_cast %134 : vector<2x4x8x8xf32> to vector<8x8x8xf32>
    "tpu.trace_start"() <{level = 10 : i32, message = "nqd,nkd->nqk"}> : () -> ()
    %cst_61 = arith.constant dense<0.000000e+00> : vector<8x8x8xf32>
    %136 = tpu.matmul %127, %131, %cst_61 {dimension_numbers = #tpu.dot_dimension_numbers<[2], [2], [1], [1], [0, 0, 0, 1, 1, 1], [0], [0]>} : vector<8x8x8xf32>, vector<8x8x8xf32>, vector<8x8x8xf32> -> vector<8x8x8xf32>
    "tpu.trace_stop"() : () -> ()
    %137 = vector.broadcast %2 : vector<8x1x8xf32> to vector<8x8x8xf32>
    %138 = arith.addf %136, %137 : vector<8x8x8xf32>
    %cst_62 = arith.constant dense<0xFF800000> : vector<8x8xf32>
    %139 = vector.multi_reduction <maximumf>, %138, %cst_62 [2] : vector<8x8x8xf32> to vector<8x8xf32>
    %140 = vector.shape_cast %139 : vector<8x8xf32> to vector<8x8x1xf32>
    %141 = vector.broadcast %140 : vector<8x8x1xf32> to vector<8x8x8xf32>
    %142 = arith.subf %138, %141 : vector<8x8x8xf32>
    %143 = math.exp %142 : vector<8x8x8xf32>
    %cst_63 = arith.constant dense<0.000000e+00> : vector<8x8xf32>
    %144 = vector.multi_reduction <add>, %143, %cst_63 [2] : vector<8x8x8xf32> to vector<8x8xf32>
    %145 = vector.shape_cast %144 : vector<8x8xf32> to vector<8x8x1xf32>
    %146 = vector.broadcast %145 : vector<8x8x1xf32> to vector<8x8x8xf32>
    %147 = arith.divf %143, %146 : vector<8x8x8xf32>
    "tpu.trace_start"() <{level = 10 : i32, message = "nqk,nkd->nqd"}> : () -> ()
    %cst_64 = arith.constant dense<0.000000e+00> : vector<8x8x8xf32>
    %148 = tpu.matmul %147, %135, %cst_64 {dimension_numbers = #tpu.dot_dimension_numbers<[2], [1], [1], [2], [0, 0, 0, 1, 1, 2], [0], [0]>} : vector<8x8x8xf32>, vector<8x8x8xf32>, vector<8x8x8xf32> -> vector<8x8x8xf32>
    "tpu.trace_stop"() : () -> ()
    %149 = vector.shape_cast %148 : vector<8x8x8xf32> to vector<2x4x8x8xf32>
    %150 = tpu.transpose %149, [0, 2, 1, 3] : vector<2x4x8x8xf32> -> vector<2x8x4x8xf32>
    %151 = vector.shape_cast %150 : vector<2x8x4x8xf32> to vector<16x32xf32>
    %c1_65 = arith.constant 1 : index
    %c0_66 = arith.constant 0 : index
    %c0_67 = arith.constant 0 : index
    %152 = vector.load %arg4[%c1_65, %c0_66, %c0_67] : memref<2x32x32xf32, #tpu.memory_space<vmem>>, vector<1x32x32xf32>
    %153 = vector.shape_cast %152 : vector<1x32x32xf32> to vector<32x32xf32>
    %cst_68 = arith.constant dense<0.000000e+00> : vector<16x32xf32>
    %154 = tpu.matmul %151, %153, %cst_68 {dimension_numbers = #tpu.dot_dimension_numbers<[1], [0], [0], [1], [0, 0, 1, 1], [], []>} : vector<16x32xf32>, vector<32x32xf32>, vector<16x32xf32> -> vector<16x32xf32>
    %c1_69 = arith.constant 1 : index
    %c0_70 = arith.constant 0 : index
    %c0_71 = arith.constant 0 : index
    %155 = vector.load %arg5[%c1_69, %c0_70, %c0_71] : memref<2x1x32xf32, #tpu.memory_space<vmem>>, vector<1x1x32xf32>
    %156 = vector.shape_cast %155 : vector<1x1x32xf32> to vector<1x32xf32>
    %157 = vector.broadcast %156 : vector<1x32xf32> to vector<16x32xf32>
    %158 = arith.addf %154, %157 : vector<16x32xf32>
    %c1_72 = arith.constant 1 : index
    %c0_73 = arith.constant 0 : index
    %c0_74 = arith.constant 0 : index
    %159 = vector.load %arg6[%c1_72, %c0_73, %c0_74] : memref<2x1x32xf32, #tpu.memory_space<vmem>>, vector<1x1x32xf32>
    %160 = vector.shape_cast %159 : vector<1x1x32xf32> to vector<1x32xf32>
    %c1_75 = arith.constant 1 : index
    %c0_76 = arith.constant 0 : index
    %c0_77 = arith.constant 0 : index
    %161 = vector.load %arg7[%c1_75, %c0_76, %c0_77] : memref<2x1x32xf32, #tpu.memory_space<vmem>>, vector<1x1x32xf32>
    %162 = vector.shape_cast %161 : vector<1x1x32xf32> to vector<1x32xf32>
    %163 = arith.addf %158, %116 : vector<16x32xf32>
    %cst_78 = arith.constant dense<0.000000e+00> : vector<16xf32>
    %164 = vector.multi_reduction <add>, %163, %cst_78 [1] : vector<16x32xf32> to vector<16xf32>
    %165 = vector.shape_cast %164 : vector<16xf32> to vector<16x1xf32>
    %cst_79 = arith.constant 3.200000e+01 : f32
    %166 = vector.broadcast %cst_79 : f32 to vector<16x1xf32>
    %167 = arith.divf %165, %166 : vector<16x1xf32>
    %168 = vector.broadcast %167 : vector<16x1xf32> to vector<16x32xf32>
    %169 = arith.subf %163, %168 : vector<16x32xf32>
    %170 = arith.mulf %169, %169 : vector<16x32xf32>
    %cst_80 = arith.constant dense<0.000000e+00> : vector<16xf32>
    %171 = vector.multi_reduction <add>, %170, %cst_80 [1] : vector<16x32xf32> to vector<16xf32>
    %172 = vector.shape_cast %171 : vector<16xf32> to vector<16x1xf32>
    %cst_81 = arith.constant 3.200000e+01 : f32
    %173 = vector.broadcast %cst_81 : f32 to vector<16x1xf32>
    %174 = arith.divf %172, %173 : vector<16x1xf32>
    %175 = vector.broadcast %167 : vector<16x1xf32> to vector<16x32xf32>
    %176 = arith.subf %163, %175 : vector<16x32xf32>
    %cst_82 = arith.constant 9.99999974E-6 : f32
    %177 = vector.broadcast %cst_82 : f32 to vector<16x1xf32>
    %178 = arith.addf %174, %177 : vector<16x1xf32>
    %179 = math.rsqrt %178 : vector<16x1xf32>
    %180 = vector.broadcast %179 : vector<16x1xf32> to vector<16x32xf32>
    %181 = arith.mulf %176, %180 : vector<16x32xf32>
    %182 = vector.broadcast %160 : vector<1x32xf32> to vector<16x32xf32>
    %183 = arith.mulf %181, %182 : vector<16x32xf32>
    %184 = vector.broadcast %162 : vector<1x32xf32> to vector<16x32xf32>
    %185 = arith.addf %183, %184 : vector<16x32xf32>
    %c1_83 = arith.constant 1 : index
    %c0_84 = arith.constant 0 : index
    %c0_85 = arith.constant 0 : index
    %186 = vector.load %arg8[%c1_83, %c0_84, %c0_85] : memref<2x32x128xf32, #tpu.memory_space<vmem>>, vector<1x32x128xf32>
    %187 = vector.shape_cast %186 : vector<1x32x128xf32> to vector<32x128xf32>
    %cst_86 = arith.constant dense<0.000000e+00> : vector<16x128xf32>
    %188 = tpu.matmul %185, %187, %cst_86 {dimension_numbers = #tpu.dot_dimension_numbers<[1], [0], [0], [1], [0, 0, 1, 1], [], []>} : vector<16x32xf32>, vector<32x128xf32>, vector<16x128xf32> -> vector<16x128xf32>
    %c1_87 = arith.constant 1 : index
    %c0_88 = arith.constant 0 : index
    %c0_89 = arith.constant 0 : index
    %189 = vector.load %arg9[%c1_87, %c0_88, %c0_89] : memref<2x1x128xf32, #tpu.memory_space<vmem>>, vector<1x1x128xf32>
    %190 = vector.shape_cast %189 : vector<1x1x128xf32> to vector<1x128xf32>
    %191 = vector.broadcast %190 : vector<1x128xf32> to vector<16x128xf32>
    %192 = arith.addf %188, %191 : vector<16x128xf32>
    %cst_90 = arith.constant 5.000000e-01 : f32
    %193 = vector.broadcast %cst_90 : f32 to vector<16x128xf32>
    %194 = arith.mulf %193, %192 : vector<16x128xf32>
    %cst_91 = arith.constant 0.707106769 : f32
    %195 = vector.broadcast %cst_91 : f32 to vector<16x128xf32>
    %196 = arith.mulf %192, %195 : vector<16x128xf32>
    %197 = math.erf %196 : vector<16x128xf32>
    %cst_92 = arith.constant 1.000000e+00 : f32
    %198 = vector.broadcast %cst_92 : f32 to vector<16x128xf32>
    %199 = arith.addf %198, %197 : vector<16x128xf32>
    %200 = arith.mulf %194, %199 : vector<16x128xf32>
    %c1_93 = arith.constant 1 : index
    %c0_94 = arith.constant 0 : index
    %c0_95 = arith.constant 0 : index
    %201 = vector.load %arg10[%c1_93, %c0_94, %c0_95] : memref<2x128x32xf32, #tpu.memory_space<vmem>>, vector<1x128x32xf32>
    %202 = vector.shape_cast %201 : vector<1x128x32xf32> to vector<128x32xf32>
    %cst_96 = arith.constant dense<0.000000e+00> : vector<16x32xf32>
    %203 = tpu.matmul %200, %202, %cst_96 {dimension_numbers = #tpu.dot_dimension_numbers<[1], [0], [0], [1], [0, 0, 1, 1], [], []>} : vector<16x128xf32>, vector<128x32xf32>, vector<16x32xf32> -> vector<16x32xf32>
    %c1_97 = arith.constant 1 : index
    %c0_98 = arith.constant 0 : index
    %c0_99 = arith.constant 0 : index
    %204 = vector.load %arg11[%c1_97, %c0_98, %c0_99] : memref<2x1x32xf32, #tpu.memory_space<vmem>>, vector<1x1x32xf32>
    %205 = vector.shape_cast %204 : vector<1x1x32xf32> to vector<1x32xf32>
    %206 = vector.broadcast %205 : vector<1x32xf32> to vector<16x32xf32>
    %207 = arith.addf %203, %206 : vector<16x32xf32>
    %208 = arith.addf %207, %116 : vector<16x32xf32>
    %cst_100 = arith.constant dense<0.000000e+00> : vector<16xf32>
    %209 = vector.multi_reduction <add>, %208, %cst_100 [1] : vector<16x32xf32> to vector<16xf32>
    %210 = vector.shape_cast %209 : vector<16xf32> to vector<16x1xf32>
    %cst_101 = arith.constant 3.200000e+01 : f32
    %211 = vector.broadcast %cst_101 : f32 to vector<16x1xf32>
    %212 = arith.divf %210, %211 : vector<16x1xf32>
    %213 = vector.broadcast %212 : vector<16x1xf32> to vector<16x32xf32>
    %214 = arith.subf %208, %213 : vector<16x32xf32>
    %215 = arith.mulf %214, %214 : vector<16x32xf32>
    %cst_102 = arith.constant dense<0.000000e+00> : vector<16xf32>
    %216 = vector.multi_reduction <add>, %215, %cst_102 [1] : vector<16x32xf32> to vector<16xf32>
    %217 = vector.shape_cast %216 : vector<16xf32> to vector<16x1xf32>
    %cst_103 = arith.constant 3.200000e+01 : f32
    %218 = vector.broadcast %cst_103 : f32 to vector<16x1xf32>
    %219 = arith.divf %217, %218 : vector<16x1xf32>
    %220 = vector.broadcast %212 : vector<16x1xf32> to vector<16x32xf32>
    %221 = arith.subf %208, %220 : vector<16x32xf32>
    %cst_104 = arith.constant 9.99999974E-6 : f32
    %222 = vector.broadcast %cst_104 : f32 to vector<16x1xf32>
    %223 = arith.addf %219, %222 : vector<16x1xf32>
    %224 = math.rsqrt %223 : vector<16x1xf32>
    %225 = vector.broadcast %224 : vector<16x1xf32> to vector<16x32xf32>
    %226 = arith.mulf %221, %225 : vector<16x32xf32>
    %227 = vector.broadcast %160 : vector<1x32xf32> to vector<16x32xf32>
    %228 = arith.mulf %226, %227 : vector<16x32xf32>
    %229 = vector.broadcast %162 : vector<1x32xf32> to vector<16x32xf32>
    %230 = arith.addf %228, %229 : vector<16x32xf32>
    %231 = vector.shape_cast %230 : vector<16x32xf32> to vector<2x8x32xf32>
    %232 = vector.extract_strided_slice %231 {offsets = [0, 0, 0], sizes = [2, 1, 32], strides = [1, 1, 1]} : vector<2x8x32xf32> to vector<2x1x32xf32>
    %233 = vector.shape_cast %232 : vector<2x1x32xf32> to vector<2x32xf32>
    %c0_105 = arith.constant 0 : index
    %c0_106 = arith.constant 0 : index
    %234 = vector.load %arg12[%c0_105, %c0_106] : memref<1x32xf32, #tpu.memory_space<vmem>>, vector<1x32xf32>
    %c0_107 = arith.constant 0 : index
    %c0_108 = arith.constant 0 : index
    %235 = vector.load %arg13[%c0_107, %c0_108] : memref<1x32xf32, #tpu.memory_space<vmem>>, vector<1x32xf32>
    %cst_109 = arith.constant dense<0.000000e+00> : vector<2xf32>
    %236 = vector.multi_reduction <add>, %233, %cst_109 [1] : vector<2x32xf32> to vector<2xf32>
    %237 = vector.shape_cast %236 : vector<2xf32> to vector<2x1xf32>
    %cst_110 = arith.constant 3.200000e+01 : f32
    %238 = vector.broadcast %cst_110 : f32 to vector<2x1xf32>
    %239 = arith.divf %237, %238 : vector<2x1xf32>
    %240 = vector.broadcast %239 : vector<2x1xf32> to vector<2x32xf32>
    %241 = arith.subf %233, %240 : vector<2x32xf32>
    %242 = arith.mulf %241, %241 : vector<2x32xf32>
    %cst_111 = arith.constant dense<0.000000e+00> : vector<2xf32>
    %243 = vector.multi_reduction <add>, %242, %cst_111 [1] : vector<2x32xf32> to vector<2xf32>
    %244 = vector.shape_cast %243 : vector<2xf32> to vector<2x1xf32>
    %cst_112 = arith.constant 3.200000e+01 : f32
    %245 = vector.broadcast %cst_112 : f32 to vector<2x1xf32>
    %246 = arith.divf %244, %245 : vector<2x1xf32>
    %247 = vector.broadcast %239 : vector<2x1xf32> to vector<2x32xf32>
    %248 = arith.subf %233, %247 : vector<2x32xf32>
    %cst_113 = arith.constant 9.99999974E-6 : f32
    %249 = vector.broadcast %cst_113 : f32 to vector<2x1xf32>
    %250 = arith.addf %246, %249 : vector<2x1xf32>
    %251 = math.rsqrt %250 : vector<2x1xf32>
    %252 = vector.broadcast %251 : vector<2x1xf32> to vector<2x32xf32>
    %253 = arith.mulf %248, %252 : vector<2x32xf32>
    %254 = vector.broadcast %234 : vector<1x32xf32> to vector<2x32xf32>
    %255 = arith.mulf %253, %254 : vector<2x32xf32>
    %256 = vector.broadcast %235 : vector<1x32xf32> to vector<2x32xf32>
    %257 = arith.addf %255, %256 : vector<2x32xf32>
    %c0_114 = arith.constant 0 : index
    %c0_115 = arith.constant 0 : index
    %258 = vector.load %arg14[%c0_114, %c0_115] : memref<32x128xf32, #tpu.memory_space<vmem>>, vector<32x128xf32>
    %cst_116 = arith.constant dense<0.000000e+00> : vector<2x128xf32>
    %259 = tpu.matmul %257, %258, %cst_116 {dimension_numbers = #tpu.dot_dimension_numbers<[1], [0], [0], [1], [0, 0, 1, 1], [], []>} : vector<2x32xf32>, vector<32x128xf32>, vector<2x128xf32> -> vector<2x128xf32>
    %c0_117 = arith.constant 0 : index
    %c0_118 = arith.constant 0 : index
    %260 = vector.load %arg15[%c0_117, %c0_118] : memref<1x128xf32, #tpu.memory_space<vmem>>, vector<1x128xf32>
    %261 = vector.broadcast %260 : vector<1x128xf32> to vector<2x128xf32>
    %262 = arith.addf %259, %261 : vector<2x128xf32>
    %c0_119 = arith.constant 0 : index
    %c0_120 = arith.constant 0 : index
    %263 = vector.load %arg16[%c0_119, %c0_120] : memref<2x128xf32, #tpu.memory_space<vmem>>, vector<2x128xf32>
    tpu.vector_store %arg16[%c0_119, %c0_120], %262 {strides = array<i32>} : memref<2x128xf32, #tpu.memory_space<vmem>>, vector<2x128xf32>,
    return
  }
}

</mosaic_0001>

<llo_original>
// kernel: transformer_forward.1
$region0: #{transformer_forward.1}
  #allocation0 [shape = 'u32[]', space=smem, size = 0x4, offset = 0x4, fixed_abs, tag = 'smem constant byte address 0x4 - core index']
  #allocation1 [shape = 'u32[144,128]{1,0:T(1,128)}', space=vmem, size = 0x12000, scoped, tag = 'internal scratch']
  %s0 = inlined_call_operand.vmem [shape: f32[2,8,32], index: 0, kind: input, shape index: {}]
  %s1 = inlined_call_operand.vmem [shape: f32[8,1,8], index: 1, kind: input, shape index: {}]
  %s2 = inlined_call_operand.vmem [shape: f32[2,32,96], index: 2, kind: input, shape index: {}]
  %s3 = inlined_call_operand.vmem [shape: f32[2,1,96], index: 3, kind: input, shape index: {}]
  %s4 = inlined_call_operand.vmem [shape: f32[2,32,32], index: 4, kind: input, shape index: {}]
  %s5 = inlined_call_operand.vmem [shape: f32[2,1,32], index: 5, kind: input, shape index: {}]
  %s6 = inlined_call_operand.vmem [shape: f32[2,1,32], index: 6, kind: input, shape index: {}]
  %s7 = inlined_call_operand.vmem [shape: f32[2,1,32], index: 7, kind: input, shape index: {}]
  %s8 = inlined_call_operand.vmem [shape: f32[2,32,128], index: 8, kind: input, shape index: {}]
  %s9 = inlined_call_operand.vmem [shape: f32[2,1,128], index: 9, kind: input, shape index: {}]
  %s10 = inlined_call_operand.vmem [shape: f32[2,128,32], index: 10, kind: input, shape index: {}]
  %s11 = inlined_call_operand.vmem [shape: f32[2,1,32], index: 11, kind: input, shape index: {}]
  %s12 = inlined_call_operand.vmem [shape: f32[1,32], index: 12, kind: input, shape index: {}]
  %s13 = inlined_call_operand.vmem [shape: f32[1,32], index: 13, kind: input, shape index: {}]
  %s14 = inlined_call_operand.vmem [shape: f32[32,128], index: 14, kind: input, shape index: {}]
  %s15 = inlined_call_operand.vmem [shape: f32[1,128], index: 15, kind: input, shape index: {}]
  %s16 = inlined_call_operand.hbm [shape: f32[2,128], index: 16, kind: output, shape index: {}]
  %s17 = sld [smem:[#allocation0]]
  $region74: #{transformer_forward.1} parent=0
    _
  %s19 = ssub.s32 1, %s17
  %s20 = scalar_select 0, %s19, %s17
  $region1: #{transformer_forward.1} parent=0
    #allocation2 [shape = 'u8[1024]{0}', space=vmem, size = 0x400, scoped, tag = 'output window, operand 0, single buffered']
    #allocation3 [shape = 's32[1]{0}', space=sflag, size = 0x4, scoped, tag = 'scoped memory for transformer_forward.1']
    %21 = vsyncpa [#allocation3], 0
    // Predicated region
    $region2: #{transformer_forward.1} parent=1 // pred_check
      _
    $region3: #{transformer_forward.1} parent=1 // pred_check_branch
      %23 = sbr.rel (0) target = $region5
    $region4: #{transformer_forward.1} parent=1 // pred_region
      _
    $region5: #{transformer_forward.1} parent=1 // pred_fallthru
      _
    // Predicated region
    $region6: #{transformer_forward.1} parent=1 // pred_check
      _
    $region7: #{transformer_forward.1} parent=1 // pred_check_branch
      %25 = sbr.rel (0) target = $region9
    $region8: #{transformer_forward.1} parent=1 // pred_region
      _
    $region9: #{transformer_forward.1} parent=1 // pred_fallthru
      _
    // Predicated region
    $region10: #{transformer_forward.1} parent=1 // pred_check
      _
    $region11: #{transformer_forward.1} parent=1 // pred_check_branch
      %27 = sbr.rel (0) target = $region13
    $region12: #{transformer_forward.1} parent=1 // pred_region
      _
    $region13: #{transformer_forward.1} parent=1 // pred_fallthru
      _
    // Predicated region
    $region14: #{transformer_forward.1} parent=1 // pred_check
      _
    $region15: #{transformer_forward.1} parent=1 // pred_check_branch
      %29 = sbr.rel (0) target = $region17
    $region16: #{transformer_forward.1} parent=1 // pred_region
      _
    $region17: #{transformer_forward.1} parent=1 // pred_fallthru
      _
    // Predicated region
    $region18: #{transformer_forward.1} parent=1 // pred_check
      _
    $region19: #{transformer_forward.1} parent=1 // pred_check_branch
      %31 = sbr.rel (0) target = $region21
    $region20: #{transformer_forward.1} parent=1 // pred_region
      _
    $region21: #{transformer_forward.1} parent=1 // pred_fallthru
      _
    // Predicated region
    $region22: #{transformer_forward.1} parent=1 // pred_check
      _
    $region23: #{transformer_forward.1} parent=1 // pred_check_branch
      %33 = sbr.rel (0) target = $region25
    $region24: #{transformer_forward.1} parent=1 // pred_region
      _
    $region25: #{transformer_forward.1} parent=1 // pred_fallthru
      _
    // Predicated region
    $region26: #{transformer_forward.1} parent=1 // pred_check
      _
    $region27: #{transformer_forward.1} parent=1 // pred_check_branch
      %35 = sbr.rel (0) target = $region29
    $region28: #{transformer_forward.1} parent=1 // pred_region
      _
    $region29: #{transformer_forward.1} parent=1 // pred_fallthru
      _
    // Predicated region
    $region30: #{transformer_forward.1} parent=1 // pred_check
      _
    $region31: #{transformer_forward.1} parent=1 // pred_check_branch
      %37 = sbr.rel (0) target = $region33
    $region32: #{transformer_forward.1} parent=1 // pred_region
      _
    $region33: #{transformer_forward.1} parent=1 // pred_fallthru
      _
    // Predicated region
    $region34: #{transformer_forward.1} parent=1 // pred_check
      _
    $region35: #{transformer_forward.1} parent=1 // pred_check_branch
      %39 = sbr.rel (0) target = $region37
    $region36: #{transformer_forward.1} parent=1 // pred_region
      _
    $region37: #{transformer_forward.1} parent=1 // pred_fallthru
      _
    // Predicated region
    $region38: #{transformer_forward.1} parent=1 // pred_check
      _
    $region39: #{transformer_forward.1} parent=1 // pred_check_branch
      %41 = sbr.rel (0) target = $region41
    $region40: #{transformer_forward.1} parent=1 // pred_region
      _
    $region41: #{transformer_forward.1} parent=1 // pred_fallthru
      _
    // Predicated region
    $region42: #{transformer_forward.1} parent=1 // pred_check
      _
    $region43: #{transformer_forward.1} parent=1 // pred_check_branch
      %43 = sbr.rel (0) target = $region45
    $region44: #{transformer_forward.1} parent=1 // pred_region
      _
    $region45: #{transformer_forward.1} parent=1 // pred_fallthru
      _
    // Predicated region
    $region46: #{transformer_forward.1} parent=1 // pred_check
      _
    $region47: #{transformer_forward.1} parent=1 // pred_check_branch
      %45 = sbr.rel (0) target = $region49
    $region48: #{transformer_forward.1} parent=1 // pred_region
      _
    $region49: #{transformer_forward.1} parent=1 // pred_fallthru
      _
    // Predicated region
    $region50: #{transformer_forward.1} parent=1 // pred_check
      _
    $region51: #{transformer_forward.1} parent=1 // pred_check_branch
      %47 = sbr.rel (0) target = $region53
    $region52: #{transformer_forward.1} parent=1 // pred_region
      _
    $region53: #{transformer_forward.1} parent=1 // pred_fallthru
      _
    // Predicated region
    $region54: #{transformer_forward.1} parent=1 // pred_check
      _
    $region55: #{transformer_forward.1} parent=1 // pred_check_branch
      %49 = sbr.rel (0) target = $region57
    $region56: #{transformer_forward.1} parent=1 // pred_region
      _
    $region57: #{transformer_forward.1} parent=1 // pred_fallthru
      _
    // Predicated region
    $region58: #{transformer_forward.1} parent=1 // pred_check
      _
    $region59: #{transformer_forward.1} parent=1 // pred_check_branch
      %51 = sbr.rel (0) target = $region61
    $region60: #{transformer_forward.1} parent=1 // pred_region
      _
    $region61: #{transformer_forward.1} parent=1 // pred_fallthru
      _
    // Predicated region
    $region62: #{transformer_forward.1} parent=1 // pred_check
      _
    $region63: #{transformer_forward.1} parent=1 // pred_check_branch
      %53 = sbr.rel (0) target = $region65
    $region64: #{transformer_forward.1} parent=1 // pred_region
      _
    $region65: #{transformer_forward.1} parent=1 // pred_fallthru
      _
    %v54 = vld [vmem:[%s0] sm:$0xff]
    %v55 = vld [vmem:[%s0 + $0x8] sm:$0xff]
    %v56 = vld [vmem:[%s1] sm:$0x1]
    %v57 = vld [vmem:[%s1 + $0x1] sm:$0x1]
    %v58 = vld [vmem:[%s1 + $0x2] sm:$0x1]
    %v59 = vld [vmem:[%s1 + $0x3] sm:$0x1]
    %v60 = vld [vmem:[%s1 + $0x4] sm:$0x1]
    %v61 = vld [vmem:[%s1 + $0x5] sm:$0x1]
    %v62 = vld [vmem:[%s1 + $0x6] sm:$0x1]
    %v63 = vld [vmem:[%s1 + $0x7] sm:$0x1]
    %v64 = vld [vmem:[%s2] sm:$0xff]
    %v65 = vld [vmem:[%s2 + $0x8] sm:$0xff]
    %v66 = vld [vmem:[%s2 + $0x10] sm:$0xff]
    %v67 = vld [vmem:[%s2 + $0x18] sm:$0xff]
    %v68 = vld [vmem:[%s3] sm:$0x1]
    %v70 = vlaneseq
    %v71 = vshrl.u32 %v70, 7
    %v72 = vsub.s32 0, %v71
    %v73 = vrot.slane %v68, %v72
    %vm75 = vcmask 261120
    %v77 = vsel %vm75, %v54, 0
    %v80 = vsel %vm75, %v55, 0
    %82 = vmatprep.subr.mxu0 0.0
    %83 = vmatpush1.msra.mxu0 0.0
    %84 = vmatprep.subr.mxu0 0.0
    %85 = vmatpush1.msra.mxu0 0.0
    %86 = vmatprep.subr.mxu0 0.0
    %87 = vmatpush1.msra.mxu0 0.0
    %88 = vmatprep.subr.mxu0 0.0
    %89 = vmatpush1.msra.mxu0 0.0
    %90 = vmatprep.subr.mxu0 0.0
    %91 = vmatpush1.msra.mxu0 0.0
    %92 = vmatprep.subr.mxu0 0.0
    %93 = vmatpush1.msra.mxu0 0.0
    %94 = vmatprep.subr.mxu0 0.0
    %95 = vmatpush1.msra.mxu0 0.0
    %96 = vmatprep.subr.mxu0 0.0
    %97 = vmatpush1.msra.mxu0 0.0
    %98 = vmatprep.subr.mxu0 0.0
    %99 = vmatpush1.msra.mxu0 0.0
    %100 = vmatprep.subr.mxu0 0.0
    %101 = vmatpush1.msra.mxu0 0.0
    %102 = vmatprep.subr.mxu0 0.0
    %103 = vmatpush1.msra.mxu0 0.0
    %104 = vmatprep.subr.mxu0 0.0
    %105 = vmatpush1.msra.mxu0 0.0
    %106 = vmatprep.subr.mxu0 0.0
    %107 = vmatpush1.msra.mxu0 %v67
    %108 = vmatprep.subr.mxu0 0.0
    %109 = vmatpush1.msra.mxu0 %v66
    %110 = vmatprep.subr.mxu0 0.0
    %111 = vmatpush1.msra.mxu0 %v65
    %112 = vmatprep.subr.mxu0 0.0
    %113 = vmatpush1.msra.mxu0 %v64
    %114 = vmatprep.subr.mxu0 0.0
    %115 = vmatpush2.msra.mxu0 0.0
    %116 = vmatprep.subr.mxu0 0.0
    %117 = vmatpush2.msra.mxu0 0.0
    %118 = vmatprep.subr.mxu0 0.0
    %119 = vmatpush2.msra.mxu0 0.0
    %120 = vmatprep.subr.mxu0 0.0
    %121 = vmatpush2.msra.mxu0 0.0
    %122 = vmatprep.subr.mxu0 0.0
    %123 = vmatpush2.msra.mxu0 0.0
    %124 = vmatprep.subr.mxu0 0.0
    %125 = vmatpush2.msra.mxu0 0.0
    %126 = vmatprep.subr.mxu0 0.0
    %127 = vmatpush2.msra.mxu0 0.0
    %128 = vmatprep.subr.mxu0 0.0
    %129 = vmatpush2.msra.mxu0 0.0
    %130 = vmatprep.subr.mxu0 0.0
    %131 = vmatpush2.msra.mxu0 0.0
    %132 = vmatprep.subr.mxu0 0.0
    %133 = vmatpush2.msra.mxu0 0.0
    %134 = vmatprep.subr.mxu0 0.0
    %135 = vmatpush2.msra.mxu0 0.0
    %136 = vmatprep.subr.mxu0 0.0
    %137 = vmatpush2.msra.mxu0 0.0
    %138 = vmatprep.subr.mxu0 0.0
    %139 = vmatpush2.msra.mxu0 0.0
    %140 = vmatprep.subr.mxu0 0.0
    %141 = vmatpush2.msra.mxu0 0.0
    %142 = vmatprep.subr.mxu0 0.0
    %143 = vmatpush2.msra.mxu0 0.0
    %144 = vmatprep.subr.mxu0 0.0
    %145 = vmatpush2.msra.mxu0 0.0
    %146 = vmatprep.mubr.f32.mxu0 0.0
    %147 = vmatmul.mubr.f32.gmra.mxu0 %v77
    %v148 = vpop.f32.mrf.mxu0
    %v149 = vadd.f32 %v73, %v148
    %v150 = vpop.f32.mrf.mxu0
    %151 = vmatprep.mubr.f32.mxu0 0.0
    %152 = vmatmul.mubr.f32.gmra.mxu0 %v80
    %v153 = vpop.f32.mrf.mxu0
    %v154 = vadd.f32 %v73, %v153
    %v155 = vpop.f32.mrf.mxu0
    %156 = vdwg.mxu0
    %159 = vrot.lane.b32.xlu0 %v149, 120
    %v160 = vpop.permute.xlu0 %159
    %161 = vrot.lane.b32.xlu0 %v154, 120
    %v162 = vpop.permute.xlu0 %161
    %165 = vrot.lane.b32.xlu0 %v149, 112
    %v166 = vpop.permute.xlu0 %165
    %167 = vrot.lane.b32.xlu0 %v154, 112
    %v168 = vpop.permute.xlu0 %167
    %171 = vrot.lane.b32.xlu0 %v149, 104
    %v172 = vpop.permute.xlu0 %171
    %173 = vrot.lane.b32.xlu0 %v154, 104
    %v174 = vpop.permute.xlu0 %173
    %v177 = vcombine.low %v149, %v166
    %v178 = vcombine.high %v149, %v166
    %v180 = vunpack.c.l.s4 1983009808
    %v181 = vunpack.c.0.s8 %v180
    %v182 = vlaneseq
    %v183 = vshrl.u32 %v182, 7
    %v184 = vsub.s32 %v181, %v183
    %v185 = vrot.slane %v177, %v184
    %v187 = vunpack.c.l.s4 1983009808
    %v188 = vunpack.c.0.s8 %v187
    %v189 = vlaneseq
    %v190 = vshrl.u32 %v189, 7
    %v191 = vsub.s32 %v188, %v190
    %v192 = vrot.slane %v178, %v191
    %v193 = vcombine.low %v160, %v172
    %v194 = vcombine.high %v160, %v172
    %v196 = vunpack.c.l.s4 1983009808
    %v197 = vunpack.c.0.s8 %v196
    %v198 = vlaneseq
    %v199 = vshrl.u32 %v198, 7
    %v200 = vsub.s32 %v197, %v199
    %v201 = vrot.slane %v193, %v200
    %v203 = vunpack.c.l.s4 1983009808
    %v204 = vunpack.c.0.s8 %v203
    %v205 = vlaneseq
    %v206 = vshrl.u32 %v205, 7
    %v207 = vsub.s32 %v204, %v206
    %v208 = vrot.slane %v194, %v207
    %v209 = vcombine.low %v185, %v201
    %v210 = vcombine.high %v185, %v201
    %v212 = vunpack.c.l.s4 1934713408
    %v213 = vunpack.c.0.s8 %v212
    %v214 = vlaneseq
    %v215 = vshrl.u32 %v214, 7
    %v216 = vsub.s32 %v213, %v215
    %v217 = vrot.slane %v209, %v216
    %v219 = vunpack.c.l.s4 1934713408
    %v220 = vunpack.c.0.s8 %v219
    %v221 = vlaneseq
    %v222 = vshrl.u32 %v221, 7
    %v223 = vsub.s32 %v220, %v222
    %v224 = vrot.slane %v210, %v223
    %v225 = vcombine.low %v192, %v208
    %v226 = vcombine.high %v192, %v208
    %v228 = vunpack.c.l.s4 1934713408
    %v229 = vunpack.c.0.s8 %v228
    %v230 = vlaneseq
    %v231 = vshrl.u32 %v230, 7
    %v232 = vsub.s32 %v229, %v231
    %v233 = vrot.slane %v225, %v232
    %v235 = vunpack.c.l.s4 1934713408
    %v236 = vunpack.c.0.s8 %v235
    %v237 = vlaneseq
    %v238 = vshrl.u32 %v237, 7
    %v239 = vsub.s32 %v236, %v238
    %v240 = vrot.slane %v226, %v239
    %v241 = vcombine.high %v217, 0.0
    %v242 = vcombine.high %v224, 0.0
    %v243 = vcombine.high %v233, 0.0
    %v244 = vcombine.high %v240, 0.0
    %v245 = vcombine.low %v154, %v168
    %v246 = vcombine.high %v154, %v168
    %v248 = vunpack.c.l.s4 1983009808
    %v249 = vunpack.c.0.s8 %v248
    %v250 = vlaneseq
    %v251 = vshrl.u32 %v250, 7
    %v252 = vsub.s32 %v249, %v251
    %v253 = vrot.slane %v245, %v252
    %v255 = vunpack.c.l.s4 1983009808
    %v256 = vunpack.c.0.s8 %v255
    %v257 = vlaneseq
    %v258 = vshrl.u32 %v257, 7
    %v259 = vsub.s32 %v256, %v258
    %v260 = vrot.slane %v246, %v259
    %v261 = vcombine.low %v162, %v174
    %v262 = vcombine.high %v162, %v174
    %v264 = vunpack.c.l.s4 1983009808
    %v265 = vunpack.c.0.s8 %v264
    %v266 = vlaneseq
    %v267 = vshrl.u32 %v266, 7
    %v268 = vsub.s32 %v265, %v267
    %v269 = vrot.slane %v261, %v268
    %v271 = vunpack.c.l.s4 1983009808
    %v272 = vunpack.c.0.s8 %v271
    %v273 = vlaneseq
    %v274 = vshrl.u32 %v273, 7
    %v275 = vsub.s32 %v272, %v274
    %v276 = vrot.slane %v262, %v275
    %v277 = vcombine.low %v253, %v269
    %v278 = vcombine.high %v253, %v269
    %v280 = vunpack.c.l.s4 1934713408
    %v281 = vunpack.c.0.s8 %v280
    %v282 = vlaneseq
    %v283 = vshrl.u32 %v282, 7
    %v284 = vsub.s32 %v281, %v283
    %v285 = vrot.slane %v277, %v284
    %v287 = vunpack.c.l.s4 1934713408
    %v288 = vunpack.c.0.s8 %v287
    %v289 = vlaneseq
    %v290 = vshrl.u32 %v289, 7
    %v291 = vsub.s32 %v288, %v290
    %v292 = vrot.slane %v278, %v291
    %v293 = vcombine.low %v260, %v276
    %v294 = vcombine.high %v260, %v276
    %v296 = vunpack.c.l.s4 1934713408
    %v297 = vunpack.c.0.s8 %v296
    %v298 = vlaneseq
    %v299 = vshrl.u32 %v298, 7
    %v300 = vsub.s32 %v297, %v299
    %v301 = vrot.slane %v293, %v300
    %v303 = vunpack.c.l.s4 1934713408
    %v304 = vunpack.c.0.s8 %v303
    %v305 = vlaneseq
    %v306 = vshrl.u32 %v305, 7
    %v307 = vsub.s32 %v304, %v306
    %v308 = vrot.slane %v294, %v307
    %v309 = vcombine.high %v285, 0.0
    %v310 = vcombine.high %v292, 0.0
    %v311 = vcombine.high %v301, 0.0
    %v312 = vcombine.high %v308, 0.0
    %v313 = vcombine.low %v217, %v224
    %v315 = vunpack.c.l.s4 1983009808
    %v316 = vunpack.c.0.s8 %v315
    %v317 = vlaneseq
    %v318 = vshrl.u32 %v317, 7
    %v319 = vsub.s32 %v316, %v318
    %v320 = vrot.slane %v313, %v319
    %v321 = vcombine.low %v241, %v242
    %v323 = vunpack.c.l.s4 1983009808
    %v324 = vunpack.c.0.s8 %v323
    %v325 = vlaneseq
    %v326 = vshrl.u32 %v325, 7
    %v327 = vsub.s32 %v324, %v326
    %v328 = vrot.slane %v321, %v327
    %v329 = vcombine.low %v233, %v240
    %v331 = vunpack.c.l.s4 1983009808
    %v332 = vunpack.c.0.s8 %v331
    %v333 = vlaneseq
    %v334 = vshrl.u32 %v333, 7
    %v335 = vsub.s32 %v332, %v334
    %v336 = vrot.slane %v329, %v335
    %v337 = vcombine.low %v243, %v244
    %v339 = vunpack.c.l.s4 1983009808
    %v340 = vunpack.c.0.s8 %v339
    %v341 = vlaneseq
    %v342 = vshrl.u32 %v341, 7
    %v343 = vsub.s32 %v340, %v342
    %v344 = vrot.slane %v337, %v343
    %v345 = vcombine.low %v320, %v328
    %v346 = vcombine.high %v320, %v328
    %v348 = vunpack.c.l.s4 1934713408
    %v349 = vunpack.c.0.s8 %v348
    %v350 = vlaneseq
    %v351 = vshrl.u32 %v350, 7
    %v352 = vsub.s32 %v349, %v351
    %v353 = vrot.slane %v345, %v352
    %v355 = vunpack.c.l.s4 1934713408
    %v356 = vunpack.c.0.s8 %v355
    %v357 = vlaneseq
    %v358 = vshrl.u32 %v357, 7
    %v359 = vsub.s32 %v356, %v358
    %v360 = vrot.slane %v346, %v359
    %v361 = vcombine.low %v336, %v344
    %v362 = vcombine.high %v336, %v344
    %v364 = vunpack.c.l.s4 1934713408
    %v365 = vunpack.c.0.s8 %v364
    %v366 = vlaneseq
    %v367 = vshrl.u32 %v366, 7
    %v368 = vsub.s32 %v365, %v367
    %v369 = vrot.slane %v361, %v368
    %v371 = vunpack.c.l.s4 1934713408
    %v372 = vunpack.c.0.s8 %v371
    %v373 = vlaneseq
    %v374 = vshrl.u32 %v373, 7
    %v375 = vsub.s32 %v372, %v374
    %v376 = vrot.slane %v362, %v375
    %v377 = vcombine.low %v353, %v369
    %v378 = vcombine.high %v353, %v369
    %v379 = vcombine.low %v360, %v376
    %v380 = vcombine.high %v360, %v376
    %v381 = vcombine.low %v285, %v292
    %v383 = vunpack.c.l.s4 1983009808
    %v384 = vunpack.c.0.s8 %v383
    %v385 = vlaneseq
    %v386 = vshrl.u32 %v385, 7
    %v387 = vsub.s32 %v384, %v386
    %v388 = vrot.slane %v381, %v387
    %v389 = vcombine.low %v309, %v310
    %v391 = vunpack.c.l.s4 1983009808
    %v392 = vunpack.c.0.s8 %v391
    %v393 = vlaneseq
    %v394 = vshrl.u32 %v393, 7
    %v395 = vsub.s32 %v392, %v394
    %v396 = vrot.slane %v389, %v395
    %v397 = vcombine.low %v301, %v308
    %v399 = vunpack.c.l.s4 1983009808
    %v400 = vunpack.c.0.s8 %v399
    %v401 = vlaneseq
    %v402 = vshrl.u32 %v401, 7
    %v403 = vsub.s32 %v400, %v402
    %v404 = vrot.slane %v397, %v403
    %v405 = vcombine.low %v311, %v312
    %v407 = vunpack.c.l.s4 1983009808
    %v408 = vunpack.c.0.s8 %v407
    %v409 = vlaneseq
    %v410 = vshrl.u32 %v409, 7
    %v411 = vsub.s32 %v408, %v410
    %v412 = vrot.slane %v405, %v411
    %v413 = vcombine.low %v388, %v396
    %v414 = vcombine.high %v388, %v396
    %v416 = vunpack.c.l.s4 1934713408
    %v417 = vunpack.c.0.s8 %v416
    %v418 = vlaneseq
    %v419 = vshrl.u32 %v418, 7
    %v420 = vsub.s32 %v417, %v419
    %v421 = vrot.slane %v413, %v420
    %v423 = vunpack.c.l.s4 1934713408
    %v424 = vunpack.c.0.s8 %v423
    %v425 = vlaneseq
    %v426 = vshrl.u32 %v425, 7
    %v427 = vsub.s32 %v424, %v426
    %v428 = vrot.slane %v414, %v427
    %v429 = vcombine.low %v404, %v412
    %v430 = vcombine.high %v404, %v412
    %v432 = vunpack.c.l.s4 1934713408
    %v433 = vunpack.c.0.s8 %v432
    %v434 = vlaneseq
    %v435 = vshrl.u32 %v434, 7
    %v436 = vsub.s32 %v433, %v435
    %v437 = vrot.slane %v429, %v436
    %v439 = vunpack.c.l.s4 1934713408
    %v440 = vunpack.c.0.s8 %v439
    %v441 = vlaneseq
    %v442 = vshrl.u32 %v441, 7
    %v443 = vsub.s32 %v440, %v442
    %v444 = vrot.slane %v430, %v443
    %v445 = vcombine.low %v421, %v437
    %v446 = vcombine.high %v421, %v437
    %v447 = vcombine.low %v428, %v444
    %v448 = vcombine.high %v428, %v444
    %449 = vrot.lane.b32.xlu0 %v149, 96
    %v450 = vpop.permute.xlu0 %449
    %451 = vrot.lane.b32.xlu0 %v154, 96
    %v452 = vpop.permute.xlu0 %451
    %453 = vrot.lane.b32.xlu0 %v160, 96
    %v454 = vpop.permute.xlu0 %453
    %455 = vrot.lane.b32.xlu0 %v162, 96
    %v456 = vpop.permute.xlu0 %455
    %457 = vrot.lane.b32.xlu0 %v166, 96
    %v458 = vpop.permute.xlu0 %457
    %459 = vrot.lane.b32.xlu0 %v168, 96
    %v460 = vpop.permute.xlu0 %459
    %461 = vrot.lane.b32.xlu0 %v172, 96
    %v462 = vpop.permute.xlu0 %461
    %463 = vrot.lane.b32.xlu0 %v174, 96
    %v464 = vpop.permute.xlu0 %463
    %v473 = vcombine.low %v450, %v458
    %v474 = vcombine.high %v450, %v458
    %v476 = vunpack.c.l.s4 1983009808
    %v477 = vunpack.c.0.s8 %v476
    %v478 = vlaneseq
    %v479 = vshrl.u32 %v478, 7
    %v480 = vsub.s32 %v477, %v479
    %v481 = vrot.slane %v473, %v480
    %v483 = vunpack.c.l.s4 1983009808
    %v484 = vunpack.c.0.s8 %v483
    %v485 = vlaneseq
    %v486 = vshrl.u32 %v485, 7
    %v487 = vsub.s32 %v484, %v486
    %v488 = vrot.slane %v474, %v487
    %v489 = vcombine.low %v454, %v462
    %v490 = vcombine.high %v454, %v462
    %v492 = vunpack.c.l.s4 1983009808
    %v493 = vunpack.c.0.s8 %v492
    %v494 = vlaneseq
    %v495 = vshrl.u32 %v494, 7
    %v496 = vsub.s32 %v493, %v495
    %v497 = vrot.slane %v489, %v496
    %v499 = vunpack.c.l.s4 1983009808
    %v500 = vunpack.c.0.s8 %v499
    %v501 = vlaneseq
    %v502 = vshrl.u32 %v501, 7
    %v503 = vsub.s32 %v500, %v502
    %v504 = vrot.slane %v490, %v503
    %v505 = vcombine.low %v481, %v497
    %v506 = vcombine.high %v481, %v497
    %v508 = vunpack.c.l.s4 1934713408
    %v509 = vunpack.c.0.s8 %v508
    %v510 = vlaneseq
    %v511 = vshrl.u32 %v510, 7
    %v512 = vsub.s32 %v509, %v511
    %v513 = vrot.slane %v505, %v512
    %v515 = vunpack.c.l.s4 1934713408
    %v516 = vunpack.c.0.s8 %v515
    %v517 = vlaneseq
    %v518 = vshrl.u32 %v517, 7
    %v519 = vsub.s32 %v516, %v518
    %v520 = vrot.slane %v506, %v519
    %v521 = vcombine.low %v488, %v504
    %v522 = vcombine.high %v488, %v504
    %v524 = vunpack.c.l.s4 1934713408
    %v525 = vunpack.c.0.s8 %v524
    %v526 = vlaneseq
    %v527 = vshrl.u32 %v526, 7
    %v528 = vsub.s32 %v525, %v527
    %v529 = vrot.slane %v521, %v528
    %v531 = vunpack.c.l.s4 1934713408
    %v532 = vunpack.c.0.s8 %v531
    %v533 = vlaneseq
    %v534 = vshrl.u32 %v533, 7
    %v535 = vsub.s32 %v532, %v534
    %v536 = vrot.slane %v522, %v535
    %v537 = vcombine.high %v513, 0.0
    %v538 = vcombine.high %v520, 0.0
    %v539 = vcombine.high %v529, 0.0
    %v540 = vcombine.high %v536, 0.0
    %v541 = vcombine.low %v452, %v460
    %v542 = vcombine.high %v452, %v460
    %v544 = vunpack.c.l.s4 1983009808
    %v545 = vunpack.c.0.s8 %v544
    %v546 = vlaneseq
    %v547 = vshrl.u32 %v546, 7
    %v548 = vsub.s32 %v545, %v547
    %v549 = vrot.slane %v541, %v548
    %v551 = vunpack.c.l.s4 1983009808
    %v552 = vunpack.c.0.s8 %v551
    %v553 = vlaneseq
    %v554 = vshrl.u32 %v553, 7
    %v555 = vsub.s32 %v552, %v554
    %v556 = vrot.slane %v542, %v555
    %v557 = vcombine.low %v456, %v464
    %v558 = vcombine.high %v456, %v464
    %v560 = vunpack.c.l.s4 1983009808
    %v561 = vunpack.c.0.s8 %v560
    %v562 = vlaneseq
    %v563 = vshrl.u32 %v562, 7
    %v564 = vsub.s32 %v561, %v563
    %v565 = vrot.slane %v557, %v564
    %v567 = vunpack.c.l.s4 1983009808
    %v568 = vunpack.c.0.s8 %v567
    %v569 = vlaneseq
    %v570 = vshrl.u32 %v569, 7
    %v571 = vsub.s32 %v568, %v570
    %v572 = vrot.slane %v558, %v571
    %v573 = vcombine.low %v549, %v565
    %v574 = vcombine.high %v549, %v565
    %v576 = vunpack.c.l.s4 1934713408
    %v577 = vunpack.c.0.s8 %v576
    %v578 = vlaneseq
    %v579 = vshrl.u32 %v578, 7
    %v580 = vsub.s32 %v577, %v579
    %v581 = vrot.slane %v573, %v580
    %v583 = vunpack.c.l.s4 1934713408
    %v584 = vunpack.c.0.s8 %v583
    %v585 = vlaneseq
    %v586 = vshrl.u32 %v585, 7
    %v587 = vsub.s32 %v584, %v586
    %v588 = vrot.slane %v574, %v587
    %v589 = vcombine.low %v556, %v572
    %v590 = vcombine.high %v556, %v572
    %v592 = vunpack.c.l.s4 1934713408
    %v593 = vunpack.c.0.s8 %v592
    %v594 = vlaneseq
    %v595 = vshrl.u32 %v594, 7
    %v596 = vsub.s32 %v593, %v595
    %v597 = vrot.slane %v589, %v596
    %v599 = vunpack.c.l.s4 1934713408
    %v600 = vunpack.c.0.s8 %v599
    %v601 = vlaneseq
    %v602 = vshrl.u32 %v601, 7
    %v603 = vsub.s32 %v600, %v602
    %v604 = vrot.slane %v590, %v603
    %v605 = vcombine.high %v581, 0.0
    %v606 = vcombine.high %v588, 0.0
    %v607 = vcombine.high %v597, 0.0
    %v608 = vcombine.high %v604, 0.0
    %v609 = vcombine.low %v513, %v520
    %v611 = vunpack.c.l.s4 1983009808
    %v612 = vunpack.c.0.s8 %v611
    %v613 = vlaneseq
    %v614 = vshrl.u32 %v613, 7
    %v615 = vsub.s32 %v612, %v614
    %v616 = vrot.slane %v609, %v615
    %v617 = vcombine.low %v537, %v538
    %v619 = vunpack.c.l.s4 1983009808
    %v620 = vunpack.c.0.s8 %v619
    %v621 = vlaneseq
    %v622 = vshrl.u32 %v621, 7
    %v623 = vsub.s32 %v620, %v622
    %v624 = vrot.slane %v617, %v623
    %v625 = vcombine.low %v529, %v536
    %v627 = vunpack.c.l.s4 1983009808
    %v628 = vunpack.c.0.s8 %v627
    %v629 = vlaneseq
    %v630 = vshrl.u32 %v629, 7
    %v631 = vsub.s32 %v628, %v630
    %v632 = vrot.slane %v625, %v631
    %v633 = vcombine.low %v539, %v540
    %v635 = vunpack.c.l.s4 1983009808
    %v636 = vunpack.c.0.s8 %v635
    %v637 = vlaneseq
    %v638 = vshrl.u32 %v637, 7
    %v639 = vsub.s32 %v636, %v638
    %v640 = vrot.slane %v633, %v639
    %v641 = vcombine.low %v616, %v624
    %v642 = vcombine.high %v616, %v624
    %v644 = vunpack.c.l.s4 1934713408
    %v645 = vunpack.c.0.s8 %v644
    %v646 = vlaneseq
    %v647 = vshrl.u32 %v646, 7
    %v648 = vsub.s32 %v645, %v647
    %v649 = vrot.slane %v641, %v648
    %v651 = vunpack.c.l.s4 1934713408
    %v652 = vunpack.c.0.s8 %v651
    %v653 = vlaneseq
    %v654 = vshrl.u32 %v653, 7
    %v655 = vsub.s32 %v652, %v654
    %v656 = vrot.slane %v642, %v655
    %v657 = vcombine.low %v632, %v640
    %v658 = vcombine.high %v632, %v640
    %v660 = vunpack.c.l.s4 1934713408
    %v661 = vunpack.c.0.s8 %v660
    %v662 = vlaneseq
    %v663 = vshrl.u32 %v662, 7
    %v664 = vsub.s32 %v661, %v663
    %v665 = vrot.slane %v657, %v664
    %v667 = vunpack.c.l.s4 1934713408
    %v668 = vunpack.c.0.s8 %v667
    %v669 = vlaneseq
    %v670 = vshrl.u32 %v669, 7
    %v671 = vsub.s32 %v668, %v670
    %v672 = vrot.slane %v658, %v671
    %v673 = vcombine.low %v649, %v665
    %v674 = vcombine.high %v649, %v665
    %v675 = vcombine.low %v656, %v672
    %v676 = vcombine.high %v656, %v672
    %v677 = vcombine.low %v581, %v588
    %v679 = vunpack.c.l.s4 1983009808
    %v680 = vunpack.c.0.s8 %v679
    %v681 = vlaneseq
    %v682 = vshrl.u32 %v681, 7
    %v683 = vsub.s32 %v680, %v682
    %v684 = vrot.slane %v677, %v683
    %v685 = vcombine.low %v605, %v606
    %v687 = vunpack.c.l.s4 1983009808
    %v688 = vunpack.c.0.s8 %v687
    %v689 = vlaneseq
    %v690 = vshrl.u32 %v689, 7
    %v691 = vsub.s32 %v688, %v690
    %v692 = vrot.slane %v685, %v691
    %v693 = vcombine.low %v597, %v604
    %v695 = vunpack.c.l.s4 1983009808
    %v696 = vunpack.c.0.s8 %v695
    %v697 = vlaneseq
    %v698 = vshrl.u32 %v697, 7
    %v699 = vsub.s32 %v696, %v698
    %v700 = vrot.slane %v693, %v699
    %v701 = vcombine.low %v607, %v608
    %v703 = vunpack.c.l.s4 1983009808
    %v704 = vunpack.c.0.s8 %v703
    %v705 = vlaneseq
    %v706 = vshrl.u32 %v705, 7
    %v707 = vsub.s32 %v704, %v706
    %v708 = vrot.slane %v701, %v707
    %v709 = vcombine.low %v684, %v692
    %v710 = vcombine.high %v684, %v692
    %v712 = vunpack.c.l.s4 1934713408
    %v713 = vunpack.c.0.s8 %v712
    %v714 = vlaneseq
    %v715 = vshrl.u32 %v714, 7
    %v716 = vsub.s32 %v713, %v715
    %v717 = vrot.slane %v709, %v716
    %v719 = vunpack.c.l.s4 1934713408
    %v720 = vunpack.c.0.s8 %v719
    %v721 = vlaneseq
    %v722 = vshrl.u32 %v721, 7
    %v723 = vsub.s32 %v720, %v722
    %v724 = vrot.slane %v710, %v723
    %v725 = vcombine.low %v700, %v708
    %v726 = vcombine.high %v700, %v708
    %v728 = vunpack.c.l.s4 1934713408
    %v729 = vunpack.c.0.s8 %v728
    %v730 = vlaneseq
    %v731 = vshrl.u32 %v730, 7
    %v732 = vsub.s32 %v729, %v731
    %v733 = vrot.slane %v725, %v732
    %v735 = vunpack.c.l.s4 1934713408
    %v736 = vunpack.c.0.s8 %v735
    %v737 = vlaneseq
    %v738 = vshrl.u32 %v737, 7
    %v739 = vsub.s32 %v736, %v738
    %v740 = vrot.slane %v726, %v739
    %v741 = vcombine.low %v717, %v733
    %v742 = vcombine.high %v717, %v733
    %v743 = vcombine.low %v724, %v740
    %v744 = vcombine.high %v724, %v740
    %745 = vrot.lane.b32.xlu0 %v149, 64
    %v746 = vpop.permute.xlu0 %745
    %747 = vrot.lane.b32.xlu0 %v154, 64
    %v748 = vpop.permute.xlu0 %747
    %749 = vrot.lane.b32.xlu0 %v160, 64
    %v750 = vpop.permute.xlu0 %749
    %751 = vrot.lane.b32.xlu0 %v162, 64
    %v752 = vpop.permute.xlu0 %751
    %753 = vrot.lane.b32.xlu0 %v166, 64
    %v754 = vpop.permute.xlu0 %753
    %755 = vrot.lane.b32.xlu0 %v168, 64
    %v756 = vpop.permute.xlu0 %755
    %757 = vrot.lane.b32.xlu0 %v172, 64
    %v758 = vpop.permute.xlu0 %757
    %759 = vrot.lane.b32.xlu0 %v174, 64
    %v760 = vpop.permute.xlu0 %759
    %v769 = vcombine.low %v746, %v754
    %v770 = vcombine.high %v746, %v754
    %v772 = vunpack.c.l.s4 1983009808
    %v773 = vunpack.c.0.s8 %v772
    %v774 = vlaneseq
    %v775 = vshrl.u32 %v774, 7
    %v776 = vsub.s32 %v773, %v775
    %v777 = vrot.slane %v769, %v776
    %v779 = vunpack.c.l.s4 1983009808
    %v780 = vunpack.c.0.s8 %v779
    %v781 = vlaneseq
    %v782 = vshrl.u32 %v781, 7
    %v783 = vsub.s32 %v780, %v782
    %v784 = vrot.slane %v770, %v783
    %v785 = vcombine.low %v750, %v758
    %v786 = vcombine.high %v750, %v758
    %v788 = vunpack.c.l.s4 1983009808
    %v789 = vunpack.c.0.s8 %v788
    %v790 = vlaneseq
    %v791 = vshrl.u32 %v790, 7
    %v792 = vsub.s32 %v789, %v791
    %v793 = vrot.slane %v785, %v792
    %v795 = vunpack.c.l.s4 1983009808
    %v796 = vunpack.c.0.s8 %v795
    %v797 = vlaneseq
    %v798 = vshrl.u32 %v797, 7
    %v799 = vsub.s32 %v796, %v798
    %v800 = vrot.slane %v786, %v799
    %v801 = vcombine.low %v777, %v793
    %v802 = vcombine.high %v777, %v793
    %v804 = vunpack.c.l.s4 1934713408
    %v805 = vunpack.c.0.s8 %v804
    %v806 = vlaneseq
    %v807 = vshrl.u32 %v806, 7
    %v808 = vsub.s32 %v805, %v807
    %v809 = vrot.slane %v801, %v808
    %v811 = vunpack.c.l.s4 1934713408
    %v812 = vunpack.c.0.s8 %v811
    %v813 = vlaneseq
    %v814 = vshrl.u32 %v813, 7
    %v815 = vsub.s32 %v812, %v814
    %v816 = vrot.slane %v802, %v815
    %v817 = vcombine.low %v784, %v800
    %v818 = vcombine.high %v784, %v800
    %v820 = vunpack.c.l.s4 1934713408
    %v821 = vunpack.c.0.s8 %v820
    %v822 = vlaneseq
    %v823 = vshrl.u32 %v822, 7
    %v824 = vsub.s32 %v821, %v823
    %v825 = vrot.slane %v817, %v824
    %v827 = vunpack.c.l.s4 1934713408
    %v828 = vunpack.c.0.s8 %v827
    %v829 = vlaneseq
    %v830 = vshrl.u32 %v829, 7
    %v831 = vsub.s32 %v828, %v830
    %v832 = vrot.slane %v818, %v831
    %v833 = vcombine.high %v809, 0.0
    %v834 = vcombine.high %v816, 0.0
    %v835 = vcombine.high %v825, 0.0
    %v836 = vcombine.high %v832, 0.0
    %v837 = vcombine.low %v748, %v756
    %v838 = vcombine.high %v748, %v756
    %v840 = vunpack.c.l.s4 1983009808
    %v841 = vunpack.c.0.s8 %v840
    %v842 = vlaneseq
    %v843 = vshrl.u32 %v842, 7
    %v844 = vsub.s32 %v841, %v843
    %v845 = vrot.slane %v837, %v844
    %v847 = vunpack.c.l.s4 1983009808
    %v848 = vunpack.c.0.s8 %v847
    %v849 = vlaneseq
    %v850 = vshrl.u32 %v849, 7
    %v851 = vsub.s32 %v848, %v850
    %v852 = vrot.slane %v838, %v851
    %v853 = vcombine.low %v752, %v760
    %v854 = vcombine.high %v752, %v760
    %v856 = vunpack.c.l.s4 1983009808
    %v857 = vunpack.c.0.s8 %v856
    %v858 = vlaneseq
    %v859 = vshrl.u32 %v858, 7
    %v860 = vsub.s32 %v857, %v859
    %v861 = vrot.slane %v853, %v860
    %v863 = vunpack.c.l.s4 1983009808
    %v864 = vunpack.c.0.s8 %v863
    %v865 = vlaneseq
    %v866 = vshrl.u32 %v865, 7
    %v867 = vsub.s32 %v864, %v866
    %v868 = vrot.slane %v854, %v867
    %v869 = vcombine.low %v845, %v861
    %v870 = vcombine.high %v845, %v861
    %v872 = vunpack.c.l.s4 1934713408
    %v873 = vunpack.c.0.s8 %v872
    %v874 = vlaneseq
    %v875 = vshrl.u32 %v874, 7
    %v876 = vsub.s32 %v873, %v875
    %v877 = vrot.slane %v869, %v876
    %v879 = vunpack.c.l.s4 1934713408
    %v880 = vunpack.c.0.s8 %v879
    %v881 = vlaneseq
    %v882 = vshrl.u32 %v881, 7
    %v883 = vsub.s32 %v880, %v882
    %v884 = vrot.slane %v870, %v883
    %v885 = vcombine.low %v852, %v868
    %v886 = vcombine.high %v852, %v868
    %v888 = vunpack.c.l.s4 1934713408
    %v889 = vunpack.c.0.s8 %v888
    %v890 = vlaneseq
    %v891 = vshrl.u32 %v890, 7
    %v892 = vsub.s32 %v889, %v891
    %v893 = vrot.slane %v885, %v892
    %v895 = vunpack.c.l.s4 1934713408
    %v896 = vunpack.c.0.s8 %v895
    %v897 = vlaneseq
    %v898 = vshrl.u32 %v897, 7
    %v899 = vsub.s32 %v896, %v898
    %v900 = vrot.slane %v886, %v899
    %v901 = vcombine.high %v877, 0.0
    %v902 = vcombine.high %v884, 0.0
    %v903 = vcombine.high %v893, 0.0
    %v904 = vcombine.high %v900, 0.0
    %v905 = vcombine.low %v809, %v816
    %v907 = vunpack.c.l.s4 1983009808
    %v908 = vunpack.c.0.s8 %v907
    %v909 = vlaneseq
    %v910 = vshrl.u32 %v909, 7
    %v911 = vsub.s32 %v908, %v910
    %v912 = vrot.slane %v905, %v911
    %v913 = vcombine.low %v833, %v834
    %v915 = vunpack.c.l.s4 1983009808
    %v916 = vunpack.c.0.s8 %v915
    %v917 = vlaneseq
    %v918 = vshrl.u32 %v917, 7
    %v919 = vsub.s32 %v916, %v918
    %v920 = vrot.slane %v913, %v919
    %v921 = vcombine.low %v825, %v832
    %v923 = vunpack.c.l.s4 1983009808
    %v924 = vunpack.c.0.s8 %v923
    %v925 = vlaneseq
    %v926 = vshrl.u32 %v925, 7
    %v927 = vsub.s32 %v924, %v926
    %v928 = vrot.slane %v921, %v927
    %v929 = vcombine.low %v835, %v836
    %v931 = vunpack.c.l.s4 1983009808
    %v932 = vunpack.c.0.s8 %v931
    %v933 = vlaneseq
    %v934 = vshrl.u32 %v933, 7
    %v935 = vsub.s32 %v932, %v934
    %v936 = vrot.slane %v929, %v935
    %v937 = vcombine.low %v912, %v920
    %v938 = vcombine.high %v912, %v920
    %v940 = vunpack.c.l.s4 1934713408
    %v941 = vunpack.c.0.s8 %v940
    %v942 = vlaneseq
    %v943 = vshrl.u32 %v942, 7
    %v944 = vsub.s32 %v941, %v943
    %v945 = vrot.slane %v937, %v944
    %v947 = vunpack.c.l.s4 1934713408
    %v948 = vunpack.c.0.s8 %v947
    %v949 = vlaneseq
    %v950 = vshrl.u32 %v949, 7
    %v951 = vsub.s32 %v948, %v950
    %v952 = vrot.slane %v938, %v951
    %v953 = vcombine.low %v928, %v936
    %v954 = vcombine.high %v928, %v936
    %v956 = vunpack.c.l.s4 1934713408
    %v957 = vunpack.c.0.s8 %v956
    %v958 = vlaneseq
    %v959 = vshrl.u32 %v958, 7
    %v960 = vsub.s32 %v957, %v959
    %v961 = vrot.slane %v953, %v960
    %v963 = vunpack.c.l.s4 1934713408
    %v964 = vunpack.c.0.s8 %v963
    %v965 = vlaneseq
    %v966 = vshrl.u32 %v965, 7
    %v967 = vsub.s32 %v964, %v966
    %v968 = vrot.slane %v954, %v967
    %v969 = vcombine.low %v945, %v961
    %v970 = vcombine.high %v945, %v961
    %v971 = vcombine.low %v952, %v968
    %v972 = vcombine.high %v952, %v968
    %v973 = vcombine.low %v877, %v884
    %v975 = vunpack.c.l.s4 1983009808
    %v976 = vunpack.c.0.s8 %v975
    %v977 = vlaneseq
    %v978 = vshrl.u32 %v977, 7
    %v979 = vsub.s32 %v976, %v978
    %v980 = vrot.slane %v973, %v979
    %v981 = vcombine.low %v901, %v902
    %v983 = vunpack.c.l.s4 1983009808
    %v984 = vunpack.c.0.s8 %v983
    %v985 = vlaneseq
    %v986 = vshrl.u32 %v985, 7
    %v987 = vsub.s32 %v984, %v986
    %v988 = vrot.slane %v981, %v987
    %v989 = vcombine.low %v893, %v900
    %v991 = vunpack.c.l.s4 1983009808
    %v992 = vunpack.c.0.s8 %v991
    %v993 = vlaneseq
    %v994 = vshrl.u32 %v993, 7
    %v995 = vsub.s32 %v992, %v994
    %v996 = vrot.slane %v989, %v995
    %v997 = vcombine.low %v903, %v904
    %v999 = vunpack.c.l.s4 1983009808
    %v1000 = vunpack.c.0.s8 %v999
    %v1001 = vlaneseq
    %v1002 = vshrl.u32 %v1001, 7
    %v1003 = vsub.s32 %v1000, %v1002
    %v1004 = vrot.slane %v997, %v1003
    %v1005 = vcombine.low %v980, %v988
    %v1006 = vcombine.high %v980, %v988
    %v1008 = vunpack.c.l.s4 1934713408
    %v1009 = vunpack.c.0.s8 %v1008
    %v1010 = vlaneseq
    %v1011 = vshrl.u32 %v1010, 7
    %v1012 = vsub.s32 %v1009, %v1011
    %v1013 = vrot.slane %v1005, %v1012
    %v1015 = vunpack.c.l.s4 1934713408
    %v1016 = vunpack.c.0.s8 %v1015
    %v1017 = vlaneseq
    %v1018 = vshrl.u32 %v1017, 7
    %v1019 = vsub.s32 %v1016, %v1018
    %v1020 = vrot.slane %v1006, %v1019
    %v1021 = vcombine.low %v996, %v1004
    %v1022 = vcombine.high %v996, %v1004
    %v1024 = vunpack.c.l.s4 1934713408
    %v1025 = vunpack.c.0.s8 %v1024
    %v1026 = vlaneseq
    %v1027 = vshrl.u32 %v1026, 7
    %v1028 = vsub.s32 %v1025, %v1027
    %v1029 = vrot.slane %v1021, %v1028
    %v1031 = vunpack.c.l.s4 1934713408
    %v1032 = vunpack.c.0.s8 %v1031
    %v1033 = vlaneseq
    %v1034 = vshrl.u32 %v1033, 7
    %v1035 = vsub.s32 %v1032, %v1034
    %v1036 = vrot.slane %v1022, %v1035
    %v1037 = vcombine.low %v1013, %v1029
    %v1038 = vcombine.high %v1013, %v1029
    %v1039 = vcombine.low %v1020, %v1036
    %v1040 = vcombine.high %v1020, %v1036
    %v1049 = vlaneseq
    %v1050 = vshrl.u32 %v1049, 7
    %v1051 = vsub.s32 0, %v1050
    %v1052 = vrot.slane %v56, %v1051
    %v1053 = vlaneseq
    %v1054 = vshrl.u32 %v1053, 7
    %v1055 = vsub.s32 0, %v1054
    %v1056 = vrot.slane %v57, %v1055
    %v1057 = vlaneseq
    %v1058 = vshrl.u32 %v1057, 7
    %v1059 = vsub.s32 0, %v1058
    %v1060 = vrot.slane %v58, %v1059
    %v1061 = vlaneseq
    %v1062 = vshrl.u32 %v1061, 7
    %v1063 = vsub.s32 0, %v1062
    %v1064 = vrot.slane %v59, %v1063
    %v1065 = vlaneseq
    %v1066 = vshrl.u32 %v1065, 7
    %v1067 = vsub.s32 0, %v1066
    %v1068 = vrot.slane %v60, %v1067
    %v1069 = vlaneseq
    %v1070 = vshrl.u32 %v1069, 7
    %v1071 = vsub.s32 0, %v1070
    %v1072 = vrot.slane %v61, %v1071
    %v1073 = vlaneseq
    %v1074 = vshrl.u32 %v1073, 7
    %v1075 = vsub.s32 0, %v1074
    %v1076 = vrot.slane %v62, %v1075
    %v1077 = vlaneseq
    %v1078 = vshrl.u32 %v1077, 7
    %v1079 = vsub.s32 0, %v1078
    %v1080 = vrot.slane %v63, %v1079
    %vm1089 = vcmask 64512
    %v1091 = vsel %vm1089, %v377, 0
    %v1094 = vsel %vm1089, %v673, 0
    %1096 = vmatprep.subr.mxu0 0.0
    %1097 = vmatpush1.xpose.msra.mxu0 0.0
    %1098 = vmatprep.subr.mxu0 0.0
    %1099 = vmatpush1.xpose.msra.mxu0 0.0
    %1100 = vmatprep.subr.mxu0 0.0
    %1101 = vmatpush1.xpose.msra.mxu0 0.0
    %1102 = vmatprep.subr.mxu0 0.0
    %1103 = vmatpush1.xpose.msra.mxu0 0.0
    %1104 = vmatprep.subr.mxu0 0.0
    %1105 = vmatpush1.xpose.msra.mxu0 0.0
    %1106 = vmatprep.subr.mxu0 0.0
    %1107 = vmatpush1.xpose.msra.mxu0 0.0
    %1108 = vmatprep.subr.mxu0 0.0
    %1109 = vmatpush1.xpose.msra.mxu0 0.0
    %1110 = vmatprep.subr.mxu0 0.0
    %1111 = vmatpush1.xpose.msra.mxu0 0.0
    %1112 = vmatprep.subr.mxu0 0.0
    %1113 = vmatpush1.xpose.msra.mxu0 0.0
    %1114 = vmatprep.subr.mxu0 0.0
    %1115 = vmatpush1.xpose.msra.mxu0 0.0
    %1116 = vmatprep.subr.mxu0 0.0
    %1117 = vmatpush1.xpose.msra.mxu0 0.0
    %1118 = vmatprep.subr.mxu0 0.0
    %1119 = vmatpush1.xpose.msra.mxu0 0.0
    %1120 = vmatprep.subr.mxu0 0.0
    %1121 = vmatpush1.xpose.msra.mxu0 0.0
    %1122 = vmatprep.subr.mxu0 0.0
    %1123 = vmatpush1.xpose.msra.mxu0 0.0
    %1124 = vmatprep.subr.mxu0 0.0
    %1125 = vmatpush1.xpose.msra.mxu0 0.0
    %1126 = vmatprep.subr.mxu0 0.0
    %1127 = vmatpush1.xpose.msra.mxu0 %v1094
    %1128 = vmatprep.subr.mxu0 0.0
    %1129 = vmatpush2.xpose.msra.mxu0 0.0
    %1130 = vmatprep.subr.mxu0 0.0
    %1131 = vmatpush2.xpose.msra.mxu0 0.0
    %1132 = vmatprep.subr.mxu0 0.0
    %1133 = vmatpush2.xpose.msra.mxu0 0.0
    %1134 = vmatprep.subr.mxu0 0.0
    %1135 = vmatpush2.xpose.msra.mxu0 0.0
    %1136 = vmatprep.subr.mxu0 0.0
    %1137 = vmatpush2.xpose.msra.mxu0 0.0
    %1138 = vmatprep.subr.mxu0 0.0
    %1139 = vmatpush2.xpose.msra.mxu0 0.0
    %1140 = vmatprep.subr.mxu0 0.0
    %1141 = vmatpush2.xpose.msra.mxu0 0.0
    %1142 = vmatprep.subr.mxu0 0.0
    %1143 = vmatpush2.xpose.msra.mxu0 0.0
    %1144 = vmatprep.subr.mxu0 0.0
    %1145 = vmatpush2.xpose.msra.mxu0 0.0
    %1146 = vmatprep.subr.mxu0 0.0
    %1147 = vmatpush2.xpose.msra.mxu0 0.0
    %1148 = vmatprep.subr.mxu0 0.0
    %1149 = vmatpush2.xpose.msra.mxu0 0.0
    %1150 = vmatprep.subr.mxu0 0.0
    %1151 = vmatpush2.xpose.msra.mxu0 0.0
    %1152 = vmatprep.subr.mxu0 0.0
    %1153 = vmatpush2.xpose.msra.mxu0 0.0
    %1154 = vmatprep.subr.mxu0 0.0
    %1155 = vmatpush2.xpose.msra.mxu0 0.0
    %1156 = vmatprep.subr.mxu0 0.0
    %1157 = vmatpush2.xpose.msra.mxu0 0.0
    %1158 = vmatprep.subr.mxu0 0.0
    %1159 = vmatpush2.xpose.msra.mxu0 0.0
    %1160 = vmatprep.mubr.f32.mxu0 0.0
    %1161 = vmatmul.mubr.f32.gmra.mxu0 %v1091
    %v1162 = vpop.f32.mrf.mxu0
    %v1163 = vadd.f32 %v1052, %v1162
    %v1164 = vpop.f32.mrf.mxu0
    %1165 = vdwg.mxu0
    %v1167 = vsel %vm1089, %v378, 0
    %v1170 = vsel %vm1089, %v674, 0
    %1172 = vmatprep.subr.mxu0 0.0
    %1173 = vmatpush1.xpose.msra.mxu0 0.0
    %1174 = vmatprep.subr.mxu0 0.0
    %1175 = vmatpush1.xpose.msra.mxu0 0.0
    %1176 = vmatprep.subr.mxu0 0.0
    %1177 = vmatpush1.xpose.msra.mxu0 0.0
    %1178 = vmatprep.subr.mxu0 0.0
    %1179 = vmatpush1.xpose.msra.mxu0 0.0
    %1180 = vmatprep.subr.mxu0 0.0
    %1181 = vmatpush1.xpose.msra.mxu0 0.0
    %1182 = vmatprep.subr.mxu0 0.0
    %1183 = vmatpush1.xpose.msra.mxu0 0.0
    %1184 = vmatprep.subr.mxu0 0.0
    %1185 = vmatpush1.xpose.msra.mxu0 0.0
    %1186 = vmatprep.subr.mxu0 0.0
    %1187 = vmatpush1.xpose.msra.mxu0 0.0
    %1188 = vmatprep.subr.mxu0 0.0
    %1189 = vmatpush1.xpose.msra.mxu0 0.0
    %1190 = vmatprep.subr.mxu0 0.0
    %1191 = vmatpush1.xpose.msra.mxu0 0.0
    %1192 = vmatprep.subr.mxu0 0.0
    %1193 = vmatpush1.xpose.msra.mxu0 0.0
    %1194 = vmatprep.subr.mxu0 0.0
    %1195 = vmatpush1.xpose.msra.mxu0 0.0
    %1196 = vmatprep.subr.mxu0 0.0
    %1197 = vmatpush1.xpose.msra.mxu0 0.0
    %1198 = vmatprep.subr.mxu0 0.0
    %1199 = vmatpush1.xpose.msra.mxu0 0.0
    %1200 = vmatprep.subr.mxu0 0.0
    %1201 = vmatpush1.xpose.msra.mxu0 0.0
    %1202 = vmatprep.subr.mxu0 0.0
    %1203 = vmatpush1.xpose.msra.mxu0 %v1170
    %1204 = vmatprep.subr.mxu0 0.0
    %1205 = vmatpush2.xpose.msra.mxu0 0.0
    %1206 = vmatprep.subr.mxu0 0.0
    %1207 = vmatpush2.xpose.msra.mxu0 0.0
    %1208 = vmatprep.subr.mxu0 0.0
    %1209 = vmatpush2.xpose.msra.mxu0 0.0
    %1210 = vmatprep.subr.mxu0 0.0
    %1211 = vmatpush2.xpose.msra.mxu0 0.0
    %1212 = vmatprep.subr.mxu0 0.0
    %1213 = vmatpush2.xpose.msra.mxu0 0.0
    %1214 = vmatprep.subr.mxu0 0.0
    %1215 = vmatpush2.xpose.msra.mxu0 0.0
    %1216 = vmatprep.subr.mxu0 0.0
    %1217 = vmatpush2.xpose.msra.mxu0 0.0
    %1218 = vmatprep.subr.mxu0 0.0
    %1219 = vmatpush2.xpose.msra.mxu0 0.0
    %1220 = vmatprep.subr.mxu0 0.0
    %1221 = vmatpush2.xpose.msra.mxu0 0.0
    %1222 = vmatprep.subr.mxu0 0.0
    %1223 = vmatpush2.xpose.msra.mxu0 0.0
    %1224 = vmatprep.subr.mxu0 0.0
    %1225 = vmatpush2.xpose.msra.mxu0 0.0
    %1226 = vmatprep.subr.mxu0 0.0
    %1227 = vmatpush2.xpose.msra.mxu0 0.0
    %1228 = vmatprep.subr.mxu0 0.0
    %1229 = vmatpush2.xpose.msra.mxu0 0.0
    %1230 = vmatprep.subr.mxu0 0.0
    %1231 = vmatpush2.xpose.msra.mxu0 0.0
    %1232 = vmatprep.subr.mxu0 0.0
    %1233 = vmatpush2.xpose.msra.mxu0 0.0
    %1234 = vmatprep.subr.mxu0 0.0
    %1235 = vmatpush2.xpose.msra.mxu0 0.0
    %1236 = vmatprep.mubr.f32.mxu0 0.0
    %1237 = vmatmul.mubr.f32.gmra.mxu0 %v1167
    %v1238 = vpop.f32.mrf.mxu0
    %v1239 = vadd.f32 %v1056, %v1238
    %v1240 = vpop.f32.mrf.mxu0
    %1241 = vdwg.mxu0
    %v1243 = vsel %vm1089, %v379, 0
    %v1246 = vsel %vm1089, %v675, 0
    %1248 = vmatprep.subr.mxu0 0.0
    %1249 = vmatpush1.xpose.msra.mxu0 0.0
    %1250 = vmatprep.subr.mxu0 0.0
    %1251 = vmatpush1.xpose.msra.mxu0 0.0
    %1252 = vmatprep.subr.mxu0 0.0
    %1253 = vmatpush1.xpose.msra.mxu0 0.0
    %1254 = vmatprep.subr.mxu0 0.0
    %1255 = vmatpush1.xpose.msra.mxu0 0.0
    %1256 = vmatprep.subr.mxu0 0.0
    %1257 = vmatpush1.xpose.msra.mxu0 0.0
    %1258 = vmatprep.subr.mxu0 0.0
    %1259 = vmatpush1.xpose.msra.mxu0 0.0
    %1260 = vmatprep.subr.mxu0 0.0
    %1261 = vmatpush1.xpose.msra.mxu0 0.0
    %1262 = vmatprep.subr.mxu0 0.0
    %1263 = vmatpush1.xpose.msra.mxu0 0.0
    %1264 = vmatprep.subr.mxu0 0.0
    %1265 = vmatpush1.xpose.msra.mxu0 0.0
    %1266 = vmatprep.subr.mxu0 0.0
    %1267 = vmatpush1.xpose.msra.mxu0 0.0
    %1268 = vmatprep.subr.mxu0 0.0
    %1269 = vmatpush1.xpose.msra.mxu0 0.0
    %1270 = vmatprep.subr.mxu0 0.0
    %1271 = vmatpush1.xpose.msra.mxu0 0.0
    %1272 = vmatprep.subr.mxu0 0.0
    %1273 = vmatpush1.xpose.msra.mxu0 0.0
    %1274 = vmatprep.subr.mxu0 0.0
    %1275 = vmatpush1.xpose.msra.mxu0 0.0
    %1276 = vmatprep.subr.mxu0 0.0
    %1277 = vmatpush1.xpose.msra.mxu0 0.0
    %1278 = vmatprep.subr.mxu0 0.0
    %1279 = vmatpush1.xpose.msra.mxu0 %v1246
    %1280 = vmatprep.subr.mxu0 0.0
    %1281 = vmatpush2.xpose.msra.mxu0 0.0
    %1282 = vmatprep.subr.mxu0 0.0
    %1283 = vmatpush2.xpose.msra.mxu0 0.0
    %1284 = vmatprep.subr.mxu0 0.0
    %1285 = vmatpush2.xpose.msra.mxu0 0.0
    %1286 = vmatprep.subr.mxu0 0.0
    %1287 = vmatpush2.xpose.msra.mxu0 0.0
    %1288 = vmatprep.subr.mxu0 0.0
    %1289 = vmatpush2.xpose.msra.mxu0 0.0
    %1290 = vmatprep.subr.mxu0 0.0
    %1291 = vmatpush2.xpose.msra.mxu0 0.0
    %1292 = vmatprep.subr.mxu0 0.0
    %1293 = vmatpush2.xpose.msra.mxu0 0.0
    %1294 = vmatprep.subr.mxu0 0.0
    %1295 = vmatpush2.xpose.msra.mxu0 0.0
    %1296 = vmatprep.subr.mxu0 0.0
    %1297 = vmatpush2.xpose.msra.mxu0 0.0
    %1298 = vmatprep.subr.mxu0 0.0
    %1299 = vmatpush2.xpose.msra.mxu0 0.0
    %1300 = vmatprep.subr.mxu0 0.0
    %1301 = vmatpush2.xpose.msra.mxu0 0.0
    %1302 = vmatprep.subr.mxu0 0.0
    %1303 = vmatpush2.xpose.msra.mxu0 0.0
    %1304 = vmatprep.subr.mxu0 0.0
    %1305 = vmatpush2.xpose.msra.mxu0 0.0
    %1306 = vmatprep.subr.mxu0 0.0
    %1307 = vmatpush2.xpose.msra.mxu0 0.0
    %1308 = vmatprep.subr.mxu0 0.0
    %1309 = vmatpush2.xpose.msra.mxu0 0.0
    %1310 = vmatprep.subr.mxu0 0.0
    %1311 = vmatpush2.xpose.msra.mxu0 0.0
    %1312 = vmatprep.mubr.f32.mxu0 0.0
    %1313 = vmatmul.mubr.f32.gmra.mxu0 %v1243
    %v1314 = vpop.f32.mrf.mxu0
    %v1315 = vadd.f32 %v1060, %v1314
    %v1316 = vpop.f32.mrf.mxu0
    %1317 = vdwg.mxu0
    %v1319 = vsel %vm1089, %v380, 0
    %v1322 = vsel %vm1089, %v676, 0
    %1324 = vmatprep.subr.mxu0 0.0
    %1325 = vmatpush1.xpose.msra.mxu0 0.0
    %1326 = vmatprep.subr.mxu0 0.0
    %1327 = vmatpush1.xpose.msra.mxu0 0.0
    %1328 = vmatprep.subr.mxu0 0.0
    %1329 = vmatpush1.xpose.msra.mxu0 0.0
    %1330 = vmatprep.subr.mxu0 0.0
    %1331 = vmatpush1.xpose.msra.mxu0 0.0
    %1332 = vmatprep.subr.mxu0 0.0
    %1333 = vmatpush1.xpose.msra.mxu0 0.0
    %1334 = vmatprep.subr.mxu0 0.0
    %1335 = vmatpush1.xpose.msra.mxu0 0.0
    %1336 = vmatprep.subr.mxu0 0.0
    %1337 = vmatpush1.xpose.msra.mxu0 0.0
    %1338 = vmatprep.subr.mxu0 0.0
    %1339 = vmatpush1.xpose.msra.mxu0 0.0
    %1340 = vmatprep.subr.mxu0 0.0
    %1341 = vmatpush1.xpose.msra.mxu0 0.0
    %1342 = vmatprep.subr.mxu0 0.0
    %1343 = vmatpush1.xpose.msra.mxu0 0.0
    %1344 = vmatprep.subr.mxu0 0.0
    %1345 = vmatpush1.xpose.msra.mxu0 0.0
    %1346 = vmatprep.subr.mxu0 0.0
    %1347 = vmatpush1.xpose.msra.mxu0 0.0
    %1348 = vmatprep.subr.mxu0 0.0
    %1349 = vmatpush1.xpose.msra.mxu0 0.0
    %1350 = vmatprep.subr.mxu0 0.0
    %1351 = vmatpush1.xpose.msra.mxu0 0.0
    %1352 = vmatprep.subr.mxu0 0.0
    %1353 = vmatpush1.xpose.msra.mxu0 0.0
    %1354 = vmatprep.subr.mxu0 0.0
    %1355 = vmatpush1.xpose.msra.mxu0 %v1322
    %1356 = vmatprep.subr.mxu0 0.0
    %1357 = vmatpush2.xpose.msra.mxu0 0.0
    %1358 = vmatprep.subr.mxu0 0.0
    %1359 = vmatpush2.xpose.msra.mxu0 0.0
    %1360 = vmatprep.subr.mxu0 0.0
    %1361 = vmatpush2.xpose.msra.mxu0 0.0
    %1362 = vmatprep.subr.mxu0 0.0
    %1363 = vmatpush2.xpose.msra.mxu0 0.0
    %1364 = vmatprep.subr.mxu0 0.0
    %1365 = vmatpush2.xpose.msra.mxu0 0.0
    %1366 = vmatprep.subr.mxu0 0.0
    %1367 = vmatpush2.xpose.msra.mxu0 0.0
    %1368 = vmatprep.subr.mxu0 0.0
    %1369 = vmatpush2.xpose.msra.mxu0 0.0
    %1370 = vmatprep.subr.mxu0 0.0
    %1371 = vmatpush2.xpose.msra.mxu0 0.0
    %1372 = vmatprep.subr.mxu0 0.0
    %1373 = vmatpush2.xpose.msra.mxu0 0.0
    %1374 = vmatprep.subr.mxu0 0.0
    %1375 = vmatpush2.xpose.msra.mxu0 0.0
    %1376 = vmatprep.subr.mxu0 0.0
    %1377 = vmatpush2.xpose.msra.mxu0 0.0
    %1378 = vmatprep.subr.mxu0 0.0
    %1379 = vmatpush2.xpose.msra.mxu0 0.0
    %1380 = vmatprep.subr.mxu0 0.0
    %1381 = vmatpush2.xpose.msra.mxu0 0.0
    %1382 = vmatprep.subr.mxu0 0.0
    %1383 = vmatpush2.xpose.msra.mxu0 0.0
    %1384 = vmatprep.subr.mxu0 0.0
    %1385 = vmatpush2.xpose.msra.mxu0 0.0
    %1386 = vmatprep.subr.mxu0 0.0
    %1387 = vmatpush2.xpose.msra.mxu0 0.0
    %1388 = vmatprep.mubr.f32.mxu0 0.0
    %1389 = vmatmul.mubr.f32.gmra.mxu0 %v1319
    %v1390 = vpop.f32.mrf.mxu0
    %v1391 = vadd.f32 %v1064, %v1390
    %v1392 = vpop.f32.mrf.mxu0
    %1393 = vdwg.mxu0
    %v1395 = vsel %vm1089, %v445, 0
    %v1398 = vsel %vm1089, %v741, 0
    %1400 = vmatprep.subr.mxu0 0.0
    %1401 = vmatpush1.xpose.msra.mxu0 0.0
    %1402 = vmatprep.subr.mxu0 0.0
    %1403 = vmatpush1.xpose.msra.mxu0 0.0
    %1404 = vmatprep.subr.mxu0 0.0
    %1405 = vmatpush1.xpose.msra.mxu0 0.0
    %1406 = vmatprep.subr.mxu0 0.0
    %1407 = vmatpush1.xpose.msra.mxu0 0.0
    %1408 = vmatprep.subr.mxu0 0.0
    %1409 = vmatpush1.xpose.msra.mxu0 0.0
    %1410 = vmatprep.subr.mxu0 0.0
    %1411 = vmatpush1.xpose.msra.mxu0 0.0
    %1412 = vmatprep.subr.mxu0 0.0
    %1413 = vmatpush1.xpose.msra.mxu0 0.0
    %1414 = vmatprep.subr.mxu0 0.0
    %1415 = vmatpush1.xpose.msra.mxu0 0.0
    %1416 = vmatprep.subr.mxu0 0.0
    %1417 = vmatpush1.xpose.msra.mxu0 0.0
    %1418 = vmatprep.subr.mxu0 0.0
    %1419 = vmatpush1.xpose.msra.mxu0 0.0
    %1420 = vmatprep.subr.mxu0 0.0
    %1421 = vmatpush1.xpose.msra.mxu0 0.0
    %1422 = vmatprep.subr.mxu0 0.0
    %1423 = vmatpush1.xpose.msra.mxu0 0.0
    %1424 = vmatprep.subr.mxu0 0.0
    %1425 = vmatpush1.xpose.msra.mxu0 0.0
    %1426 = vmatprep.subr.mxu0 0.0
    %1427 = vmatpush1.xpose.msra.mxu0 0.0
    %1428 = vmatprep.subr.mxu0 0.0
    %1429 = vmatpush1.xpose.msra.mxu0 0.0
    %1430 = vmatprep.subr.mxu0 0.0
    %1431 = vmatpush1.xpose.msra.mxu0 %v1398
    %1432 = vmatprep.subr.mxu0 0.0
    %1433 = vmatpush2.xpose.msra.mxu0 0.0
    %1434 = vmatprep.subr.mxu0 0.0
    %1435 = vmatpush2.xpose.msra.mxu0 0.0
    %1436 = vmatprep.subr.mxu0 0.0
    %1437 = vmatpush2.xpose.msra.mxu0 0.0
    %1438 = vmatprep.subr.mxu0 0.0
    %1439 = vmatpush2.xpose.msra.mxu0 0.0
    %1440 = vmatprep.subr.mxu0 0.0
    %1441 = vmatpush2.xpose.msra.mxu0 0.0
    %1442 = vmatprep.subr.mxu0 0.0
    %1443 = vmatpush2.xpose.msra.mxu0 0.0
    %1444 = vmatprep.subr.mxu0 0.0
    %1445 = vmatpush2.xpose.msra.mxu0 0.0
    %1446 = vmatprep.subr.mxu0 0.0
    %1447 = vmatpush2.xpose.msra.mxu0 0.0
    %1448 = vmatprep.subr.mxu0 0.0
    %1449 = vmatpush2.xpose.msra.mxu0 0.0
    %1450 = vmatprep.subr.mxu0 0.0
    %1451 = vmatpush2.xpose.msra.mxu0 0.0
    %1452 = vmatprep.subr.mxu0 0.0
    %1453 = vmatpush2.xpose.msra.mxu0 0.0
    %1454 = vmatprep.subr.mxu0 0.0
    %1455 = vmatpush2.xpose.msra.mxu0 0.0
    %1456 = vmatprep.subr.mxu0 0.0
    %1457 = vmatpush2.xpose.msra.mxu0 0.0
    %1458 = vmatprep.subr.mxu0 0.0
    %1459 = vmatpush2.xpose.msra.mxu0 0.0
    %1460 = vmatprep.subr.mxu0 0.0
    %1461 = vmatpush2.xpose.msra.mxu0 0.0
    %1462 = vmatprep.subr.mxu0 0.0
    %1463 = vmatpush2.xpose.msra.mxu0 0.0
    %1464 = vmatprep.mubr.f32.mxu0 0.0
    %1465 = vmatmul.mubr.f32.gmra.mxu0 %v1395
    %v1466 = vpop.f32.mrf.mxu0
    %v1467 = vadd.f32 %v1068, %v1466
    %v1468 = vpop.f32.mrf.mxu0
    %1469 = vdwg.mxu0
    %v1471 = vsel %vm1089, %v446, 0
    %v1474 = vsel %vm1089, %v742, 0
    %1476 = vmatprep.subr.mxu0 0.0
    %1477 = vmatpush1.xpose.msra.mxu0 0.0
    %1478 = vmatprep.subr.mxu0 0.0
    %1479 = vmatpush1.xpose.msra.mxu0 0.0
    %1480 = vmatprep.subr.mxu0 0.0
    %1481 = vmatpush1.xpose.msra.mxu0 0.0
    %1482 = vmatprep.subr.mxu0 0.0
    %1483 = vmatpush1.xpose.msra.mxu0 0.0
    %1484 = vmatprep.subr.mxu0 0.0
    %1485 = vmatpush1.xpose.msra.mxu0 0.0
    %1486 = vmatprep.subr.mxu0 0.0
    %1487 = vmatpush1.xpose.msra.mxu0 0.0
    %1488 = vmatprep.subr.mxu0 0.0
    %1489 = vmatpush1.xpose.msra.mxu0 0.0
    %1490 = vmatprep.subr.mxu0 0.0
    %1491 = vmatpush1.xpose.msra.mxu0 0.0
    %1492 = vmatprep.subr.mxu0 0.0
    %1493 = vmatpush1.xpose.msra.mxu0 0.0
    %1494 = vmatprep.subr.mxu0 0.0
    %1495 = vmatpush1.xpose.msra.mxu0 0.0
    %1496 = vmatprep.subr.mxu0 0.0
    %1497 = vmatpush1.xpose.msra.mxu0 0.0
    %1498 = vmatprep.subr.mxu0 0.0
    %1499 = vmatpush1.xpose.msra.mxu0 0.0
    %1500 = vmatprep.subr.mxu0 0.0
    %1501 = vmatpush1.xpose.msra.mxu0 0.0
    %1502 = vmatprep.subr.mxu0 0.0
    %1503 = vmatpush1.xpose.msra.mxu0 0.0
    %1504 = vmatprep.subr.mxu0 0.0
    %1505 = vmatpush1.xpose.msra.mxu0 0.0
    %1506 = vmatprep.subr.mxu0 0.0
    %1507 = vmatpush1.xpose.msra.mxu0 %v1474
    %1508 = vmatprep.subr.mxu0 0.0
    %1509 = vmatpush2.xpose.msra.mxu0 0.0
    %1510 = vmatprep.subr.mxu0 0.0
    %1511 = vmatpush2.xpose.msra.mxu0 0.0
    %1512 = vmatprep.subr.mxu0 0.0
    %1513 = vmatpush2.xpose.msra.mxu0 0.0
    %1514 = vmatprep.subr.mxu0 0.0
    %1515 = vmatpush2.xpose.msra.mxu0 0.0
    %1516 = vmatprep.subr.mxu0 0.0
    %1517 = vmatpush2.xpose.msra.mxu0 0.0
    %1518 = vmatprep.subr.mxu0 0.0
    %1519 = vmatpush2.xpose.msra.mxu0 0.0
    %1520 = vmatprep.subr.mxu0 0.0
    %1521 = vmatpush2.xpose.msra.mxu0 0.0
    %1522 = vmatprep.subr.mxu0 0.0
    %1523 = vmatpush2.xpose.msra.mxu0 0.0
    %1524 = vmatprep.subr.mxu0 0.0
    %1525 = vmatpush2.xpose.msra.mxu0 0.0
    %1526 = vmatprep.subr.mxu0 0.0
    %1527 = vmatpush2.xpose.msra.mxu0 0.0
    %1528 = vmatprep.subr.mxu0 0.0
    %1529 = vmatpush2.xpose.msra.mxu0 0.0
    %1530 = vmatprep.subr.mxu0 0.0
    %1531 = vmatpush2.xpose.msra.mxu0 0.0
    %1532 = vmatprep.subr.mxu0 0.0
    %1533 = vmatpush2.xpose.msra.mxu0 0.0
    %1534 = vmatprep.subr.mxu0 0.0
    %1535 = vmatpush2.xpose.msra.mxu0 0.0
    %1536 = vmatprep.subr.mxu0 0.0
    %1537 = vmatpush2.xpose.msra.mxu0 0.0
    %1538 = vmatprep.subr.mxu0 0.0
    %1539 = vmatpush2.xpose.msra.mxu0 0.0
    %1540 = vmatprep.mubr.f32.mxu0 0.0
    %1541 = vmatmul.mubr.f32.gmra.mxu0 %v1471
    %v1542 = vpop.f32.mrf.mxu0
    %v1543 = vadd.f32 %v1072, %v1542
    %v1544 = vpop.f32.mrf.mxu0
    %1545 = vdwg.mxu0
    %v1547 = vsel %vm1089, %v447, 0
    %v1550 = vsel %vm1089, %v743, 0
    %1552 = vmatprep.subr.mxu0 0.0
    %1553 = vmatpush1.xpose.msra.mxu0 0.0
    %1554 = vmatprep.subr.mxu0 0.0
    %1555 = vmatpush1.xpose.msra.mxu0 0.0
    %1556 = vmatprep.subr.mxu0 0.0
    %1557 = vmatpush1.xpose.msra.mxu0 0.0
    %1558 = vmatprep.subr.mxu0 0.0
    %1559 = vmatpush1.xpose.msra.mxu0 0.0
    %1560 = vmatprep.subr.mxu0 0.0
    %1561 = vmatpush1.xpose.msra.mxu0 0.0
    %1562 = vmatprep.subr.mxu0 0.0
    %1563 = vmatpush1.xpose.msra.mxu0 0.0
    %1564 = vmatprep.subr.mxu0 0.0
    %1565 = vmatpush1.xpose.msra.mxu0 0.0
    %1566 = vmatprep.subr.mxu0 0.0
    %1567 = vmatpush1.xpose.msra.mxu0 0.0
    %1568 = vmatprep.subr.mxu0 0.0
    %1569 = vmatpush1.xpose.msra.mxu0 0.0
    %1570 = vmatprep.subr.mxu0 0.0
    %1571 = vmatpush1.xpose.msra.mxu0 0.0
    %1572 = vmatprep.subr.mxu0 0.0
    %1573 = vmatpush1.xpose.msra.mxu0 0.0
    %1574 = vmatprep.subr.mxu0 0.0
    %1575 = vmatpush1.xpose.msra.mxu0 0.0
    %1576 = vmatprep.subr.mxu0 0.0
    %1577 = vmatpush1.xpose.msra.mxu0 0.0
    %1578 = vmatprep.subr.mxu0 0.0
    %1579 = vmatpush1.xpose.msra.mxu0 0.0
    %1580 = vmatprep.subr.mxu0 0.0
    %1581 = vmatpush1.xpose.msra.mxu0 0.0
    %1582 = vmatprep.subr.mxu0 0.0
    %1583 = vmatpush1.xpose.msra.mxu0 %v1550
    %1584 = vmatprep.subr.mxu0 0.0
    %1585 = vmatpush2.xpose.msra.mxu0 0.0
    %1586 = vmatprep.subr.mxu0 0.0
    %1587 = vmatpush2.xpose.msra.mxu0 0.0
    %1588 = vmatprep.subr.mxu0 0.0
    %1589 = vmatpush2.xpose.msra.mxu0 0.0
    %1590 = vmatprep.subr.mxu0 0.0
    %1591 = vmatpush2.xpose.msra.mxu0 0.0
    %1592 = vmatprep.subr.mxu0 0.0
    %1593 = vmatpush2.xpose.msra.mxu0 0.0
    %1594 = vmatprep.subr.mxu0 0.0
    %1595 = vmatpush2.xpose.msra.mxu0 0.0
    %1596 = vmatprep.subr.mxu0 0.0
    %1597 = vmatpush2.xpose.msra.mxu0 0.0
    %1598 = vmatprep.subr.mxu0 0.0
    %1599 = vmatpush2.xpose.msra.mxu0 0.0
    %1600 = vmatprep.subr.mxu0 0.0
    %1601 = vmatpush2.xpose.msra.mxu0 0.0
    %1602 = vmatprep.subr.mxu0 0.0
    %1603 = vmatpush2.xpose.msra.mxu0 0.0
    %1604 = vmatprep.subr.mxu0 0.0
    %1605 = vmatpush2.xpose.msra.mxu0 0.0
    %1606 = vmatprep.subr.mxu0 0.0
    %1607 = vmatpush2.xpose.msra.mxu0 0.0
    %1608 = vmatprep.subr.mxu0 0.0
    %1609 = vmatpush2.xpose.msra.mxu0 0.0
    %1610 = vmatprep.subr.mxu0 0.0
    %1611 = vmatpush2.xpose.msra.mxu0 0.0
    %1612 = vmatprep.subr.mxu0 0.0
    %1613 = vmatpush2.xpose.msra.mxu0 0.0
    %1614 = vmatprep.subr.mxu0 0.0
    %1615 = vmatpush2.xpose.msra.mxu0 0.0
    %1616 = vmatprep.mubr.f32.mxu0 0.0
    %1617 = vmatmul.mubr.f32.gmra.mxu0 %v1547
    %v1618 = vpop.f32.mrf.mxu0
    %v1619 = vadd.f32 %v1076, %v1618
    %v1620 = vpop.f32.mrf.mxu0
    %1621 = vdwg.mxu0
    %v1623 = vsel %vm1089, %v448, 0
    %v1626 = vsel %vm1089, %v744, 0
    %1628 = vmatprep.subr.mxu0 0.0
    %1629 = vmatpush1.xpose.msra.mxu0 0.0
    %1630 = vmatprep.subr.mxu0 0.0
    %1631 = vmatpush1.xpose.msra.mxu0 0.0
    %1632 = vmatprep.subr.mxu0 0.0
    %1633 = vmatpush1.xpose.msra.mxu0 0.0
    %1634 = vmatprep.subr.mxu0 0.0
    %1635 = vmatpush1.xpose.msra.mxu0 0.0
    %1636 = vmatprep.subr.mxu0 0.0
    %1637 = vmatpush1.xpose.msra.mxu0 0.0
    %1638 = vmatprep.subr.mxu0 0.0
    %1639 = vmatpush1.xpose.msra.mxu0 0.0
    %1640 = vmatprep.subr.mxu0 0.0
    %1641 = vmatpush1.xpose.msra.mxu0 0.0
    %1642 = vmatprep.subr.mxu0 0.0
    %1643 = vmatpush1.xpose.msra.mxu0 0.0
    %1644 = vmatprep.subr.mxu0 0.0
    %1645 = vmatpush1.xpose.msra.mxu0 0.0
    %1646 = vmatprep.subr.mxu0 0.0
    %1647 = vmatpush1.xpose.msra.mxu0 0.0
    %1648 = vmatprep.subr.mxu0 0.0
    %1649 = vmatpush1.xpose.msra.mxu0 0.0
    %1650 = vmatprep.subr.mxu0 0.0
    %1651 = vmatpush1.xpose.msra.mxu0 0.0
    %1652 = vmatprep.subr.mxu0 0.0
    %1653 = vmatpush1.xpose.msra.mxu0 0.0
    %1654 = vmatprep.subr.mxu0 0.0
    %1655 = vmatpush1.xpose.msra.mxu0 0.0
    %1656 = vmatprep.subr.mxu0 0.0
    %1657 = vmatpush1.xpose.msra.mxu0 0.0
    %1658 = vmatprep.subr.mxu0 0.0
    %1659 = vmatpush1.xpose.msra.mxu0 %v1626
    %1660 = vmatprep.subr.mxu0 0.0
    %1661 = vmatpush2.xpose.msra.mxu0 0.0
    %1662 = vmatprep.subr.mxu0 0.0
    %1663 = vmatpush2.xpose.msra.mxu0 0.0
    %1664 = vmatprep.subr.mxu0 0.0
    %1665 = vmatpush2.xpose.msra.mxu0 0.0
    %1666 = vmatprep.subr.mxu0 0.0
    %1667 = vmatpush2.xpose.msra.mxu0 0.0
    %1668 = vmatprep.subr.mxu0 0.0
    %1669 = vmatpush2.xpose.msra.mxu0 0.0
    %1670 = vmatprep.subr.mxu0 0.0
    %1671 = vmatpush2.xpose.msra.mxu0 0.0
    %1672 = vmatprep.subr.mxu0 0.0
    %1673 = vmatpush2.xpose.msra.mxu0 0.0
    %1674 = vmatprep.subr.mxu0 0.0
    %1675 = vmatpush2.xpose.msra.mxu0 0.0
    %1676 = vmatprep.subr.mxu0 0.0
    %1677 = vmatpush2.xpose.msra.mxu0 0.0
    %1678 = vmatprep.subr.mxu0 0.0
    %1679 = vmatpush2.xpose.msra.mxu0 0.0
    %1680 = vmatprep.subr.mxu0 0.0
    %1681 = vmatpush2.xpose.msra.mxu0 0.0
    %1682 = vmatprep.subr.mxu0 0.0
    %1683 = vmatpush2.xpose.msra.mxu0 0.0
    %1684 = vmatprep.subr.mxu0 0.0
    %1685 = vmatpush2.xpose.msra.mxu0 0.0
    %1686 = vmatprep.subr.mxu0 0.0
    %1687 = vmatpush2.xpose.msra.mxu0 0.0
    %1688 = vmatprep.subr.mxu0 0.0
    %1689 = vmatpush2.xpose.msra.mxu0 0.0
    %1690 = vmatprep.subr.mxu0 0.0
    %1691 = vmatpush2.xpose.msra.mxu0 0.0
    %1692 = vmatprep.mubr.f32.mxu0 0.0
    %1693 = vmatmul.mubr.f32.gmra.mxu0 %v1623
    %v1694 = vpop.f32.mrf.mxu0
    %v1695 = vadd.f32 %v1080, %v1694
    %v1696 = vpop.f32.mrf.mxu0
    %1697 = vdwg.mxu0
    %v1698 = vsel %vm1089, %v1163, -inf
    %1699 = vmax.xlane.f32.xlu0 %v1698
    %v1700 = vpop.xlane.xlu0 %1699
    %v1701 = vsel %vm1089, %v1239, -inf
    %1702 = vmax.xlane.f32.xlu0 %v1701
    %v1703 = vpop.xlane.xlu0 %1702
    %v1704 = vsel %vm1089, %v1315, -inf
    %1705 = vmax.xlane.f32.xlu0 %v1704
    %v1706 = vpop.xlane.xlu0 %1705
    %v1707 = vsel %vm1089, %v1391, -inf
    %1708 = vmax.xlane.f32.xlu0 %v1707
    %v1709 = vpop.xlane.xlu0 %1708
    %v1710 = vsel %vm1089, %v1467, -inf
    %1711 = vmax.xlane.f32.xlu0 %v1710
    %v1712 = vpop.xlane.xlu0 %1711
    %v1713 = vsel %vm1089, %v1543, -inf
    %1714 = vmax.xlane.f32.xlu0 %v1713
    %v1715 = vpop.xlane.xlu0 %1714
    %v1716 = vsel %vm1089, %v1619, -inf
    %1717 = vmax.xlane.f32.xlu0 %v1716
    %v1718 = vpop.xlane.xlu0 %1717
    %v1719 = vsel %vm1089, %v1695, -inf
    %1720 = vmax.xlane.f32.xlu0 %v1719
    %v1721 = vpop.xlane.xlu0 %1720
    %v1722 = vsub.f32 %v1163, %v1700
    %v1723 = vsub.f32 %v1239, %v1703
    %v1724 = vsub.f32 %v1315, %v1706
    %v1725 = vsub.f32 %v1391, %v1709
    %v1726 = vsub.f32 %v1467, %v1712
    %v1727 = vsub.f32 %v1543, %v1715
    %v1728 = vsub.f32 %v1619, %v1718
    %v1729 = vsub.f32 %v1695, %v1721
    %v1730 = vmul.f32 %v1722, 1.442695
    %v1731 = vpow.pop %v1730
    %v1732 = vmul.f32 %v1723, 1.442695
    %v1733 = vpow.pop %v1732
    %v1734 = vmul.f32 %v1724, 1.442695
    %v1735 = vpow.pop %v1734
    %v1736 = vmul.f32 %v1725, 1.442695
    %v1737 = vpow.pop %v1736
    %v1738 = vmul.f32 %v1726, 1.442695
    %v1739 = vpow.pop %v1738
    %v1740 = vmul.f32 %v1727, 1.442695
    %v1741 = vpow.pop %v1740
    %v1742 = vmul.f32 %v1728, 1.442695
    %v1743 = vpow.pop %v1742
    %v1744 = vmul.f32 %v1729, 1.442695
    %v1745 = vpow.pop %v1744
    %v1746 = vsel %vm1089, %v1731, 0.0
    %1747 = vadd.xlane.f32.xlu0 %v1746
    %v1748 = vpop.xlane.xlu0 %1747
    %v1749 = vsel %vm1089, %v1733, 0.0
    %1750 = vadd.xlane.f32.xlu0 %v1749
    %v1751 = vpop.xlane.xlu0 %1750
    %v1752 = vsel %vm1089, %v1735, 0.0
    %1753 = vadd.xlane.f32.xlu0 %v1752
    %v1754 = vpop.xlane.xlu0 %1753
    %v1755 = vsel %vm1089, %v1737, 0.0
    %1756 = vadd.xlane.f32.xlu0 %v1755
    %v1757 = vpop.xlane.xlu0 %1756
    %v1758 = vsel %vm1089, %v1739, 0.0
    %1759 = vadd.xlane.f32.xlu0 %v1758
    %v1760 = vpop.xlane.xlu0 %1759
    %v1761 = vsel %vm1089, %v1741, 0.0
    %1762 = vadd.xlane.f32.xlu0 %v1761
    %v1763 = vpop.xlane.xlu0 %1762
    %v1764 = vsel %vm1089, %v1743, 0.0
    %1765 = vadd.xlane.f32.xlu0 %v1764
    %v1766 = vpop.xlane.xlu0 %1765
    %v1767 = vsel %vm1089, %v1745, 0.0
    %1768 = vadd.xlane.f32.xlu0 %v1767
    %v1769 = vpop.xlane.xlu0 %1768
    %v1770 = vrcp.pop %v1748
    %v1771 = vmul.f32 %v1731, %v1770
    %v1772 = vrcp.pop %v1751
    %v1773 = vmul.f32 %v1733, %v1772
    %v1774 = vrcp.pop %v1754
    %v1775 = vmul.f32 %v1735, %v1774
    %v1776 = vrcp.pop %v1757
    %v1777 = vmul.f32 %v1737, %v1776
    %v1778 = vrcp.pop %v1760
    %v1779 = vmul.f32 %v1739, %v1778
    %v1780 = vrcp.pop %v1763
    %v1781 = vmul.f32 %v1741, %v1780
    %v1782 = vrcp.pop %v1766
    %v1783 = vmul.f32 %v1743, %v1782
    %v1784 = vrcp.pop %v1769
    %v1785 = vmul.f32 %v1745, %v1784
    %v1787 = vsel %vm1089, %v1771, 0
    %1789 = vmatprep.subr.mxu0 0.0
    %1790 = vmatpush1.msra.mxu0 0.0
    %1791 = vmatprep.subr.mxu0 0.0
    %1792 = vmatpush1.msra.mxu0 0.0
    %1793 = vmatprep.subr.mxu0 0.0
    %1794 = vmatpush1.msra.mxu0 0.0
    %1795 = vmatprep.subr.mxu0 0.0
    %1796 = vmatpush1.msra.mxu0 0.0
    %1797 = vmatprep.subr.mxu0 0.0
    %1798 = vmatpush1.msra.mxu0 0.0
    %1799 = vmatprep.subr.mxu0 0.0
    %1800 = vmatpush1.msra.mxu0 0.0
    %1801 = vmatprep.subr.mxu0 0.0
    %1802 = vmatpush1.msra.mxu0 0.0
    %1803 = vmatprep.subr.mxu0 0.0
    %1804 = vmatpush1.msra.mxu0 0.0
    %1805 = vmatprep.subr.mxu0 0.0
    %1806 = vmatpush1.msra.mxu0 0.0
    %1807 = vmatprep.subr.mxu0 0.0
    %1808 = vmatpush1.msra.mxu0 0.0
    %1809 = vmatprep.subr.mxu0 0.0
    %1810 = vmatpush1.msra.mxu0 0.0
    %1811 = vmatprep.subr.mxu0 0.0
    %1812 = vmatpush1.msra.mxu0 0.0
    %1813 = vmatprep.subr.mxu0 0.0
    %1814 = vmatpush1.msra.mxu0 0.0
    %1815 = vmatprep.subr.mxu0 0.0
    %1816 = vmatpush1.msra.mxu0 0.0
    %1817 = vmatprep.subr.mxu0 0.0
    %1818 = vmatpush1.msra.mxu0 0.0
    %1819 = vmatprep.subr.mxu0 0.0
    %1820 = vmatpush1.msra.mxu0 %v969
    %1821 = vmatprep.subr.mxu0 0.0
    %1822 = vmatpush2.msra.mxu0 0.0
    %1823 = vmatprep.subr.mxu0 0.0
    %1824 = vmatpush2.msra.mxu0 0.0
    %1825 = vmatprep.subr.mxu0 0.0
    %1826 = vmatpush2.msra.mxu0 0.0
    %1827 = vmatprep.subr.mxu0 0.0
    %1828 = vmatpush2.msra.mxu0 0.0
    %1829 = vmatprep.subr.mxu0 0.0
    %1830 = vmatpush2.msra.mxu0 0.0
    %1831 = vmatprep.subr.mxu0 0.0
    %1832 = vmatpush2.msra.mxu0 0.0
    %1833 = vmatprep.subr.mxu0 0.0
    %1834 = vmatpush2.msra.mxu0 0.0
    %1835 = vmatprep.subr.mxu0 0.0
    %1836 = vmatpush2.msra.mxu0 0.0
    %1837 = vmatprep.subr.mxu0 0.0
    %1838 = vmatpush2.msra.mxu0 0.0
    %1839 = vmatprep.subr.mxu0 0.0
    %1840 = vmatpush2.msra.mxu0 0.0
    %1841 = vmatprep.subr.mxu0 0.0
    %1842 = vmatpush2.msra.mxu0 0.0
    %1843 = vmatprep.subr.mxu0 0.0
    %1844 = vmatpush2.msra.mxu0 0.0
    %1845 = vmatprep.subr.mxu0 0.0
    %1846 = vmatpush2.msra.mxu0 0.0
    %1847 = vmatprep.subr.mxu0 0.0
    %1848 = vmatpush2.msra.mxu0 0.0
    %1849 = vmatprep.subr.mxu0 0.0
    %1850 = vmatpush2.msra.mxu0 0.0
    %1851 = vmatprep.subr.mxu0 0.0
    %1852 = vmatpush2.msra.mxu0 0.0
    %1853 = vmatprep.mubr.f32.mxu0 0.0
    %1854 = vmatmul.mubr.f32.gmra.mxu0 %v1787
    %v1855 = vpop.f32.mrf.mxu0
    %v1856 = vadd.f32 0.0, %v1855
    %v1857 = vpop.f32.mrf.mxu0
    %1858 = vdwg.mxu0
    %v1860 = vsel %vm1089, %v1773, 0
    %1862 = vmatprep.subr.mxu0 0.0
    %1863 = vmatpush1.msra.mxu0 0.0
    %1864 = vmatprep.subr.mxu0 0.0
    %1865 = vmatpush1.msra.mxu0 0.0
    %1866 = vmatprep.subr.mxu0 0.0
    %1867 = vmatpush1.msra.mxu0 0.0
    %1868 = vmatprep.subr.mxu0 0.0
    %1869 = vmatpush1.msra.mxu0 0.0
    %1870 = vmatprep.subr.mxu0 0.0
    %1871 = vmatpush1.msra.mxu0 0.0
    %1872 = vmatprep.subr.mxu0 0.0
    %1873 = vmatpush1.msra.mxu0 0.0
    %1874 = vmatprep.subr.mxu0 0.0
    %1875 = vmatpush1.msra.mxu0 0.0
    %1876 = vmatprep.subr.mxu0 0.0
    %1877 = vmatpush1.msra.mxu0 0.0
    %1878 = vmatprep.subr.mxu0 0.0
    %1879 = vmatpush1.msra.mxu0 0.0
    %1880 = vmatprep.subr.mxu0 0.0
    %1881 = vmatpush1.msra.mxu0 0.0
    %1882 = vmatprep.subr.mxu0 0.0
    %1883 = vmatpush1.msra.mxu0 0.0
    %1884 = vmatprep.subr.mxu0 0.0
    %1885 = vmatpush1.msra.mxu0 0.0
    %1886 = vmatprep.subr.mxu0 0.0
    %1887 = vmatpush1.msra.mxu0 0.0
    %1888 = vmatprep.subr.mxu0 0.0
    %1889 = vmatpush1.msra.mxu0 0.0
    %1890 = vmatprep.subr.mxu0 0.0
    %1891 = vmatpush1.msra.mxu0 0.0
    %1892 = vmatprep.subr.mxu0 0.0
    %1893 = vmatpush1.msra.mxu0 %v970
    %1894 = vmatprep.subr.mxu0 0.0
    %1895 = vmatpush2.msra.mxu0 0.0
    %1896 = vmatprep.subr.mxu0 0.0
    %1897 = vmatpush2.msra.mxu0 0.0
    %1898 = vmatprep.subr.mxu0 0.0
    %1899 = vmatpush2.msra.mxu0 0.0
    %1900 = vmatprep.subr.mxu0 0.0
    %1901 = vmatpush2.msra.mxu0 0.0
    %1902 = vmatprep.subr.mxu0 0.0
    %1903 = vmatpush2.msra.mxu0 0.0
    %1904 = vmatprep.subr.mxu0 0.0
    %1905 = vmatpush2.msra.mxu0 0.0
    %1906 = vmatprep.subr.mxu0 0.0
    %1907 = vmatpush2.msra.mxu0 0.0
    %1908 = vmatprep.subr.mxu0 0.0
    %1909 = vmatpush2.msra.mxu0 0.0
    %1910 = vmatprep.subr.mxu0 0.0
    %1911 = vmatpush2.msra.mxu0 0.0
    %1912 = vmatprep.subr.mxu0 0.0
    %1913 = vmatpush2.msra.mxu0 0.0
    %1914 = vmatprep.subr.mxu0 0.0
    %1915 = vmatpush2.msra.mxu0 0.0
    %1916 = vmatprep.subr.mxu0 0.0
    %1917 = vmatpush2.msra.mxu0 0.0
    %1918 = vmatprep.subr.mxu0 0.0
    %1919 = vmatpush2.msra.mxu0 0.0
    %1920 = vmatprep.subr.mxu0 0.0
    %1921 = vmatpush2.msra.mxu0 0.0
    %1922 = vmatprep.subr.mxu0 0.0
    %1923 = vmatpush2.msra.mxu0 0.0
    %1924 = vmatprep.subr.mxu0 0.0
    %1925 = vmatpush2.msra.mxu0 0.0
    %1926 = vmatprep.mubr.f32.mxu0 0.0
    %1927 = vmatmul.mubr.f32.gmra.mxu0 %v1860
    %v1928 = vpop.f32.mrf.mxu0
    %v1929 = vadd.f32 0.0, %v1928
    %v1930 = vpop.f32.mrf.mxu0
    %1931 = vdwg.mxu0
    %v1933 = vsel %vm1089, %v1775, 0
    %1935 = vmatprep.subr.mxu0 0.0
    %1936 = vmatpush1.msra.mxu0 0.0
    %1937 = vmatprep.subr.mxu0 0.0
    %1938 = vmatpush1.msra.mxu0 0.0
    %1939 = vmatprep.subr.mxu0 0.0
    %1940 = vmatpush1.msra.mxu0 0.0
    %1941 = vmatprep.subr.mxu0 0.0
    %1942 = vmatpush1.msra.mxu0 0.0
    %1943 = vmatprep.subr.mxu0 0.0
    %1944 = vmatpush1.msra.mxu0 0.0
    %1945 = vmatprep.subr.mxu0 0.0
    %1946 = vmatpush1.msra.mxu0 0.0
    %1947 = vmatprep.subr.mxu0 0.0
    %1948 = vmatpush1.msra.mxu0 0.0
    %1949 = vmatprep.subr.mxu0 0.0
    %1950 = vmatpush1.msra.mxu0 0.0
    %1951 = vmatprep.subr.mxu0 0.0
    %1952 = vmatpush1.msra.mxu0 0.0
    %1953 = vmatprep.subr.mxu0 0.0
    %1954 = vmatpush1.msra.mxu0 0.0
    %1955 = vmatprep.subr.mxu0 0.0
    %1956 = vmatpush1.msra.mxu0 0.0
    %1957 = vmatprep.subr.mxu0 0.0
    %1958 = vmatpush1.msra.mxu0 0.0
    %1959 = vmatprep.subr.mxu0 0.0
    %1960 = vmatpush1.msra.mxu0 0.0
    %1961 = vmatprep.subr.mxu0 0.0
    %1962 = vmatpush1.msra.mxu0 0.0
    %1963 = vmatprep.subr.mxu0 0.0
    %1964 = vmatpush1.msra.mxu0 0.0
    %1965 = vmatprep.subr.mxu0 0.0
    %1966 = vmatpush1.msra.mxu0 %v971
    %1967 = vmatprep.subr.mxu0 0.0
    %1968 = vmatpush2.msra.mxu0 0.0
    %1969 = vmatprep.subr.mxu0 0.0
    %1970 = vmatpush2.msra.mxu0 0.0
    %1971 = vmatprep.subr.mxu0 0.0
    %1972 = vmatpush2.msra.mxu0 0.0
    %1973 = vmatprep.subr.mxu0 0.0
    %1974 = vmatpush2.msra.mxu0 0.0
    %1975 = vmatprep.subr.mxu0 0.0
    %1976 = vmatpush2.msra.mxu0 0.0
    %1977 = vmatprep.subr.mxu0 0.0
    %1978 = vmatpush2.msra.mxu0 0.0
    %1979 = vmatprep.subr.mxu0 0.0
    %1980 = vmatpush2.msra.mxu0 0.0
    %1981 = vmatprep.subr.mxu0 0.0
    %1982 = vmatpush2.msra.mxu0 0.0
    %1983 = vmatprep.subr.mxu0 0.0
    %1984 = vmatpush2.msra.mxu0 0.0
    %1985 = vmatprep.subr.mxu0 0.0
    %1986 = vmatpush2.msra.mxu0 0.0
    %1987 = vmatprep.subr.mxu0 0.0
    %1988 = vmatpush2.msra.mxu0 0.0
    %1989 = vmatprep.subr.mxu0 0.0
    %1990 = vmatpush2.msra.mxu0 0.0
    %1991 = vmatprep.subr.mxu0 0.0
    %1992 = vmatpush2.msra.mxu0 0.0
    %1993 = vmatprep.subr.mxu0 0.0
    %1994 = vmatpush2.msra.mxu0 0.0
    %1995 = vmatprep.subr.mxu0 0.0
    %1996 = vmatpush2.msra.mxu0 0.0
    %1997 = vmatprep.subr.mxu0 0.0
    %1998 = vmatpush2.msra.mxu0 0.0
    %1999 = vmatprep.mubr.f32.mxu0 0.0
    %2000 = vmatmul.mubr.f32.gmra.mxu0 %v1933
    %v2001 = vpop.f32.mrf.mxu0
    %v2002 = vadd.f32 0.0, %v2001
    %v2003 = vpop.f32.mrf.mxu0
    %2004 = vdwg.mxu0
    %v2006 = vsel %vm1089, %v1777, 0
    %2008 = vmatprep.subr.mxu0 0.0
    %2009 = vmatpush1.msra.mxu0 0.0
    %2010 = vmatprep.subr.mxu0 0.0
    %2011 = vmatpush1.msra.mxu0 0.0
    %2012 = vmatprep.subr.mxu0 0.0
    %2013 = vmatpush1.msra.mxu0 0.0
    %2014 = vmatprep.subr.mxu0 0.0
    %2015 = vmatpush1.msra.mxu0 0.0
    %2016 = vmatprep.subr.mxu0 0.0
    %2017 = vmatpush1.msra.mxu0 0.0
    %2018 = vmatprep.subr.mxu0 0.0
    %2019 = vmatpush1.msra.mxu0 0.0
    %2020 = vmatprep.subr.mxu0 0.0
    %2021 = vmatpush1.msra.mxu0 0.0
    %2022 = vmatprep.subr.mxu0 0.0
    %2023 = vmatpush1.msra.mxu0 0.0
    %2024 = vmatprep.subr.mxu0 0.0
    %2025 = vmatpush1.msra.mxu0 0.0
    %2026 = vmatprep.subr.mxu0 0.0
    %2027 = vmatpush1.msra.mxu0 0.0
    %2028 = vmatprep.subr.mxu0 0.0
    %2029 = vmatpush1.msra.mxu0 0.0
    %2030 = vmatprep.subr.mxu0 0.0
    %2031 = vmatpush1.msra.mxu0 0.0
    %2032 = vmatprep.subr.mxu0 0.0
    %2033 = vmatpush1.msra.mxu0 0.0
    %2034 = vmatprep.subr.mxu0 0.0
    %2035 = vmatpush1.msra.mxu0 0.0
    %2036 = vmatprep.subr.mxu0 0.0
    %2037 = vmatpush1.msra.mxu0 0.0
    %2038 = vmatprep.subr.mxu0 0.0
    %2039 = vmatpush1.msra.mxu0 %v972
    %2040 = vmatprep.subr.mxu0 0.0
    %2041 = vmatpush2.msra.mxu0 0.0
    %2042 = vmatprep.subr.mxu0 0.0
    %2043 = vmatpush2.msra.mxu0 0.0
    %2044 = vmatprep.subr.mxu0 0.0
    %2045 = vmatpush2.msra.mxu0 0.0
    %2046 = vmatprep.subr.mxu0 0.0
    %2047 = vmatpush2.msra.mxu0 0.0
    %2048 = vmatprep.subr.mxu0 0.0
    %2049 = vmatpush2.msra.mxu0 0.0
    %2050 = vmatprep.subr.mxu0 0.0
    %2051 = vmatpush2.msra.mxu0 0.0
    %2052 = vmatprep.subr.mxu0 0.0
    %2053 = vmatpush2.msra.mxu0 0.0
    %2054 = vmatprep.subr.mxu0 0.0
    %2055 = vmatpush2.msra.mxu0 0.0
    %2056 = vmatprep.subr.mxu0 0.0
    %2057 = vmatpush2.msra.mxu0 0.0
    %2058 = vmatprep.subr.mxu0 0.0
    %2059 = vmatpush2.msra.mxu0 0.0
    %2060 = vmatprep.subr.mxu0 0.0
    %2061 = vmatpush2.msra.mxu0 0.0
    %2062 = vmatprep.subr.mxu0 0.0
    %2063 = vmatpush2.msra.mxu0 0.0
    %2064 = vmatprep.subr.mxu0 0.0
    %2065 = vmatpush2.msra.mxu0 0.0
    %2066 = vmatprep.subr.mxu0 0.0
    %2067 = vmatpush2.msra.mxu0 0.0
    %2068 = vmatprep.subr.mxu0 0.0
    %2069 = vmatpush2.msra.mxu0 0.0
    %2070 = vmatprep.subr.mxu0 0.0
    %2071 = vmatpush2.msra.mxu0 0.0
    %2072 = vmatprep.mubr.f32.mxu0 0.0
    %2073 = vmatmul.mubr.f32.gmra.mxu0 %v2006
    %v2074 = vpop.f32.mrf.mxu0
    %v2075 = vadd.f32 0.0, %v2074
    %v2076 = vpop.f32.mrf.mxu0
    %2077 = vdwg.mxu0
    %v2079 = vsel %vm1089, %v1779, 0
    %2081 = vmatprep.subr.mxu0 0.0
    %2082 = vmatpush1.msra.mxu0 0.0
    %2083 = vmatprep.subr.mxu0 0.0
    %2084 = vmatpush1.msra.mxu0 0.0
    %2085 = vmatprep.subr.mxu0 0.0
    %2086 = vmatpush1.msra.mxu0 0.0
    %2087 = vmatprep.subr.mxu0 0.0
    %2088 = vmatpush1.msra.mxu0 0.0
    %2089 = vmatprep.subr.mxu0 0.0
    %2090 = vmatpush1.msra.mxu0 0.0
    %2091 = vmatprep.subr.mxu0 0.0
    %2092 = vmatpush1.msra.mxu0 0.0
    %2093 = vmatprep.subr.mxu0 0.0
    %2094 = vmatpush1.msra.mxu0 0.0
    %2095 = vmatprep.subr.mxu0 0.0
    %2096 = vmatpush1.msra.mxu0 0.0
    %2097 = vmatprep.subr.mxu0 0.0
    %2098 = vmatpush1.msra.mxu0 0.0
    %2099 = vmatprep.subr.mxu0 0.0
    %2100 = vmatpush1.msra.mxu0 0.0
    %2101 = vmatprep.subr.mxu0 0.0
    %2102 = vmatpush1.msra.mxu0 0.0
    %2103 = vmatprep.subr.mxu0 0.0
    %2104 = vmatpush1.msra.mxu0 0.0
    %2105 = vmatprep.subr.mxu0 0.0
    %2106 = vmatpush1.msra.mxu0 0.0
    %2107 = vmatprep.subr.mxu0 0.0
    %2108 = vmatpush1.msra.mxu0 0.0
    %2109 = vmatprep.subr.mxu0 0.0
    %2110 = vmatpush1.msra.mxu0 0.0
    %2111 = vmatprep.subr.mxu0 0.0
    %2112 = vmatpush1.msra.mxu0 %v1037
    %2113 = vmatprep.subr.mxu0 0.0
    %2114 = vmatpush2.msra.mxu0 0.0
    %2115 = vmatprep.subr.mxu0 0.0
    %2116 = vmatpush2.msra.mxu0 0.0
    %2117 = vmatprep.subr.mxu0 0.0
    %2118 = vmatpush2.msra.mxu0 0.0
    %2119 = vmatprep.subr.mxu0 0.0
    %2120 = vmatpush2.msra.mxu0 0.0
    %2121 = vmatprep.subr.mxu0 0.0
    %2122 = vmatpush2.msra.mxu0 0.0
    %2123 = vmatprep.subr.mxu0 0.0
    %2124 = vmatpush2.msra.mxu0 0.0
    %2125 = vmatprep.subr.mxu0 0.0
    %2126 = vmatpush2.msra.mxu0 0.0
    %2127 = vmatprep.subr.mxu0 0.0
    %2128 = vmatpush2.msra.mxu0 0.0
    %2129 = vmatprep.subr.mxu0 0.0
    %2130 = vmatpush2.msra.mxu0 0.0
    %2131 = vmatprep.subr.mxu0 0.0
    %2132 = vmatpush2.msra.mxu0 0.0
    %2133 = vmatprep.subr.mxu0 0.0
    %2134 = vmatpush2.msra.mxu0 0.0
    %2135 = vmatprep.subr.mxu0 0.0
    %2136 = vmatpush2.msra.mxu0 0.0
    %2137 = vmatprep.subr.mxu0 0.0
    %2138 = vmatpush2.msra.mxu0 0.0
    %2139 = vmatprep.subr.mxu0 0.0
    %2140 = vmatpush2.msra.mxu0 0.0
    %2141 = vmatprep.subr.mxu0 0.0
    %2142 = vmatpush2.msra.mxu0 0.0
    %2143 = vmatprep.subr.mxu0 0.0
    %2144 = vmatpush2.msra.mxu0 0.0
    %2145 = vmatprep.mubr.f32.mxu0 0.0
    %2146 = vmatmul.mubr.f32.gmra.mxu0 %v2079
    %v2147 = vpop.f32.mrf.mxu0
    %v2148 = vadd.f32 0.0, %v2147
    %v2149 = vpop.f32.mrf.mxu0
    %2150 = vdwg.mxu0
    %v2152 = vsel %vm1089, %v1781, 0
    %2154 = vmatprep.subr.mxu0 0.0
    %2155 = vmatpush1.msra.mxu0 0.0
    %2156 = vmatprep.subr.mxu0 0.0
    %2157 = vmatpush1.msra.mxu0 0.0
    %2158 = vmatprep.subr.mxu0 0.0
    %2159 = vmatpush1.msra.mxu0 0.0
    %2160 = vmatprep.subr.mxu0 0.0
    %2161 = vmatpush1.msra.mxu0 0.0
    %2162 = vmatprep.subr.mxu0 0.0
    %2163 = vmatpush1.msra.mxu0 0.0
    %2164 = vmatprep.subr.mxu0 0.0
    %2165 = vmatpush1.msra.mxu0 0.0
    %2166 = vmatprep.subr.mxu0 0.0
    %2167 = vmatpush1.msra.mxu0 0.0
    %2168 = vmatprep.subr.mxu0 0.0
    %2169 = vmatpush1.msra.mxu0 0.0
    %2170 = vmatprep.subr.mxu0 0.0
    %2171 = vmatpush1.msra.mxu0 0.0
    %2172 = vmatprep.subr.mxu0 0.0
    %2173 = vmatpush1.msra.mxu0 0.0
    %2174 = vmatprep.subr.mxu0 0.0
    %2175 = vmatpush1.msra.mxu0 0.0
    %2176 = vmatprep.subr.mxu0 0.0
    %2177 = vmatpush1.msra.mxu0 0.0
    %2178 = vmatprep.subr.mxu0 0.0
    %2179 = vmatpush1.msra.mxu0 0.0
    %2180 = vmatprep.subr.mxu0 0.0
    %2181 = vmatpush1.msra.mxu0 0.0
    %2182 = vmatprep.subr.mxu0 0.0
    %2183 = vmatpush1.msra.mxu0 0.0
    %2184 = vmatprep.subr.mxu0 0.0
    %2185 = vmatpush1.msra.mxu0 %v1038
    %2186 = vmatprep.subr.mxu0 0.0
    %2187 = vmatpush2.msra.mxu0 0.0
    %2188 = vmatprep.subr.mxu0 0.0
    %2189 = vmatpush2.msra.mxu0 0.0
    %2190 = vmatprep.subr.mxu0 0.0
    %2191 = vmatpush2.msra.mxu0 0.0
    %2192 = vmatprep.subr.mxu0 0.0
    %2193 = vmatpush2.msra.mxu0 0.0
    %2194 = vmatprep.subr.mxu0 0.0
    %2195 = vmatpush2.msra.mxu0 0.0
    %2196 = vmatprep.subr.mxu0 0.0
    %2197 = vmatpush2.msra.mxu0 0.0
    %2198 = vmatprep.subr.mxu0 0.0
    %2199 = vmatpush2.msra.mxu0 0.0
    %2200 = vmatprep.subr.mxu0 0.0
    %2201 = vmatpush2.msra.mxu0 0.0
    %2202 = vmatprep.subr.mxu0 0.0
    %2203 = vmatpush2.msra.mxu0 0.0
    %2204 = vmatprep.subr.mxu0 0.0
    %2205 = vmatpush2.msra.mxu0 0.0
    %2206 = vmatprep.subr.mxu0 0.0
    %2207 = vmatpush2.msra.mxu0 0.0
    %2208 = vmatprep.subr.mxu0 0.0
    %2209 = vmatpush2.msra.mxu0 0.0
    %2210 = vmatprep.subr.mxu0 0.0
    %2211 = vmatpush2.msra.mxu0 0.0
    %2212 = vmatprep.subr.mxu0 0.0
    %2213 = vmatpush2.msra.mxu0 0.0
    %2214 = vmatprep.subr.mxu0 0.0
    %2215 = vmatpush2.msra.mxu0 0.0
    %2216 = vmatprep.subr.mxu0 0.0
    %2217 = vmatpush2.msra.mxu0 0.0
    %2218 = vmatprep.mubr.f32.mxu0 0.0
    %2219 = vmatmul.mubr.f32.gmra.mxu0 %v2152
    %v2220 = vpop.f32.mrf.mxu0
    %v2221 = vadd.f32 0.0, %v2220
    %v2222 = vpop.f32.mrf.mxu0
    %2223 = vdwg.mxu0
    %v2225 = vsel %vm1089, %v1783, 0
    %2227 = vmatprep.subr.mxu0 0.0
    %2228 = vmatpush1.msra.mxu0 0.0
    %2229 = vmatprep.subr.mxu0 0.0
    %2230 = vmatpush1.msra.mxu0 0.0
    %2231 = vmatprep.subr.mxu0 0.0
    %2232 = vmatpush1.msra.mxu0 0.0
    %2233 = vmatprep.subr.mxu0 0.0
    %2234 = vmatpush1.msra.mxu0 0.0
    %2235 = vmatprep.subr.mxu0 0.0
    %2236 = vmatpush1.msra.mxu0 0.0
    %2237 = vmatprep.subr.mxu0 0.0
    %2238 = vmatpush1.msra.mxu0 0.0
    %2239 = vmatprep.subr.mxu0 0.0
    %2240 = vmatpush1.msra.mxu0 0.0
    %2241 = vmatprep.subr.mxu0 0.0
    %2242 = vmatpush1.msra.mxu0 0.0
    %2243 = vmatprep.subr.mxu0 0.0
    %2244 = vmatpush1.msra.mxu0 0.0
    %2245 = vmatprep.subr.mxu0 0.0
    %2246 = vmatpush1.msra.mxu0 0.0
    %2247 = vmatprep.subr.mxu0 0.0
    %2248 = vmatpush1.msra.mxu0 0.0
    %2249 = vmatprep.subr.mxu0 0.0
    %2250 = vmatpush1.msra.mxu0 0.0
    %2251 = vmatprep.subr.mxu0 0.0
    %2252 = vmatpush1.msra.mxu0 0.0
    %2253 = vmatprep.subr.mxu0 0.0
    %2254 = vmatpush1.msra.mxu0 0.0
    %2255 = vmatprep.subr.mxu0 0.0
    %2256 = vmatpush1.msra.mxu0 0.0
    %2257 = vmatprep.subr.mxu0 0.0
    %2258 = vmatpush1.msra.mxu0 %v1039
    %2259 = vmatprep.subr.mxu0 0.0
    %2260 = vmatpush2.msra.mxu0 0.0
    %2261 = vmatprep.subr.mxu0 0.0
    %2262 = vmatpush2.msra.mxu0 0.0
    %2263 = vmatprep.subr.mxu0 0.0
    %2264 = vmatpush2.msra.mxu0 0.0
    %2265 = vmatprep.subr.mxu0 0.0
    %2266 = vmatpush2.msra.mxu0 0.0
    %2267 = vmatprep.subr.mxu0 0.0
    %2268 = vmatpush2.msra.mxu0 0.0
    %2269 = vmatprep.subr.mxu0 0.0
    %2270 = vmatpush2.msra.mxu0 0.0
    %2271 = vmatprep.subr.mxu0 0.0
    %2272 = vmatpush2.msra.mxu0 0.0
    %2273 = vmatprep.subr.mxu0 0.0
    %2274 = vmatpush2.msra.mxu0 0.0
    %2275 = vmatprep.subr.mxu0 0.0
    %2276 = vmatpush2.msra.mxu0 0.0
    %2277 = vmatprep.subr.mxu0 0.0
    %2278 = vmatpush2.msra.mxu0 0.0
    %2279 = vmatprep.subr.mxu0 0.0
    %2280 = vmatpush2.msra.mxu0 0.0
    %2281 = vmatprep.subr.mxu0 0.0
    %2282 = vmatpush2.msra.mxu0 0.0
    %2283 = vmatprep.subr.mxu0 0.0
    %2284 = vmatpush2.msra.mxu0 0.0
    %2285 = vmatprep.subr.mxu0 0.0
    %2286 = vmatpush2.msra.mxu0 0.0
    %2287 = vmatprep.subr.mxu0 0.0
    %2288 = vmatpush2.msra.mxu0 0.0
    %2289 = vmatprep.subr.mxu0 0.0
    %2290 = vmatpush2.msra.mxu0 0.0
    %2291 = vmatprep.mubr.f32.mxu0 0.0
    %2292 = vmatmul.mubr.f32.gmra.mxu0 %v2225
    %v2293 = vpop.f32.mrf.mxu0
    %v2294 = vadd.f32 0.0, %v2293
    %v2295 = vpop.f32.mrf.mxu0
    %2296 = vdwg.mxu0
    %v2298 = vsel %vm1089, %v1785, 0
    %2300 = vmatprep.subr.mxu0 0.0
    %2301 = vmatpush1.msra.mxu0 0.0
    %2302 = vmatprep.subr.mxu0 0.0
    %2303 = vmatpush1.msra.mxu0 0.0
    %2304 = vmatprep.subr.mxu0 0.0
    %2305 = vmatpush1.msra.mxu0 0.0
    %2306 = vmatprep.subr.mxu0 0.0
    %2307 = vmatpush1.msra.mxu0 0.0
    %2308 = vmatprep.subr.mxu0 0.0
    %2309 = vmatpush1.msra.mxu0 0.0
    %2310 = vmatprep.subr.mxu0 0.0
    %2311 = vmatpush1.msra.mxu0 0.0
    %2312 = vmatprep.subr.mxu0 0.0
    %2313 = vmatpush1.msra.mxu0 0.0
    %2314 = vmatprep.subr.mxu0 0.0
    %2315 = vmatpush1.msra.mxu0 0.0
    %2316 = vmatprep.subr.mxu0 0.0
    %2317 = vmatpush1.msra.mxu0 0.0
    %2318 = vmatprep.subr.mxu0 0.0
    %2319 = vmatpush1.msra.mxu0 0.0
    %2320 = vmatprep.subr.mxu0 0.0
    %2321 = vmatpush1.msra.mxu0 0.0
    %2322 = vmatprep.subr.mxu0 0.0
    %2323 = vmatpush1.msra.mxu0 0.0
    %2324 = vmatprep.subr.mxu0 0.0
    %2325 = vmatpush1.msra.mxu0 0.0
    %2326 = vmatprep.subr.mxu0 0.0
    %2327 = vmatpush1.msra.mxu0 0.0
    %2328 = vmatprep.subr.mxu0 0.0
    %2329 = vmatpush1.msra.mxu0 0.0
    %2330 = vmatprep.subr.mxu0 0.0
    %2331 = vmatpush1.msra.mxu0 %v1040
    %2332 = vmatprep.subr.mxu0 0.0
    %2333 = vmatpush2.msra.mxu0 0.0
    %2334 = vmatprep.subr.mxu0 0.0
    %2335 = vmatpush2.msra.mxu0 0.0
    %2336 = vmatprep.subr.mxu0 0.0
    %2337 = vmatpush2.msra.mxu0 0.0
    %2338 = vmatprep.subr.mxu0 0.0
    %2339 = vmatpush2.msra.mxu0 0.0
    %2340 = vmatprep.subr.mxu0 0.0
    %2341 = vmatpush2.msra.mxu0 0.0
    %2342 = vmatprep.subr.mxu0 0.0
    %2343 = vmatpush2.msra.mxu0 0.0
    %2344 = vmatprep.subr.mxu0 0.0
    %2345 = vmatpush2.msra.mxu0 0.0
    %2346 = vmatprep.subr.mxu0 0.0
    %2347 = vmatpush2.msra.mxu0 0.0
    %2348 = vmatprep.subr.mxu0 0.0
    %2349 = vmatpush2.msra.mxu0 0.0
    %2350 = vmatprep.subr.mxu0 0.0
    %2351 = vmatpush2.msra.mxu0 0.0
    %2352 = vmatprep.subr.mxu0 0.0
    %2353 = vmatpush2.msra.mxu0 0.0
    %2354 = vmatprep.subr.mxu0 0.0
    %2355 = vmatpush2.msra.mxu0 0.0
    %2356 = vmatprep.subr.mxu0 0.0
    %2357 = vmatpush2.msra.mxu0 0.0
    %2358 = vmatprep.subr.mxu0 0.0
    %2359 = vmatpush2.msra.mxu0 0.0
    %2360 = vmatprep.subr.mxu0 0.0
    %2361 = vmatpush2.msra.mxu0 0.0
    %2362 = vmatprep.subr.mxu0 0.0
    %2363 = vmatpush2.msra.mxu0 0.0
    %2364 = vmatprep.mubr.f32.mxu0 0.0
    %2365 = vmatmul.mubr.f32.gmra.mxu0 %v2298
    %v2366 = vpop.f32.mrf.mxu0
    %v2367 = vadd.f32 0.0, %v2366
    %v2368 = vpop.f32.mrf.mxu0
    %2369 = vdwg.mxu0
    %v2370 = vcombine.low %v1856, %v2002
    %v2371 = vcombine.high %v1856, %v2002
    %v2373 = vunpack.c.l.s4 1983009808
    %v2374 = vunpack.c.0.s8 %v2373
    %v2375 = vlaneseq
    %v2376 = vshrl.u32 %v2375, 7
    %v2377 = vsub.s32 %v2374, %v2376
    %v2378 = vrot.slane %v2370, %v2377
    %v2380 = vunpack.c.l.s4 1983009808
    %v2381 = vunpack.c.0.s8 %v2380
    %v2382 = vlaneseq
    %v2383 = vshrl.u32 %v2382, 7
    %v2384 = vsub.s32 %v2381, %v2383
    %v2385 = vrot.slane %v2371, %v2384
    %v2386 = vcombine.low %v1929, %v2075
    %v2387 = vcombine.high %v1929, %v2075
    %v2389 = vunpack.c.l.s4 1983009808
    %v2390 = vunpack.c.0.s8 %v2389
    %v2391 = vlaneseq
    %v2392 = vshrl.u32 %v2391, 7
    %v2393 = vsub.s32 %v2390, %v2392
    %v2394 = vrot.slane %v2386, %v2393
    %v2396 = vunpack.c.l.s4 1983009808
    %v2397 = vunpack.c.0.s8 %v2396
    %v2398 = vlaneseq
    %v2399 = vshrl.u32 %v2398, 7
    %v2400 = vsub.s32 %v2397, %v2399
    %v2401 = vrot.slane %v2387, %v2400
    %v2402 = vcombine.low %v2378, %v2394
    %v2403 = vcombine.high %v2378, %v2394
    %v2405 = vunpack.c.l.s4 1934713408
    %v2406 = vunpack.c.0.s8 %v2405
    %v2407 = vlaneseq
    %v2408 = vshrl.u32 %v2407, 7
    %v2409 = vsub.s32 %v2406, %v2408
    %v2410 = vrot.slane %v2402, %v2409
    %v2412 = vunpack.c.l.s4 1934713408
    %v2413 = vunpack.c.0.s8 %v2412
    %v2414 = vlaneseq
    %v2415 = vshrl.u32 %v2414, 7
    %v2416 = vsub.s32 %v2413, %v2415
    %v2417 = vrot.slane %v2403, %v2416
    %v2418 = vcombine.low %v2385, %v2401
    %v2419 = vcombine.high %v2385, %v2401
    %v2421 = vunpack.c.l.s4 1934713408
    %v2422 = vunpack.c.0.s8 %v2421
    %v2423 = vlaneseq
    %v2424 = vshrl.u32 %v2423, 7
    %v2425 = vsub.s32 %v2422, %v2424
    %v2426 = vrot.slane %v2418, %v2425
    %v2428 = vunpack.c.l.s4 1934713408
    %v2429 = vunpack.c.0.s8 %v2428
    %v2430 = vlaneseq
    %v2431 = vshrl.u32 %v2430, 7
    %v2432 = vsub.s32 %v2429, %v2431
    %v2433 = vrot.slane %v2419, %v2432
    %v2434 = vcombine.high %v2410, 0.0
    %v2435 = vcombine.high %v2417, 0.0
    %v2436 = vcombine.high %v2426, 0.0
    %v2437 = vcombine.high %v2433, 0.0
    %v2438 = vcombine.low %v2148, %v2294
    %v2439 = vcombine.high %v2148, %v2294
    %v2441 = vunpack.c.l.s4 1983009808
    %v2442 = vunpack.c.0.s8 %v2441
    %v2443 = vlaneseq
    %v2444 = vshrl.u32 %v2443, 7
    %v2445 = vsub.s32 %v2442, %v2444
    %v2446 = vrot.slane %v2438, %v2445
    %v2448 = vunpack.c.l.s4 1983009808
    %v2449 = vunpack.c.0.s8 %v2448
    %v2450 = vlaneseq
    %v2451 = vshrl.u32 %v2450, 7
    %v2452 = vsub.s32 %v2449, %v2451
    %v2453 = vrot.slane %v2439, %v2452
    %v2454 = vcombine.low %v2221, %v2367
    %v2455 = vcombine.high %v2221, %v2367
    %v2457 = vunpack.c.l.s4 1983009808
    %v2458 = vunpack.c.0.s8 %v2457
    %v2459 = vlaneseq
    %v2460 = vshrl.u32 %v2459, 7
    %v2461 = vsub.s32 %v2458, %v2460
    %v2462 = vrot.slane %v2454, %v2461
    %v2464 = vunpack.c.l.s4 1983009808
    %v2465 = vunpack.c.0.s8 %v2464
    %v2466 = vlaneseq
    %v2467 = vshrl.u32 %v2466, 7
    %v2468 = vsub.s32 %v2465, %v2467
    %v2469 = vrot.slane %v2455, %v2468
    %v2470 = vcombine.low %v2446, %v2462
    %v2471 = vcombine.high %v2446, %v2462
    %v2473 = vunpack.c.l.s4 1934713408
    %v2474 = vunpack.c.0.s8 %v2473
    %v2475 = vlaneseq
    %v2476 = vshrl.u32 %v2475, 7
    %v2477 = vsub.s32 %v2474, %v2476
    %v2478 = vrot.slane %v2470, %v2477
    %v2480 = vunpack.c.l.s4 1934713408
    %v2481 = vunpack.c.0.s8 %v2480
    %v2482 = vlaneseq
    %v2483 = vshrl.u32 %v2482, 7
    %v2484 = vsub.s32 %v2481, %v2483
    %v2485 = vrot.slane %v2471, %v2484
    %v2486 = vcombine.low %v2453, %v2469
    %v2487 = vcombine.high %v2453, %v2469
    %v2489 = vunpack.c.l.s4 1934713408
    %v2490 = vunpack.c.0.s8 %v2489
    %v2491 = vlaneseq
    %v2492 = vshrl.u32 %v2491, 7
    %v2493 = vsub.s32 %v2490, %v2492
    %v2494 = vrot.slane %v2486, %v2493
    %v2496 = vunpack.c.l.s4 1934713408
    %v2497 = vunpack.c.0.s8 %v2496
    %v2498 = vlaneseq
    %v2499 = vshrl.u32 %v2498, 7
    %v2500 = vsub.s32 %v2497, %v2499
    %v2501 = vrot.slane %v2487, %v2500
    %v2502 = vcombine.high %v2478, 0.0
    %v2503 = vcombine.high %v2485, 0.0
    %v2504 = vcombine.high %v2494, 0.0
    %v2505 = vcombine.high %v2501, 0.0
    %v2506 = vcombine.low %v2410, %v2417
    %v2508 = vunpack.c.l.s4 1983009808
    %v2509 = vunpack.c.0.s8 %v2508
    %v2510 = vlaneseq
    %v2511 = vshrl.u32 %v2510, 7
    %v2512 = vsub.s32 %v2509, %v2511
    %v2513 = vrot.slane %v2506, %v2512
    %v2514 = vcombine.low %v2434, %v2435
    %v2516 = vunpack.c.l.s4 1983009808
    %v2517 = vunpack.c.0.s8 %v2516
    %v2518 = vlaneseq
    %v2519 = vshrl.u32 %v2518, 7
    %v2520 = vsub.s32 %v2517, %v2519
    %v2521 = vrot.slane %v2514, %v2520
    %v2522 = vcombine.low %v2426, %v2433
    %v2524 = vunpack.c.l.s4 1983009808
    %v2525 = vunpack.c.0.s8 %v2524
    %v2526 = vlaneseq
    %v2527 = vshrl.u32 %v2526, 7
    %v2528 = vsub.s32 %v2525, %v2527
    %v2529 = vrot.slane %v2522, %v2528
    %v2530 = vcombine.low %v2436, %v2437
    %v2532 = vunpack.c.l.s4 1983009808
    %v2533 = vunpack.c.0.s8 %v2532
    %v2534 = vlaneseq
    %v2535 = vshrl.u32 %v2534, 7
    %v2536 = vsub.s32 %v2533, %v2535
    %v2537 = vrot.slane %v2530, %v2536
    %v2538 = vcombine.low %v2513, %v2521
    %v2539 = vcombine.high %v2513, %v2521
    %v2541 = vunpack.c.l.s4 1934713408
    %v2542 = vunpack.c.0.s8 %v2541
    %v2543 = vlaneseq
    %v2544 = vshrl.u32 %v2543, 7
    %v2545 = vsub.s32 %v2542, %v2544
    %v2546 = vrot.slane %v2538, %v2545
    %v2548 = vunpack.c.l.s4 1934713408
    %v2549 = vunpack.c.0.s8 %v2548
    %v2550 = vlaneseq
    %v2551 = vshrl.u32 %v2550, 7
    %v2552 = vsub.s32 %v2549, %v2551
    %v2553 = vrot.slane %v2539, %v2552
    %v2554 = vcombine.low %v2529, %v2537
    %v2555 = vcombine.high %v2529, %v2537
    %v2557 = vunpack.c.l.s4 1934713408
    %v2558 = vunpack.c.0.s8 %v2557
    %v2559 = vlaneseq
    %v2560 = vshrl.u32 %v2559, 7
    %v2561 = vsub.s32 %v2558, %v2560
    %v2562 = vrot.slane %v2554, %v2561
    %v2564 = vunpack.c.l.s4 1934713408
    %v2565 = vunpack.c.0.s8 %v2564
    %v2566 = vlaneseq
    %v2567 = vshrl.u32 %v2566, 7
    %v2568 = vsub.s32 %v2565, %v2567
    %v2569 = vrot.slane %v2555, %v2568
    %v2570 = vcombine.low %v2546, %v2562
    %v2571 = vcombine.high %v2546, %v2562
    %v2572 = vcombine.low %v2553, %v2569
    %v2573 = vcombine.high %v2553, %v2569
    %v2574 = vcombine.low %v2478, %v2485
    %v2576 = vunpack.c.l.s4 1983009808
    %v2577 = vunpack.c.0.s8 %v2576
    %v2578 = vlaneseq
    %v2579 = vshrl.u32 %v2578, 7
    %v2580 = vsub.s32 %v2577, %v2579
    %v2581 = vrot.slane %v2574, %v2580
    %v2582 = vcombine.low %v2502, %v2503
    %v2584 = vunpack.c.l.s4 1983009808
    %v2585 = vunpack.c.0.s8 %v2584
    %v2586 = vlaneseq
    %v2587 = vshrl.u32 %v2586, 7
    %v2588 = vsub.s32 %v2585, %v2587
    %v2589 = vrot.slane %v2582, %v2588
    %v2590 = vcombine.low %v2494, %v2501
    %v2592 = vunpack.c.l.s4 1983009808
    %v2593 = vunpack.c.0.s8 %v2592
    %v2594 = vlaneseq
    %v2595 = vshrl.u32 %v2594, 7
    %v2596 = vsub.s32 %v2593, %v2595
    %v2597 = vrot.slane %v2590, %v2596
    %v2598 = vcombine.low %v2504, %v2505
    %v2600 = vunpack.c.l.s4 1983009808
    %v2601 = vunpack.c.0.s8 %v2600
    %v2602 = vlaneseq
    %v2603 = vshrl.u32 %v2602, 7
    %v2604 = vsub.s32 %v2601, %v2603
    %v2605 = vrot.slane %v2598, %v2604
    %v2606 = vcombine.low %v2581, %v2589
    %v2607 = vcombine.high %v2581, %v2589
    %v2609 = vunpack.c.l.s4 1934713408
    %v2610 = vunpack.c.0.s8 %v2609
    %v2611 = vlaneseq
    %v2612 = vshrl.u32 %v2611, 7
    %v2613 = vsub.s32 %v2610, %v2612
    %v2614 = vrot.slane %v2606, %v2613
    %v2616 = vunpack.c.l.s4 1934713408
    %v2617 = vunpack.c.0.s8 %v2616
    %v2618 = vlaneseq
    %v2619 = vshrl.u32 %v2618, 7
    %v2620 = vsub.s32 %v2617, %v2619
    %v2621 = vrot.slane %v2607, %v2620
    %v2622 = vcombine.low %v2597, %v2605
    %v2623 = vcombine.high %v2597, %v2605
    %v2625 = vunpack.c.l.s4 1934713408
    %v2626 = vunpack.c.0.s8 %v2625
    %v2627 = vlaneseq
    %v2628 = vshrl.u32 %v2627, 7
    %v2629 = vsub.s32 %v2626, %v2628
    %v2630 = vrot.slane %v2622, %v2629
    %v2632 = vunpack.c.l.s4 1934713408
    %v2633 = vunpack.c.0.s8 %v2632
    %v2634 = vlaneseq
    %v2635 = vshrl.u32 %v2634, 7
    %v2636 = vsub.s32 %v2633, %v2635
    %v2637 = vrot.slane %v2623, %v2636
    %v2638 = vcombine.low %v2614, %v2630
    %v2639 = vcombine.high %v2614, %v2630
    %v2640 = vcombine.low %v2621, %v2637
    %v2641 = vcombine.high %v2621, %v2637
    %2644 = vrot.lane.b32.xlu0 %v2571, 8
    %v2645 = vpop.permute.xlu0 %2644
    %2646 = vrot.lane.b32.xlu0 %v2639, 8
    %v2647 = vpop.permute.xlu0 %2646
    %2652 = vrot.lane.b32.xlu0 %v2572, 16
    %v2653 = vpop.permute.xlu0 %2652
    %2654 = vrot.lane.b32.xlu0 %v2640, 16
    %v2655 = vpop.permute.xlu0 %2654
    %2660 = vrot.lane.b32.xlu0 %v2573, 24
    %v2661 = vpop.permute.xlu0 %2660
    %2662 = vrot.lane.b32.xlu0 %v2641, 24
    %v2663 = vpop.permute.xlu0 %2662
    %v2666 = vsel %vm1089, %v2570, %v2645
    %v2667 = vsel %vm1089, %v2638, %v2647
    %vm2668 = vcmask 130048
    %v2669 = vsel %vm2668, %v2666, %v2653
    %v2670 = vsel %vm2668, %v2667, %v2655
    %vm2671 = vcmask 195584
    %v2672 = vsel %vm2671, %v2669, %v2661
    %v2673 = vsel %vm2671, %v2670, %v2663
    %v2674 = vld [vmem:[%s4] sm:$0xff]
    %v2675 = vld [vmem:[%s4 + $0x8] sm:$0xff]
    %v2676 = vld [vmem:[%s4 + $0x10] sm:$0xff]
    %v2677 = vld [vmem:[%s4 + $0x18] sm:$0xff]
    %v2678 = vld [vmem:[%s5] sm:$0x1]
    %v2680 = vlaneseq
    %v2681 = vshrl.u32 %v2680, 7
    %v2682 = vsub.s32 0, %v2681
    %v2683 = vrot.slane %v2678, %v2682
    %v2686 = vsel %vm75, %v2672, 0
    %v2689 = vsel %vm75, %v2673, 0
    %2691 = vmatprep.subr.mxu0 0.0
    %2692 = vmatpush1.msra.mxu0 0.0
    %2693 = vmatprep.subr.mxu0 0.0
    %2694 = vmatpush1.msra.mxu0 0.0
    %2695 = vmatprep.subr.mxu0 0.0
    %2696 = vmatpush1.msra.mxu0 0.0
    %2697 = vmatprep.subr.mxu0 0.0
    %2698 = vmatpush1.msra.mxu0 0.0
    %2699 = vmatprep.subr.mxu0 0.0
    %2700 = vmatpush1.msra.mxu0 0.0
    %2701 = vmatprep.subr.mxu0 0.0
    %2702 = vmatpush1.msra.mxu0 0.0
    %2703 = vmatprep.subr.mxu0 0.0
    %2704 = vmatpush1.msra.mxu0 0.0
    %2705 = vmatprep.subr.mxu0 0.0
    %2706 = vmatpush1.msra.mxu0 0.0
    %2707 = vmatprep.subr.mxu0 0.0
    %2708 = vmatpush1.msra.mxu0 0.0
    %2709 = vmatprep.subr.mxu0 0.0
    %2710 = vmatpush1.msra.mxu0 0.0
    %2711 = vmatprep.subr.mxu0 0.0
    %2712 = vmatpush1.msra.mxu0 0.0
    %2713 = vmatprep.subr.mxu0 0.0
    %2714 = vmatpush1.msra.mxu0 0.0
    %2715 = vmatprep.subr.mxu0 0.0
    %2716 = vmatpush1.msra.mxu0 %v2677
    %2717 = vmatprep.subr.mxu0 0.0
    %2718 = vmatpush1.msra.mxu0 %v2676
    %2719 = vmatprep.subr.mxu0 0.0
    %2720 = vmatpush1.msra.mxu0 %v2675
    %2721 = vmatprep.subr.mxu0 0.0
    %2722 = vmatpush1.msra.mxu0 %v2674
    %2723 = vmatprep.subr.mxu0 0.0
    %2724 = vmatpush2.msra.mxu0 0.0
    %2725 = vmatprep.subr.mxu0 0.0
    %2726 = vmatpush2.msra.mxu0 0.0
    %2727 = vmatprep.subr.mxu0 0.0
    %2728 = vmatpush2.msra.mxu0 0.0
    %2729 = vmatprep.subr.mxu0 0.0
    %2730 = vmatpush2.msra.mxu0 0.0
    %2731 = vmatprep.subr.mxu0 0.0
    %2732 = vmatpush2.msra.mxu0 0.0
    %2733 = vmatprep.subr.mxu0 0.0
    %2734 = vmatpush2.msra.mxu0 0.0
    %2735 = vmatprep.subr.mxu0 0.0
    %2736 = vmatpush2.msra.mxu0 0.0
    %2737 = vmatprep.subr.mxu0 0.0
    %2738 = vmatpush2.msra.mxu0 0.0
    %2739 = vmatprep.subr.mxu0 0.0
    %2740 = vmatpush2.msra.mxu0 0.0
    %2741 = vmatprep.subr.mxu0 0.0
    %2742 = vmatpush2.msra.mxu0 0.0
    %2743 = vmatprep.subr.mxu0 0.0
    %2744 = vmatpush2.msra.mxu0 0.0
    %2745 = vmatprep.subr.mxu0 0.0
    %2746 = vmatpush2.msra.mxu0 0.0
    %2747 = vmatprep.subr.mxu0 0.0
    %2748 = vmatpush2.msra.mxu0 0.0
    %2749 = vmatprep.subr.mxu0 0.0
    %2750 = vmatpush2.msra.mxu0 0.0
    %2751 = vmatprep.subr.mxu0 0.0
    %2752 = vmatpush2.msra.mxu0 0.0
    %2753 = vmatprep.subr.mxu0 0.0
    %2754 = vmatpush2.msra.mxu0 0.0
    %2755 = vmatprep.mubr.f32.mxu0 0.0
    %2756 = vmatmul.mubr.f32.gmra.mxu0 %v2686
    %v2757 = vpop.f32.mrf.mxu0
    %v2758 = vadd.f32 %v2683, %v2757
    %v2759 = vpop.f32.mrf.mxu0
    %2760 = vmatprep.mubr.f32.mxu0 0.0
    %2761 = vmatmul.mubr.f32.gmra.mxu0 %v2689
    %v2762 = vpop.f32.mrf.mxu0
    %v2763 = vadd.f32 %v2683, %v2762
    %v2764 = vpop.f32.mrf.mxu0
    %2765 = vdwg.mxu0
    %v2766 = vld [vmem:[%s6] sm:$0x1]
    %v2767 = vld [vmem:[%s7] sm:$0x1]
    %v2768 = vadd.f32 %v2758, %v54
    %v2769 = vadd.f32 %v2763, %v55
    %v2770 = vsel %vm75, %v2768, 0.0
    %2771 = vadd.xlane.f32.xlu0 %v2770
    %v2772 = vpop.xlane.xlu0 %2771
    %v2773 = vsel %vm75, %v2769, 0.0
    %2774 = vadd.xlane.f32.xlu0 %v2773
    %v2775 = vpop.xlane.xlu0 %2774
    %v2776 = vrcp.pop 32.0
    %v2777 = vmul.f32 %v2772, %v2776
    %v2778 = vmul.f32 %v2775, %v2776
    %v2779 = vsub.f32 %v2768, %v2777
    %v2780 = vsub.f32 %v2769, %v2778
    %v2781 = vmul.f32 %v2779, %v2779
    %v2782 = vmul.f32 %v2780, %v2780
    %v2783 = vsel %vm75, %v2781, 0.0
    %2784 = vadd.xlane.f32.xlu0 %v2783
    %v2785 = vpop.xlane.xlu0 %2784
    %v2786 = vsel %vm75, %v2782, 0.0
    %2787 = vadd.xlane.f32.xlu0 %v2786
    %v2788 = vpop.xlane.xlu0 %2787
    %v2789 = vmul.f32 %v2785, %v2776
    %v2790 = vmul.f32 %v2788, %v2776
    %v2791 = vadd.f32 %v2789, 1e-05
    %v2792 = vadd.f32 %v2790, 1e-05
    %v2793 = vrsqrt.pop %v2791
    %v2794 = vrsqrt.pop %v2792
    %v2795 = vmul.f32 %v2779, %v2793
    %v2796 = vmul.f32 %v2780, %v2794
    %v2798 = vlaneseq
    %v2799 = vshrl.u32 %v2798, 7
    %v2800 = vsub.s32 0, %v2799
    %v2801 = vrot.slane %v2766, %v2800
    %v2803 = vmul.f32 %v2795, %v2801
    %v2804 = vmul.f32 %v2796, %v2801
    %v2806 = vlaneseq
    %v2807 = vshrl.u32 %v2806, 7
    %v2808 = vsub.s32 0, %v2807
    %v2809 = vrot.slane %v2767, %v2808
    %v2811 = vadd.f32 %v2803, %v2809
    %v2812 = vadd.f32 %v2804, %v2809
    %v2813 = vld [vmem:[%s8] sm:$0xff]
    %v2814 = vld [vmem:[%s8 + $0x8] sm:$0xff]
    %v2815 = vld [vmem:[%s8 + $0x10] sm:$0xff]
    %v2816 = vld [vmem:[%s8 + $0x18] sm:$0xff]
    %v2817 = vld [vmem:[%s9] sm:$0x1]
    %v2819 = vlaneseq
    %v2820 = vshrl.u32 %v2819, 7
    %v2821 = vsub.s32 0, %v2820
    %v2822 = vrot.slane %v2817, %v2821
    %v2825 = vsel %vm75, %v2811, 0
    %v2828 = vsel %vm75, %v2812, 0
    %2830 = vmatprep.subr.mxu0 0.0
    %2831 = vmatpush1.msra.mxu0 0.0
    %2832 = vmatprep.subr.mxu0 0.0
    %2833 = vmatpush1.msra.mxu0 0.0
    %2834 = vmatprep.subr.mxu0 0.0
    %2835 = vmatpush1.msra.mxu0 0.0
    %2836 = vmatprep.subr.mxu0 0.0
    %2837 = vmatpush1.msra.mxu0 0.0
    %2838 = vmatprep.subr.mxu0 0.0
    %2839 = vmatpush1.msra.mxu0 0.0
    %2840 = vmatprep.subr.mxu0 0.0
    %2841 = vmatpush1.msra.mxu0 0.0
    %2842 = vmatprep.subr.mxu0 0.0
    %2843 = vmatpush1.msra.mxu0 0.0
    %2844 = vmatprep.subr.mxu0 0.0
    %2845 = vmatpush1.msra.mxu0 0.0
    %2846 = vmatprep.subr.mxu0 0.0
    %2847 = vmatpush1.msra.mxu0 0.0
    %2848 = vmatprep.subr.mxu0 0.0
    %2849 = vmatpush1.msra.mxu0 0.0
    %2850 = vmatprep.subr.mxu0 0.0
    %2851 = vmatpush1.msra.mxu0 0.0
    %2852 = vmatprep.subr.mxu0 0.0
    %2853 = vmatpush1.msra.mxu0 0.0
    %2854 = vmatprep.subr.mxu0 0.0
    %2855 = vmatpush1.msra.mxu0 %v2816
    %2856 = vmatprep.subr.mxu0 0.0
    %2857 = vmatpush1.msra.mxu0 %v2815
    %2858 = vmatprep.subr.mxu0 0.0
    %2859 = vmatpush1.msra.mxu0 %v2814
    %2860 = vmatprep.subr.mxu0 0.0
    %2861 = vmatpush1.msra.mxu0 %v2813
    %2862 = vmatprep.subr.mxu0 0.0
    %2863 = vmatpush2.msra.mxu0 0.0
    %2864 = vmatprep.subr.mxu0 0.0
    %2865 = vmatpush2.msra.mxu0 0.0
    %2866 = vmatprep.subr.mxu0 0.0
    %2867 = vmatpush2.msra.mxu0 0.0
    %2868 = vmatprep.subr.mxu0 0.0
    %2869 = vmatpush2.msra.mxu0 0.0
    %2870 = vmatprep.subr.mxu0 0.0
    %2871 = vmatpush2.msra.mxu0 0.0
    %2872 = vmatprep.subr.mxu0 0.0
    %2873 = vmatpush2.msra.mxu0 0.0
    %2874 = vmatprep.subr.mxu0 0.0
    %2875 = vmatpush2.msra.mxu0 0.0
    %2876 = vmatprep.subr.mxu0 0.0
    %2877 = vmatpush2.msra.mxu0 0.0
    %2878 = vmatprep.subr.mxu0 0.0
    %2879 = vmatpush2.msra.mxu0 0.0
    %2880 = vmatprep.subr.mxu0 0.0
    %2881 = vmatpush2.msra.mxu0 0.0
    %2882 = vmatprep.subr.mxu0 0.0
    %2883 = vmatpush2.msra.mxu0 0.0
    %2884 = vmatprep.subr.mxu0 0.0
    %2885 = vmatpush2.msra.mxu0 0.0
    %2886 = vmatprep.subr.mxu0 0.0
    %2887 = vmatpush2.msra.mxu0 0.0
    %2888 = vmatprep.subr.mxu0 0.0
    %2889 = vmatpush2.msra.mxu0 0.0
    %2890 = vmatprep.subr.mxu0 0.0
    %2891 = vmatpush2.msra.mxu0 0.0
    %2892 = vmatprep.subr.mxu0 0.0
    %2893 = vmatpush2.msra.mxu0 0.0
    %2894 = vmatprep.mubr.f32.mxu0 0.0
    %2895 = vmatmul.mubr.f32.gmra.mxu0 %v2825
    %v2896 = vpop.f32.mrf.mxu0
    %v2897 = vadd.f32 %v2822, %v2896
    %v2898 = vpop.f32.mrf.mxu0
    %2899 = vmatprep.mubr.f32.mxu0 0.0
    %2900 = vmatmul.mubr.f32.gmra.mxu0 %v2828
    %v2901 = vpop.f32.mrf.mxu0
    %v2902 = vadd.f32 %v2822, %v2901
    %v2903 = vpop.f32.mrf.mxu0
    %2904 = vdwg.mxu0
    %v2905 = vmul.f32 %v2897, 0.5
    %v2906 = vmul.f32 %v2902, 0.5
    %v2907 = vmul.f32 %v2897, 0.70710677
    %v2908 = vmul.f32 %v2902, 0.70710677
    %v2909 = verf.f32.pop %v2907
    %v2910 = verf.f32.pop %v2908
    %v2911 = vadd.f32 %v2909, 1.0
    %v2912 = vadd.f32 %v2910, 1.0
    %v2913 = vmul.f32 %v2905, %v2911
    %v2914 = vmul.f32 %v2906, %v2912
    %v2915 = vld [vmem:[%s10] sm:$0xff]
    %v2916 = vld [vmem:[%s10 + $0x8] sm:$0xff]
    %v2917 = vld [vmem:[%s10 + $0x10] sm:$0xff]
    %v2918 = vld [vmem:[%s10 + $0x18] sm:$0xff]
    %v2919 = vld [vmem:[%s10 + $0x20] sm:$0xff]
    %v2920 = vld [vmem:[%s10 + $0x28] sm:$0xff]
    %v2921 = vld [vmem:[%s10 + $0x30] sm:$0xff]
    %v2922 = vld [vmem:[%s10 + $0x38] sm:$0xff]
    %v2923 = vld [vmem:[%s10 + $0x40] sm:$0xff]
    %v2924 = vld [vmem:[%s10 + $0x48] sm:$0xff]
    %v2925 = vld [vmem:[%s10 + $0x50] sm:$0xff]
    %v2926 = vld [vmem:[%s10 + $0x58] sm:$0xff]
    %v2927 = vld [vmem:[%s10 + $0x60] sm:$0xff]
    %v2928 = vld [vmem:[%s10 + $0x68] sm:$0xff]
    %v2929 = vld [vmem:[%s10 + $0x70] sm:$0xff]
    %v2930 = vld [vmem:[%s10 + $0x78] sm:$0xff]
    %v2931 = vld [vmem:[%s11] sm:$0x1]
    %v2933 = vlaneseq
    %v2934 = vshrl.u32 %v2933, 7
    %v2935 = vsub.s32 0, %v2934
    %v2936 = vrot.slane %v2931, %v2935
    %2938 = vmatprep.subr.mxu0 0.0
    %2939 = vmatpush1.msra.mxu0 %v2930
    %2940 = vmatprep.subr.mxu0 0.0
    %2941 = vmatpush1.msra.mxu0 %v2929
    %2942 = vmatprep.subr.mxu0 0.0
    %2943 = vmatpush1.msra.mxu0 %v2928
    %2944 = vmatprep.subr.mxu0 0.0
    %2945 = vmatpush1.msra.mxu0 %v2927
    %2946 = vmatprep.subr.mxu0 0.0
    %2947 = vmatpush1.msra.mxu0 %v2926
    %2948 = vmatprep.subr.mxu0 0.0
    %2949 = vmatpush1.msra.mxu0 %v2925
    %2950 = vmatprep.subr.mxu0 0.0
    %2951 = vmatpush1.msra.mxu0 %v2924
    %2952 = vmatprep.subr.mxu0 0.0
    %2953 = vmatpush1.msra.mxu0 %v2923
    %2954 = vmatprep.subr.mxu0 0.0
    %2955 = vmatpush1.msra.mxu0 %v2922
    %2956 = vmatprep.subr.mxu0 0.0
    %2957 = vmatpush1.msra.mxu0 %v2921
    %2958 = vmatprep.subr.mxu0 0.0
    %2959 = vmatpush1.msra.mxu0 %v2920
    %2960 = vmatprep.subr.mxu0 0.0
    %2961 = vmatpush1.msra.mxu0 %v2919
    %2962 = vmatprep.subr.mxu0 0.0
    %2963 = vmatpush1.msra.mxu0 %v2918
    %2964 = vmatprep.subr.mxu0 0.0
    %2965 = vmatpush1.msra.mxu0 %v2917
    %2966 = vmatprep.subr.mxu0 0.0
    %2967 = vmatpush1.msra.mxu0 %v2916
    %2968 = vmatprep.subr.mxu0 0.0
    %2969 = vmatpush1.msra.mxu0 %v2915
    %2970 = vmatprep.subr.mxu0 0.0
    %2971 = vmatpush2.msra.mxu0 0.0
    %2972 = vmatprep.subr.mxu0 0.0
    %2973 = vmatpush2.msra.mxu0 0.0
    %2974 = vmatprep.subr.mxu0 0.0
    %2975 = vmatpush2.msra.mxu0 0.0
    %2976 = vmatprep.subr.mxu0 0.0
    %2977 = vmatpush2.msra.mxu0 0.0
    %2978 = vmatprep.subr.mxu0 0.0
    %2979 = vmatpush2.msra.mxu0 0.0
    %2980 = vmatprep.subr.mxu0 0.0
    %2981 = vmatpush2.msra.mxu0 0.0
    %2982 = vmatprep.subr.mxu0 0.0
    %2983 = vmatpush2.msra.mxu0 0.0
    %2984 = vmatprep.subr.mxu0 0.0
    %2985 = vmatpush2.msra.mxu0 0.0
    %2986 = vmatprep.subr.mxu0 0.0
    %2987 = vmatpush2.msra.mxu0 0.0
    %2988 = vmatprep.subr.mxu0 0.0
    %2989 = vmatpush2.msra.mxu0 0.0
    %2990 = vmatprep.subr.mxu0 0.0
    %2991 = vmatpush2.msra.mxu0 0.0
    %2992 = vmatprep.subr.mxu0 0.0
    %2993 = vmatpush2.msra.mxu0 0.0
    %2994 = vmatprep.subr.mxu0 0.0
    %2995 = vmatpush2.msra.mxu0 0.0
    %2996 = vmatprep.subr.mxu0 0.0
    %2997 = vmatpush2.msra.mxu0 0.0
    %2998 = vmatprep.subr.mxu0 0.0
    %2999 = vmatpush2.msra.mxu0 0.0
    %3000 = vmatprep.subr.mxu0 0.0
    %3001 = vmatpush2.msra.mxu0 0.0
    %3002 = vmatprep.mubr.f32.mxu0 0.0
    %3003 = vmatmul.mubr.f32.gmra.mxu0 %v2913
    %v3004 = vpop.f32.mrf.mxu0
    %v3005 = vadd.f32 %v2936, %v3004
    %v3006 = vpop.f32.mrf.mxu0
    %3007 = vmatprep.mubr.f32.mxu0 0.0
    %3008 = vmatmul.mubr.f32.gmra.mxu0 %v2914
    %v3009 = vpop.f32.mrf.mxu0
    %v3010 = vadd.f32 %v2936, %v3009
    %v3011 = vpop.f32.mrf.mxu0
    %3012 = vdwg.mxu0
    %v3013 = vadd.f32 %v3005, %v54
    %v3014 = vadd.f32 %v3010, %v55
    %v3015 = vsel %vm75, %v3013, 0.0
    %3016 = vadd.xlane.f32.xlu0 %v3015
    %v3017 = vpop.xlane.xlu0 %3016
    %v3018 = vsel %vm75, %v3014, 0.0
    %3019 = vadd.xlane.f32.xlu0 %v3018
    %v3020 = vpop.xlane.xlu0 %3019
    %v3021 = vmul.f32 %v3017, %v2776
    %v3022 = vmul.f32 %v3020, %v2776
    %v3023 = vsub.f32 %v3013, %v3021
    %v3024 = vsub.f32 %v3014, %v3022
    %v3025 = vmul.f32 %v3023, %v3023
    %v3026 = vmul.f32 %v3024, %v3024
    %v3027 = vsel %vm75, %v3025, 0.0
    %3028 = vadd.xlane.f32.xlu0 %v3027
    %v3029 = vpop.xlane.xlu0 %3028
    %v3030 = vsel %vm75, %v3026, 0.0
    %3031 = vadd.xlane.f32.xlu0 %v3030
    %v3032 = vpop.xlane.xlu0 %3031
    %v3033 = vmul.f32 %v3029, %v2776
    %v3034 = vmul.f32 %v3032, %v2776
    %v3035 = vadd.f32 %v3033, 1e-05
    %v3036 = vadd.f32 %v3034, 1e-05
    %v3037 = vrsqrt.pop %v3035
    %v3038 = vrsqrt.pop %v3036
    %v3039 = vmul.f32 %v3023, %v3037
    %v3040 = vmul.f32 %v3024, %v3038
    %v3041 = vmul.f32 %v3039, %v2801
    %v3042 = vmul.f32 %v3040, %v2801
    %v3043 = vadd.f32 %v3041, %v2809
    %v3044 = vadd.f32 %v3042, %v2809
    %s3045 = scalar_lea.vmem %s2, 32
    %v3046 = vld [vmem:[%s3045] sm:$0xff]
    %v3047 = vld [vmem:[%s3045 + $0x8] sm:$0xff]
    %v3048 = vld [vmem:[%s3045 + $0x10] sm:$0xff]
    %v3049 = vld [vmem:[%s3045 + $0x18] sm:$0xff]
    %s3050 = scalar_lea.vmem %s3, 1
    %v3051 = vld [vmem:[%s3050] sm:$0x1]
    %v3053 = vlaneseq
    %v3054 = vshrl.u32 %v3053, 7
    %v3055 = vsub.s32 0, %v3054
    %v3056 = vrot.slane %v3051, %v3055
    %v3059 = vsel %vm75, %v3043, 0
    %v3062 = vsel %vm75, %v3044, 0
    %3064 = vmatprep.subr.mxu0 0.0
    %3065 = vmatpush1.msra.mxu0 0.0
    %3066 = vmatprep.subr.mxu0 0.0
    %3067 = vmatpush1.msra.mxu0 0.0
    %3068 = vmatprep.subr.mxu0 0.0
    %3069 = vmatpush1.msra.mxu0 0.0
    %3070 = vmatprep.subr.mxu0 0.0
    %3071 = vmatpush1.msra.mxu0 0.0
    %3072 = vmatprep.subr.mxu0 0.0
    %3073 = vmatpush1.msra.mxu0 0.0
    %3074 = vmatprep.subr.mxu0 0.0
    %3075 = vmatpush1.msra.mxu0 0.0
    %3076 = vmatprep.subr.mxu0 0.0
    %3077 = vmatpush1.msra.mxu0 0.0
    %3078 = vmatprep.subr.mxu0 0.0
    %3079 = vmatpush1.msra.mxu0 0.0
    %3080 = vmatprep.subr.mxu0 0.0
    %3081 = vmatpush1.msra.mxu0 0.0
    %3082 = vmatprep.subr.mxu0 0.0
    %3083 = vmatpush1.msra.mxu0 0.0
    %3084 = vmatprep.subr.mxu0 0.0
    %3085 = vmatpush1.msra.mxu0 0.0
    %3086 = vmatprep.subr.mxu0 0.0
    %3087 = vmatpush1.msra.mxu0 0.0
    %3088 = vmatprep.subr.mxu0 0.0
    %3089 = vmatpush1.msra.mxu0 %v3049
    %3090 = vmatprep.subr.mxu0 0.0
    %3091 = vmatpush1.msra.mxu0 %v3048
    %3092 = vmatprep.subr.mxu0 0.0
    %3093 = vmatpush1.msra.mxu0 %v3047
    %3094 = vmatprep.subr.mxu0 0.0
    %3095 = vmatpush1.msra.mxu0 %v3046
    %3096 = vmatprep.subr.mxu0 0.0
    %3097 = vmatpush2.msra.mxu0 0.0
    %3098 = vmatprep.subr.mxu0 0.0
    %3099 = vmatpush2.msra.mxu0 0.0
    %3100 = vmatprep.subr.mxu0 0.0
    %3101 = vmatpush2.msra.mxu0 0.0
    %3102 = vmatprep.subr.mxu0 0.0
    %3103 = vmatpush2.msra.mxu0 0.0
    %3104 = vmatprep.subr.mxu0 0.0
    %3105 = vmatpush2.msra.mxu0 0.0
    %3106 = vmatprep.subr.mxu0 0.0
    %3107 = vmatpush2.msra.mxu0 0.0
    %3108 = vmatprep.subr.mxu0 0.0
    %3109 = vmatpush2.msra.mxu0 0.0
    %3110 = vmatprep.subr.mxu0 0.0
    %3111 = vmatpush2.msra.mxu0 0.0
    %3112 = vmatprep.subr.mxu0 0.0
    %3113 = vmatpush2.msra.mxu0 0.0
    %3114 = vmatprep.subr.mxu0 0.0
    %3115 = vmatpush2.msra.mxu0 0.0
    %3116 = vmatprep.subr.mxu0 0.0
    %3117 = vmatpush2.msra.mxu0 0.0
    %3118 = vmatprep.subr.mxu0 0.0
    %3119 = vmatpush2.msra.mxu0 0.0
    %3120 = vmatprep.subr.mxu0 0.0
    %3121 = vmatpush2.msra.mxu0 0.0
    %3122 = vmatprep.subr.mxu0 0.0
    %3123 = vmatpush2.msra.mxu0 0.0
    %3124 = vmatprep.subr.mxu0 0.0
    %3125 = vmatpush2.msra.mxu0 0.0
    %3126 = vmatprep.subr.mxu0 0.0
    %3127 = vmatpush2.msra.mxu0 0.0
    %3128 = vmatprep.mubr.f32.mxu0 0.0
    %3129 = vmatmul.mubr.f32.gmra.mxu0 %v3059
    %v3130 = vpop.f32.mrf.mxu0
    %v3131 = vadd.f32 %v3056, %v3130
    %v3132 = vpop.f32.mrf.mxu0
    %3133 = vmatprep.mubr.f32.mxu0 0.0
    %3134 = vmatmul.mubr.f32.gmra.mxu0 %v3062
    %v3135 = vpop.f32.mrf.mxu0
    %v3136 = vadd.f32 %v3056, %v3135
    %v3137 = vpop.f32.mrf.mxu0
    %3138 = vdwg.mxu0
    %3141 = vrot.lane.b32.xlu0 %v3131, 120
    %v3142 = vpop.permute.xlu0 %3141
    %3143 = vrot.lane.b32.xlu0 %v3136, 120
    %v3144 = vpop.permute.xlu0 %3143
    %3147 = vrot.lane.b32.xlu0 %v3131, 112
    %v3148 = vpop.permute.xlu0 %3147
    %3149 = vrot.lane.b32.xlu0 %v3136, 112
    %v3150 = vpop.permute.xlu0 %3149
    %3153 = vrot.lane.b32.xlu0 %v3131, 104
    %v3154 = vpop.permute.xlu0 %3153
    %3155 = vrot.lane.b32.xlu0 %v3136, 104
    %v3156 = vpop.permute.xlu0 %3155
    %v3159 = vcombine.low %v3131, %v3148
    %v3160 = vcombine.high %v3131, %v3148
    %v3162 = vunpack.c.l.s4 1983009808
    %v3163 = vunpack.c.0.s8 %v3162
    %v3164 = vlaneseq
    %v3165 = vshrl.u32 %v3164, 7
    %v3166 = vsub.s32 %v3163, %v3165
    %v3167 = vrot.slane %v3159, %v3166
    %v3169 = vunpack.c.l.s4 1983009808
    %v3170 = vunpack.c.0.s8 %v3169
    %v3171 = vlaneseq
    %v3172 = vshrl.u32 %v3171, 7
    %v3173 = vsub.s32 %v3170, %v3172
    %v3174 = vrot.slane %v3160, %v3173
    %v3175 = vcombine.low %v3142, %v3154
    %v3176 = vcombine.high %v3142, %v3154
    %v3178 = vunpack.c.l.s4 1983009808
    %v3179 = vunpack.c.0.s8 %v3178
    %v3180 = vlaneseq
    %v3181 = vshrl.u32 %v3180, 7
    %v3182 = vsub.s32 %v3179, %v3181
    %v3183 = vrot.slane %v3175, %v3182
    %v3185 = vunpack.c.l.s4 1983009808
    %v3186 = vunpack.c.0.s8 %v3185
    %v3187 = vlaneseq
    %v3188 = vshrl.u32 %v3187, 7
    %v3189 = vsub.s32 %v3186, %v3188
    %v3190 = vrot.slane %v3176, %v3189
    %v3191 = vcombine.low %v3167, %v3183
    %v3192 = vcombine.high %v3167, %v3183
    %v3194 = vunpack.c.l.s4 1934713408
    %v3195 = vunpack.c.0.s8 %v3194
    %v3196 = vlaneseq
    %v3197 = vshrl.u32 %v3196, 7
    %v3198 = vsub.s32 %v3195, %v3197
    %v3199 = vrot.slane %v3191, %v3198
    %v3201 = vunpack.c.l.s4 1934713408
    %v3202 = vunpack.c.0.s8 %v3201
    %v3203 = vlaneseq
    %v3204 = vshrl.u32 %v3203, 7
    %v3205 = vsub.s32 %v3202, %v3204
    %v3206 = vrot.slane %v3192, %v3205
    %v3207 = vcombine.low %v3174, %v3190
    %v3208 = vcombine.high %v3174, %v3190
    %v3210 = vunpack.c.l.s4 1934713408
    %v3211 = vunpack.c.0.s8 %v3210
    %v3212 = vlaneseq
    %v3213 = vshrl.u32 %v3212, 7
    %v3214 = vsub.s32 %v3211, %v3213
    %v3215 = vrot.slane %v3207, %v3214
    %v3217 = vunpack.c.l.s4 1934713408
    %v3218 = vunpack.c.0.s8 %v3217
    %v3219 = vlaneseq
    %v3220 = vshrl.u32 %v3219, 7
    %v3221 = vsub.s32 %v3218, %v3220
    %v3222 = vrot.slane %v3208, %v3221
    %v3223 = vcombine.high %v3199, 0.0
    %v3224 = vcombine.high %v3206, 0.0
    %v3225 = vcombine.high %v3215, 0.0
    %v3226 = vcombine.high %v3222, 0.0
    %v3227 = vcombine.low %v3136, %v3150
    %v3228 = vcombine.high %v3136, %v3150
    %v3230 = vunpack.c.l.s4 1983009808
    %v3231 = vunpack.c.0.s8 %v3230
    %v3232 = vlaneseq
    %v3233 = vshrl.u32 %v3232, 7
    %v3234 = vsub.s32 %v3231, %v3233
    %v3235 = vrot.slane %v3227, %v3234
    %v3237 = vunpack.c.l.s4 1983009808
    %v3238 = vunpack.c.0.s8 %v3237
    %v3239 = vlaneseq
    %v3240 = vshrl.u32 %v3239, 7
    %v3241 = vsub.s32 %v3238, %v3240
    %v3242 = vrot.slane %v3228, %v3241
    %v3243 = vcombine.low %v3144, %v3156
    %v3244 = vcombine.high %v3144, %v3156
    %v3246 = vunpack.c.l.s4 1983009808
    %v3247 = vunpack.c.0.s8 %v3246
    %v3248 = vlaneseq
    %v3249 = vshrl.u32 %v3248, 7
    %v3250 = vsub.s32 %v3247, %v3249
    %v3251 = vrot.slane %v3243, %v3250
    %v3253 = vunpack.c.l.s4 1983009808
    %v3254 = vunpack.c.0.s8 %v3253
    %v3255 = vlaneseq
    %v3256 = vshrl.u32 %v3255, 7
    %v3257 = vsub.s32 %v3254, %v3256
    %v3258 = vrot.slane %v3244, %v3257
    %v3259 = vcombine.low %v3235, %v3251
    %v3260 = vcombine.high %v3235, %v3251
    %v3262 = vunpack.c.l.s4 1934713408
    %v3263 = vunpack.c.0.s8 %v3262
    %v3264 = vlaneseq
    %v3265 = vshrl.u32 %v3264, 7
    %v3266 = vsub.s32 %v3263, %v3265
    %v3267 = vrot.slane %v3259, %v3266
    %v3269 = vunpack.c.l.s4 1934713408
    %v3270 = vunpack.c.0.s8 %v3269
    %v3271 = vlaneseq
    %v3272 = vshrl.u32 %v3271, 7
    %v3273 = vsub.s32 %v3270, %v3272
    %v3274 = vrot.slane %v3260, %v3273
    %v3275 = vcombine.low %v3242, %v3258
    %v3276 = vcombine.high %v3242, %v3258
    %v3278 = vunpack.c.l.s4 1934713408
    %v3279 = vunpack.c.0.s8 %v3278
    %v3280 = vlaneseq
    %v3281 = vshrl.u32 %v3280, 7
    %v3282 = vsub.s32 %v3279, %v3281
    %v3283 = vrot.slane %v3275, %v3282
    %v3285 = vunpack.c.l.s4 1934713408
    %v3286 = vunpack.c.0.s8 %v3285
    %v3287 = vlaneseq
    %v3288 = vshrl.u32 %v3287, 7
    %v3289 = vsub.s32 %v3286, %v3288
    %v3290 = vrot.slane %v3276, %v3289
    %v3291 = vcombine.high %v3267, 0.0
    %v3292 = vcombine.high %v3274, 0.0
    %v3293 = vcombine.high %v3283, 0.0
    %v3294 = vcombine.high %v3290, 0.0
    %v3295 = vcombine.low %v3199, %v3206
    %v3297 = vunpack.c.l.s4 1983009808
    %v3298 = vunpack.c.0.s8 %v3297
    %v3299 = vlaneseq
    %v3300 = vshrl.u32 %v3299, 7
    %v3301 = vsub.s32 %v3298, %v3300
    %v3302 = vrot.slane %v3295, %v3301
    %v3303 = vcombine.low %v3223, %v3224
    %v3305 = vunpack.c.l.s4 1983009808
    %v3306 = vunpack.c.0.s8 %v3305
    %v3307 = vlaneseq
    %v3308 = vshrl.u32 %v3307, 7
    %v3309 = vsub.s32 %v3306, %v3308
    %v3310 = vrot.slane %v3303, %v3309
    %v3311 = vcombine.low %v3215, %v3222
    %v3313 = vunpack.c.l.s4 1983009808
    %v3314 = vunpack.c.0.s8 %v3313
    %v3315 = vlaneseq
    %v3316 = vshrl.u32 %v3315, 7
    %v3317 = vsub.s32 %v3314, %v3316
    %v3318 = vrot.slane %v3311, %v3317
    %v3319 = vcombine.low %v3225, %v3226
    %v3321 = vunpack.c.l.s4 1983009808
    %v3322 = vunpack.c.0.s8 %v3321
    %v3323 = vlaneseq
    %v3324 = vshrl.u32 %v3323, 7
    %v3325 = vsub.s32 %v3322, %v3324
    %v3326 = vrot.slane %v3319, %v3325
    %v3327 = vcombine.low %v3302, %v3310
    %v3328 = vcombine.high %v3302, %v3310
    %v3330 = vunpack.c.l.s4 1934713408
    %v3331 = vunpack.c.0.s8 %v3330
    %v3332 = vlaneseq
    %v3333 = vshrl.u32 %v3332, 7
    %v3334 = vsub.s32 %v3331, %v3333
    %v3335 = vrot.slane %v3327, %v3334
    %v3337 = vunpack.c.l.s4 1934713408
    %v3338 = vunpack.c.0.s8 %v3337
    %v3339 = vlaneseq
    %v3340 = vshrl.u32 %v3339, 7
    %v3341 = vsub.s32 %v3338, %v3340
    %v3342 = vrot.slane %v3328, %v3341
    %v3343 = vcombine.low %v3318, %v3326
    %v3344 = vcombine.high %v3318, %v3326
    %v3346 = vunpack.c.l.s4 1934713408
    %v3347 = vunpack.c.0.s8 %v3346
    %v3348 = vlaneseq
    %v3349 = vshrl.u32 %v3348, 7
    %v3350 = vsub.s32 %v3347, %v3349
    %v3351 = vrot.slane %v3343, %v3350
    %v3353 = vunpack.c.l.s4 1934713408
    %v3354 = vunpack.c.0.s8 %v3353
    %v3355 = vlaneseq
    %v3356 = vshrl.u32 %v3355, 7
    %v3357 = vsub.s32 %v3354, %v3356
    %v3358 = vrot.slane %v3344, %v3357
    %v3359 = vcombine.low %v3335, %v3351
    %v3360 = vcombine.high %v3335, %v3351
    %v3361 = vcombine.low %v3342, %v3358
    %v3362 = vcombine.high %v3342, %v3358
    %v3363 = vcombine.low %v3267, %v3274
    %v3365 = vunpack.c.l.s4 1983009808
    %v3366 = vunpack.c.0.s8 %v3365
    %v3367 = vlaneseq
    %v3368 = vshrl.u32 %v3367, 7
    %v3369 = vsub.s32 %v3366, %v3368
    %v3370 = vrot.slane %v3363, %v3369
    %v3371 = vcombine.low %v3291, %v3292
    %v3373 = vunpack.c.l.s4 1983009808
    %v3374 = vunpack.c.0.s8 %v3373
    %v3375 = vlaneseq
    %v3376 = vshrl.u32 %v3375, 7
    %v3377 = vsub.s32 %v3374, %v3376
    %v3378 = vrot.slane %v3371, %v3377
    %v3379 = vcombine.low %v3283, %v3290
    %v3381 = vunpack.c.l.s4 1983009808
    %v3382 = vunpack.c.0.s8 %v3381
    %v3383 = vlaneseq
    %v3384 = vshrl.u32 %v3383, 7
    %v3385 = vsub.s32 %v3382, %v3384
    %v3386 = vrot.slane %v3379, %v3385
    %v3387 = vcombine.low %v3293, %v3294
    %v3389 = vunpack.c.l.s4 1983009808
    %v3390 = vunpack.c.0.s8 %v3389
    %v3391 = vlaneseq
    %v3392 = vshrl.u32 %v3391, 7
    %v3393 = vsub.s32 %v3390, %v3392
    %v3394 = vrot.slane %v3387, %v3393
    %v3395 = vcombine.low %v3370, %v3378
    %v3396 = vcombine.high %v3370, %v3378
    %v3398 = vunpack.c.l.s4 1934713408
    %v3399 = vunpack.c.0.s8 %v3398
    %v3400 = vlaneseq
    %v3401 = vshrl.u32 %v3400, 7
    %v3402 = vsub.s32 %v3399, %v3401
    %v3403 = vrot.slane %v3395, %v3402
    %v3405 = vunpack.c.l.s4 1934713408
    %v3406 = vunpack.c.0.s8 %v3405
    %v3407 = vlaneseq
    %v3408 = vshrl.u32 %v3407, 7
    %v3409 = vsub.s32 %v3406, %v3408
    %v3410 = vrot.slane %v3396, %v3409
    %v3411 = vcombine.low %v3386, %v3394
    %v3412 = vcombine.high %v3386, %v3394
    %v3414 = vunpack.c.l.s4 1934713408
    %v3415 = vunpack.c.0.s8 %v3414
    %v3416 = vlaneseq
    %v3417 = vshrl.u32 %v3416, 7
    %v3418 = vsub.s32 %v3415, %v3417
    %v3419 = vrot.slane %v3411, %v3418
    %v3421 = vunpack.c.l.s4 1934713408
    %v3422 = vunpack.c.0.s8 %v3421
    %v3423 = vlaneseq
    %v3424 = vshrl.u32 %v3423, 7
    %v3425 = vsub.s32 %v3422, %v3424
    %v3426 = vrot.slane %v3412, %v3425
    %v3427 = vcombine.low %v3403, %v3419
    %v3428 = vcombine.high %v3403, %v3419
    %v3429 = vcombine.low %v3410, %v3426
    %v3430 = vcombine.high %v3410, %v3426
    %3431 = vrot.lane.b32.xlu0 %v3131, 96
    %v3432 = vpop.permute.xlu0 %3431
    %3433 = vrot.lane.b32.xlu0 %v3136, 96
    %v3434 = vpop.permute.xlu0 %3433
    %3435 = vrot.lane.b32.xlu0 %v3142, 96
    %v3436 = vpop.permute.xlu0 %3435
    %3437 = vrot.lane.b32.xlu0 %v3144, 96
    %v3438 = vpop.permute.xlu0 %3437
    %3439 = vrot.lane.b32.xlu0 %v3148, 96
    %v3440 = vpop.permute.xlu0 %3439
    %3441 = vrot.lane.b32.xlu0 %v3150, 96
    %v3442 = vpop.permute.xlu0 %3441
    %3443 = vrot.lane.b32.xlu0 %v3154, 96
    %v3444 = vpop.permute.xlu0 %3443
    %3445 = vrot.lane.b32.xlu0 %v3156, 96
    %v3446 = vpop.permute.xlu0 %3445
    %v3455 = vcombine.low %v3432, %v3440
    %v3456 = vcombine.high %v3432, %v3440
    %v3458 = vunpack.c.l.s4 1983009808
    %v3459 = vunpack.c.0.s8 %v3458
    %v3460 = vlaneseq
    %v3461 = vshrl.u32 %v3460, 7
    %v3462 = vsub.s32 %v3459, %v3461
    %v3463 = vrot.slane %v3455, %v3462
    %v3465 = vunpack.c.l.s4 1983009808
    %v3466 = vunpack.c.0.s8 %v3465
    %v3467 = vlaneseq
    %v3468 = vshrl.u32 %v3467, 7
    %v3469 = vsub.s32 %v3466, %v3468
    %v3470 = vrot.slane %v3456, %v3469
    %v3471 = vcombine.low %v3436, %v3444
    %v3472 = vcombine.high %v3436, %v3444
    %v3474 = vunpack.c.l.s4 1983009808
    %v3475 = vunpack.c.0.s8 %v3474
    %v3476 = vlaneseq
    %v3477 = vshrl.u32 %v3476, 7
    %v3478 = vsub.s32 %v3475, %v3477
    %v3479 = vrot.slane %v3471, %v3478
    %v3481 = vunpack.c.l.s4 1983009808
    %v3482 = vunpack.c.0.s8 %v3481
    %v3483 = vlaneseq
    %v3484 = vshrl.u32 %v3483, 7
    %v3485 = vsub.s32 %v3482, %v3484
    %v3486 = vrot.slane %v3472, %v3485
    %v3487 = vcombine.low %v3463, %v3479
    %v3488 = vcombine.high %v3463, %v3479
    %v3490 = vunpack.c.l.s4 1934713408
    %v3491 = vunpack.c.0.s8 %v3490
    %v3492 = vlaneseq
    %v3493 = vshrl.u32 %v3492, 7
    %v3494 = vsub.s32 %v3491, %v3493
    %v3495 = vrot.slane %v3487, %v3494
    %v3497 = vunpack.c.l.s4 1934713408
    %v3498 = vunpack.c.0.s8 %v3497
    %v3499 = vlaneseq
    %v3500 = vshrl.u32 %v3499, 7
    %v3501 = vsub.s32 %v3498, %v3500
    %v3502 = vrot.slane %v3488, %v3501
    %v3503 = vcombine.low %v3470, %v3486
    %v3504 = vcombine.high %v3470, %v3486
    %v3506 = vunpack.c.l.s4 1934713408
    %v3507 = vunpack.c.0.s8 %v3506
    %v3508 = vlaneseq
    %v3509 = vshrl.u32 %v3508, 7
    %v3510 = vsub.s32 %v3507, %v3509
    %v3511 = vrot.slane %v3503, %v3510
    %v3513 = vunpack.c.l.s4 1934713408
    %v3514 = vunpack.c.0.s8 %v3513
    %v3515 = vlaneseq
    %v3516 = vshrl.u32 %v3515, 7
    %v3517 = vsub.s32 %v3514, %v3516
    %v3518 = vrot.slane %v3504, %v3517
    %v3519 = vcombine.high %v3495, 0.0
    %v3520 = vcombine.high %v3502, 0.0
    %v3521 = vcombine.high %v3511, 0.0
    %v3522 = vcombine.high %v3518, 0.0
    %v3523 = vcombine.low %v3434, %v3442
    %v3524 = vcombine.high %v3434, %v3442
    %v3526 = vunpack.c.l.s4 1983009808
    %v3527 = vunpack.c.0.s8 %v3526
    %v3528 = vlaneseq
    %v3529 = vshrl.u32 %v3528, 7
    %v3530 = vsub.s32 %v3527, %v3529
    %v3531 = vrot.slane %v3523, %v3530
    %v3533 = vunpack.c.l.s4 1983009808
    %v3534 = vunpack.c.0.s8 %v3533
    %v3535 = vlaneseq
    %v3536 = vshrl.u32 %v3535, 7
    %v3537 = vsub.s32 %v3534, %v3536
    %v3538 = vrot.slane %v3524, %v3537
    %v3539 = vcombine.low %v3438, %v3446
    %v3540 = vcombine.high %v3438, %v3446
    %v3542 = vunpack.c.l.s4 1983009808
    %v3543 = vunpack.c.0.s8 %v3542
    %v3544 = vlaneseq
    %v3545 = vshrl.u32 %v3544, 7
    %v3546 = vsub.s32 %v3543, %v3545
    %v3547 = vrot.slane %v3539, %v3546
    %v3549 = vunpack.c.l.s4 1983009808
    %v3550 = vunpack.c.0.s8 %v3549
    %v3551 = vlaneseq
    %v3552 = vshrl.u32 %v3551, 7
    %v3553 = vsub.s32 %v3550, %v3552
    %v3554 = vrot.slane %v3540, %v3553
    %v3555 = vcombine.low %v3531, %v3547
    %v3556 = vcombine.high %v3531, %v3547
    %v3558 = vunpack.c.l.s4 1934713408
    %v3559 = vunpack.c.0.s8 %v3558
    %v3560 = vlaneseq
    %v3561 = vshrl.u32 %v3560, 7
    %v3562 = vsub.s32 %v3559, %v3561
    %v3563 = vrot.slane %v3555, %v3562
    %v3565 = vunpack.c.l.s4 1934713408
    %v3566 = vunpack.c.0.s8 %v3565
    %v3567 = vlaneseq
    %v3568 = vshrl.u32 %v3567, 7
    %v3569 = vsub.s32 %v3566, %v3568
    %v3570 = vrot.slane %v3556, %v3569
    %v3571 = vcombine.low %v3538, %v3554
    %v3572 = vcombine.high %v3538, %v3554
    %v3574 = vunpack.c.l.s4 1934713408
    %v3575 = vunpack.c.0.s8 %v3574
    %v3576 = vlaneseq
    %v3577 = vshrl.u32 %v3576, 7
    %v3578 = vsub.s32 %v3575, %v3577
    %v3579 = vrot.slane %v3571, %v3578
    %v3581 = vunpack.c.l.s4 1934713408
    %v3582 = vunpack.c.0.s8 %v3581
    %v3583 = vlaneseq
    %v3584 = vshrl.u32 %v3583, 7
    %v3585 = vsub.s32 %v3582, %v3584
    %v3586 = vrot.slane %v3572, %v3585
    %v3587 = vcombine.high %v3563, 0.0
    %v3588 = vcombine.high %v3570, 0.0
    %v3589 = vcombine.high %v3579, 0.0
    %v3590 = vcombine.high %v3586, 0.0
    %v3591 = vcombine.low %v3495, %v3502
    %v3593 = vunpack.c.l.s4 1983009808
    %v3594 = vunpack.c.0.s8 %v3593
    %v3595 = vlaneseq
    %v3596 = vshrl.u32 %v3595, 7
    %v3597 = vsub.s32 %v3594, %v3596
    %v3598 = vrot.slane %v3591, %v3597
    %v3599 = vcombine.low %v3519, %v3520
    %v3601 = vunpack.c.l.s4 1983009808
    %v3602 = vunpack.c.0.s8 %v3601
    %v3603 = vlaneseq
    %v3604 = vshrl.u32 %v3603, 7
    %v3605 = vsub.s32 %v3602, %v3604
    %v3606 = vrot.slane %v3599, %v3605
    %v3607 = vcombine.low %v3511, %v3518
    %v3609 = vunpack.c.l.s4 1983009808
    %v3610 = vunpack.c.0.s8 %v3609
    %v3611 = vlaneseq
    %v3612 = vshrl.u32 %v3611, 7
    %v3613 = vsub.s32 %v3610, %v3612
    %v3614 = vrot.slane %v3607, %v3613
    %v3615 = vcombine.low %v3521, %v3522
    %v3617 = vunpack.c.l.s4 1983009808
    %v3618 = vunpack.c.0.s8 %v3617
    %v3619 = vlaneseq
    %v3620 = vshrl.u32 %v3619, 7
    %v3621 = vsub.s32 %v3618, %v3620
    %v3622 = vrot.slane %v3615, %v3621
    %v3623 = vcombine.low %v3598, %v3606
    %v3624 = vcombine.high %v3598, %v3606
    %v3626 = vunpack.c.l.s4 1934713408
    %v3627 = vunpack.c.0.s8 %v3626
    %v3628 = vlaneseq
    %v3629 = vshrl.u32 %v3628, 7
    %v3630 = vsub.s32 %v3627, %v3629
    %v3631 = vrot.slane %v3623, %v3630
    %v3633 = vunpack.c.l.s4 1934713408
    %v3634 = vunpack.c.0.s8 %v3633
    %v3635 = vlaneseq
    %v3636 = vshrl.u32 %v3635, 7
    %v3637 = vsub.s32 %v3634, %v3636
    %v3638 = vrot.slane %v3624, %v3637
    %v3639 = vcombine.low %v3614, %v3622
    %v3640 = vcombine.high %v3614, %v3622
    %v3642 = vunpack.c.l.s4 1934713408
    %v3643 = vunpack.c.0.s8 %v3642
    %v3644 = vlaneseq
    %v3645 = vshrl.u32 %v3644, 7
    %v3646 = vsub.s32 %v3643, %v3645
    %v3647 = vrot.slane %v3639, %v3646
    %v3649 = vunpack.c.l.s4 1934713408
    %v3650 = vunpack.c.0.s8 %v3649
    %v3651 = vlaneseq
    %v3652 = vshrl.u32 %v3651, 7
    %v3653 = vsub.s32 %v3650, %v3652
    %v3654 = vrot.slane %v3640, %v3653
    %v3655 = vcombine.low %v3631, %v3647
    %v3656 = vcombine.high %v3631, %v3647
    %v3657 = vcombine.low %v3638, %v3654
    %v3658 = vcombine.high %v3638, %v3654
    %v3659 = vcombine.low %v3563, %v3570
    %v3661 = vunpack.c.l.s4 1983009808
    %v3662 = vunpack.c.0.s8 %v3661
    %v3663 = vlaneseq
    %v3664 = vshrl.u32 %v3663, 7
    %v3665 = vsub.s32 %v3662, %v3664
    %v3666 = vrot.slane %v3659, %v3665
    %v3667 = vcombine.low %v3587, %v3588
    %v3669 = vunpack.c.l.s4 1983009808
    %v3670 = vunpack.c.0.s8 %v3669
    %v3671 = vlaneseq
    %v3672 = vshrl.u32 %v3671, 7
    %v3673 = vsub.s32 %v3670, %v3672
    %v3674 = vrot.slane %v3667, %v3673
    %v3675 = vcombine.low %v3579, %v3586
    %v3677 = vunpack.c.l.s4 1983009808
    %v3678 = vunpack.c.0.s8 %v3677
    %v3679 = vlaneseq
    %v3680 = vshrl.u32 %v3679, 7
    %v3681 = vsub.s32 %v3678, %v3680
    %v3682 = vrot.slane %v3675, %v3681
    %v3683 = vcombine.low %v3589, %v3590
    %v3685 = vunpack.c.l.s4 1983009808
    %v3686 = vunpack.c.0.s8 %v3685
    %v3687 = vlaneseq
    %v3688 = vshrl.u32 %v3687, 7
    %v3689 = vsub.s32 %v3686, %v3688
    %v3690 = vrot.slane %v3683, %v3689
    %v3691 = vcombine.low %v3666, %v3674
    %v3692 = vcombine.high %v3666, %v3674
    %v3694 = vunpack.c.l.s4 1934713408
    %v3695 = vunpack.c.0.s8 %v3694
    %v3696 = vlaneseq
    %v3697 = vshrl.u32 %v3696, 7
    %v3698 = vsub.s32 %v3695, %v3697
    %v3699 = vrot.slane %v3691, %v3698
    %v3701 = vunpack.c.l.s4 1934713408
    %v3702 = vunpack.c.0.s8 %v3701
    %v3703 = vlaneseq
    %v3704 = vshrl.u32 %v3703, 7
    %v3705 = vsub.s32 %v3702, %v3704
    %v3706 = vrot.slane %v3692, %v3705
    %v3707 = vcombine.low %v3682, %v3690
    %v3708 = vcombine.high %v3682, %v3690
    %v3710 = vunpack.c.l.s4 1934713408
    %v3711 = vunpack.c.0.s8 %v3710
    %v3712 = vlaneseq
    %v3713 = vshrl.u32 %v3712, 7
    %v3714 = vsub.s32 %v3711, %v3713
    %v3715 = vrot.slane %v3707, %v3714
    %v3717 = vunpack.c.l.s4 1934713408
    %v3718 = vunpack.c.0.s8 %v3717
    %v3719 = vlaneseq
    %v3720 = vshrl.u32 %v3719, 7
    %v3721 = vsub.s32 %v3718, %v3720
    %v3722 = vrot.slane %v3708, %v3721
    %v3723 = vcombine.low %v3699, %v3715
    %v3724 = vcombine.high %v3699, %v3715
    %v3725 = vcombine.low %v3706, %v3722
    %v3726 = vcombine.high %v3706, %v3722
    %3727 = vrot.lane.b32.xlu0 %v3131, 64
    %v3728 = vpop.permute.xlu0 %3727
    %3729 = vrot.lane.b32.xlu0 %v3136, 64
    %v3730 = vpop.permute.xlu0 %3729
    %3731 = vrot.lane.b32.xlu0 %v3142, 64
    %v3732 = vpop.permute.xlu0 %3731
    %3733 = vrot.lane.b32.xlu0 %v3144, 64
    %v3734 = vpop.permute.xlu0 %3733
    %3735 = vrot.lane.b32.xlu0 %v3148, 64
    %v3736 = vpop.permute.xlu0 %3735
    %3737 = vrot.lane.b32.xlu0 %v3150, 64
    %v3738 = vpop.permute.xlu0 %3737
    %3739 = vrot.lane.b32.xlu0 %v3154, 64
    %v3740 = vpop.permute.xlu0 %3739
    %3741 = vrot.lane.b32.xlu0 %v3156, 64
    %v3742 = vpop.permute.xlu0 %3741
    %v3751 = vcombine.low %v3728, %v3736
    %v3752 = vcombine.high %v3728, %v3736
    %v3754 = vunpack.c.l.s4 1983009808
    %v3755 = vunpack.c.0.s8 %v3754
    %v3756 = vlaneseq
    %v3757 = vshrl.u32 %v3756, 7
    %v3758 = vsub.s32 %v3755, %v3757
    %v3759 = vrot.slane %v3751, %v3758
    %v3761 = vunpack.c.l.s4 1983009808
    %v3762 = vunpack.c.0.s8 %v3761
    %v3763 = vlaneseq
    %v3764 = vshrl.u32 %v3763, 7
    %v3765 = vsub.s32 %v3762, %v3764
    %v3766 = vrot.slane %v3752, %v3765
    %v3767 = vcombine.low %v3732, %v3740
    %v3768 = vcombine.high %v3732, %v3740
    %v3770 = vunpack.c.l.s4 1983009808
    %v3771 = vunpack.c.0.s8 %v3770
    %v3772 = vlaneseq
    %v3773 = vshrl.u32 %v3772, 7
    %v3774 = vsub.s32 %v3771, %v3773
    %v3775 = vrot.slane %v3767, %v3774
    %v3777 = vunpack.c.l.s4 1983009808
    %v3778 = vunpack.c.0.s8 %v3777
    %v3779 = vlaneseq
    %v3780 = vshrl.u32 %v3779, 7
    %v3781 = vsub.s32 %v3778, %v3780
    %v3782 = vrot.slane %v3768, %v3781
    %v3783 = vcombine.low %v3759, %v3775
    %v3784 = vcombine.high %v3759, %v3775
    %v3786 = vunpack.c.l.s4 1934713408
    %v3787 = vunpack.c.0.s8 %v3786
    %v3788 = vlaneseq
    %v3789 = vshrl.u32 %v3788, 7
    %v3790 = vsub.s32 %v3787, %v3789
    %v3791 = vrot.slane %v3783, %v3790
    %v3793 = vunpack.c.l.s4 1934713408
    %v3794 = vunpack.c.0.s8 %v3793
    %v3795 = vlaneseq
    %v3796 = vshrl.u32 %v3795, 7
    %v3797 = vsub.s32 %v3794, %v3796
    %v3798 = vrot.slane %v3784, %v3797
    %v3799 = vcombine.low %v3766, %v3782
    %v3800 = vcombine.high %v3766, %v3782
    %v3802 = vunpack.c.l.s4 1934713408
    %v3803 = vunpack.c.0.s8 %v3802
    %v3804 = vlaneseq
    %v3805 = vshrl.u32 %v3804, 7
    %v3806 = vsub.s32 %v3803, %v3805
    %v3807 = vrot.slane %v3799, %v3806
    %v3809 = vunpack.c.l.s4 1934713408
    %v3810 = vunpack.c.0.s8 %v3809
    %v3811 = vlaneseq
    %v3812 = vshrl.u32 %v3811, 7
    %v3813 = vsub.s32 %v3810, %v3812
    %v3814 = vrot.slane %v3800, %v3813
    %v3815 = vcombine.high %v3791, 0.0
    %v3816 = vcombine.high %v3798, 0.0
    %v3817 = vcombine.high %v3807, 0.0
    %v3818 = vcombine.high %v3814, 0.0
    %v3819 = vcombine.low %v3730, %v3738
    %v3820 = vcombine.high %v3730, %v3738
    %v3822 = vunpack.c.l.s4 1983009808
    %v3823 = vunpack.c.0.s8 %v3822
    %v3824 = vlaneseq
    %v3825 = vshrl.u32 %v3824, 7
    %v3826 = vsub.s32 %v3823, %v3825
    %v3827 = vrot.slane %v3819, %v3826
    %v3829 = vunpack.c.l.s4 1983009808
    %v3830 = vunpack.c.0.s8 %v3829
    %v3831 = vlaneseq
    %v3832 = vshrl.u32 %v3831, 7
    %v3833 = vsub.s32 %v3830, %v3832
    %v3834 = vrot.slane %v3820, %v3833
    %v3835 = vcombine.low %v3734, %v3742
    %v3836 = vcombine.high %v3734, %v3742
    %v3838 = vunpack.c.l.s4 1983009808
    %v3839 = vunpack.c.0.s8 %v3838
    %v3840 = vlaneseq
    %v3841 = vshrl.u32 %v3840, 7
    %v3842 = vsub.s32 %v3839, %v3841
    %v3843 = vrot.slane %v3835, %v3842
    %v3845 = vunpack.c.l.s4 1983009808
    %v3846 = vunpack.c.0.s8 %v3845
    %v3847 = vlaneseq
    %v3848 = vshrl.u32 %v3847, 7
    %v3849 = vsub.s32 %v3846, %v3848
    %v3850 = vrot.slane %v3836, %v3849
    %v3851 = vcombine.low %v3827, %v3843
    %v3852 = vcombine.high %v3827, %v3843
    %v3854 = vunpack.c.l.s4 1934713408
    %v3855 = vunpack.c.0.s8 %v3854
    %v3856 = vlaneseq
    %v3857 = vshrl.u32 %v3856, 7
    %v3858 = vsub.s32 %v3855, %v3857
    %v3859 = vrot.slane %v3851, %v3858
    %v3861 = vunpack.c.l.s4 1934713408
    %v3862 = vunpack.c.0.s8 %v3861
    %v3863 = vlaneseq
    %v3864 = vshrl.u32 %v3863, 7
    %v3865 = vsub.s32 %v3862, %v3864
    %v3866 = vrot.slane %v3852, %v3865
    %v3867 = vcombine.low %v3834, %v3850
    %v3868 = vcombine.high %v3834, %v3850
    %v3870 = vunpack.c.l.s4 1934713408
    %v3871 = vunpack.c.0.s8 %v3870
    %v3872 = vlaneseq
    %v3873 = vshrl.u32 %v3872, 7
    %v3874 = vsub.s32 %v3871, %v3873
    %v3875 = vrot.slane %v3867, %v3874
    %v3877 = vunpack.c.l.s4 1934713408
    %v3878 = vunpack.c.0.s8 %v3877
    %v3879 = vlaneseq
    %v3880 = vshrl.u32 %v3879, 7
    %v3881 = vsub.s32 %v3878, %v3880
    %v3882 = vrot.slane %v3868, %v3881
    %v3883 = vcombine.high %v3859, 0.0
    %v3884 = vcombine.high %v3866, 0.0
    %v3885 = vcombine.high %v3875, 0.0
    %v3886 = vcombine.high %v3882, 0.0
    %v3887 = vcombine.low %v3791, %v3798
    %v3889 = vunpack.c.l.s4 1983009808
    %v3890 = vunpack.c.0.s8 %v3889
    %v3891 = vlaneseq
    %v3892 = vshrl.u32 %v3891, 7
    %v3893 = vsub.s32 %v3890, %v3892
    %v3894 = vrot.slane %v3887, %v3893
    %v3895 = vcombine.low %v3815, %v3816
    %v3897 = vunpack.c.l.s4 1983009808
    %v3898 = vunpack.c.0.s8 %v3897
    %v3899 = vlaneseq
    %v3900 = vshrl.u32 %v3899, 7
    %v3901 = vsub.s32 %v3898, %v3900
    %v3902 = vrot.slane %v3895, %v3901
    %v3903 = vcombine.low %v3807, %v3814
    %v3905 = vunpack.c.l.s4 1983009808
    %v3906 = vunpack.c.0.s8 %v3905
    %v3907 = vlaneseq
    %v3908 = vshrl.u32 %v3907, 7
    %v3909 = vsub.s32 %v3906, %v3908
    %v3910 = vrot.slane %v3903, %v3909
    %v3911 = vcombine.low %v3817, %v3818
    %v3913 = vunpack.c.l.s4 1983009808
    %v3914 = vunpack.c.0.s8 %v3913
    %v3915 = vlaneseq
    %v3916 = vshrl.u32 %v3915, 7
    %v3917 = vsub.s32 %v3914, %v3916
    %v3918 = vrot.slane %v3911, %v3917
    %v3919 = vcombine.low %v3894, %v3902
    %v3920 = vcombine.high %v3894, %v3902
    %v3922 = vunpack.c.l.s4 1934713408
    %v3923 = vunpack.c.0.s8 %v3922
    %v3924 = vlaneseq
    %v3925 = vshrl.u32 %v3924, 7
    %v3926 = vsub.s32 %v3923, %v3925
    %v3927 = vrot.slane %v3919, %v3926
    %v3929 = vunpack.c.l.s4 1934713408
    %v3930 = vunpack.c.0.s8 %v3929
    %v3931 = vlaneseq
    %v3932 = vshrl.u32 %v3931, 7
    %v3933 = vsub.s32 %v3930, %v3932
    %v3934 = vrot.slane %v3920, %v3933
    %v3935 = vcombine.low %v3910, %v3918
    %v3936 = vcombine.high %v3910, %v3918
    %v3938 = vunpack.c.l.s4 1934713408
    %v3939 = vunpack.c.0.s8 %v3938
    %v3940 = vlaneseq
    %v3941 = vshrl.u32 %v3940, 7
    %v3942 = vsub.s32 %v3939, %v3941
    %v3943 = vrot.slane %v3935, %v3942
    %v3945 = vunpack.c.l.s4 1934713408
    %v3946 = vunpack.c.0.s8 %v3945
    %v3947 = vlaneseq
    %v3948 = vshrl.u32 %v3947, 7
    %v3949 = vsub.s32 %v3946, %v3948
    %v3950 = vrot.slane %v3936, %v3949
    %v3951 = vcombine.low %v3927, %v3943
    %v3952 = vcombine.high %v3927, %v3943
    %v3953 = vcombine.low %v3934, %v3950
    %v3954 = vcombine.high %v3934, %v3950
    %v3955 = vcombine.low %v3859, %v3866
    %v3957 = vunpack.c.l.s4 1983009808
    %v3958 = vunpack.c.0.s8 %v3957
    %v3959 = vlaneseq
    %v3960 = vshrl.u32 %v3959, 7
    %v3961 = vsub.s32 %v3958, %v3960
    %v3962 = vrot.slane %v3955, %v3961
    %v3963 = vcombine.low %v3883, %v3884
    %v3965 = vunpack.c.l.s4 1983009808
    %v3966 = vunpack.c.0.s8 %v3965
    %v3967 = vlaneseq
    %v3968 = vshrl.u32 %v3967, 7
    %v3969 = vsub.s32 %v3966, %v3968
    %v3970 = vrot.slane %v3963, %v3969
    %v3971 = vcombine.low %v3875, %v3882
    %v3973 = vunpack.c.l.s4 1983009808
    %v3974 = vunpack.c.0.s8 %v3973
    %v3975 = vlaneseq
    %v3976 = vshrl.u32 %v3975, 7
    %v3977 = vsub.s32 %v3974, %v3976
    %v3978 = vrot.slane %v3971, %v3977
    %v3979 = vcombine.low %v3885, %v3886
    %v3981 = vunpack.c.l.s4 1983009808
    %v3982 = vunpack.c.0.s8 %v3981
    %v3983 = vlaneseq
    %v3984 = vshrl.u32 %v3983, 7
    %v3985 = vsub.s32 %v3982, %v3984
    %v3986 = vrot.slane %v3979, %v3985
    %v3987 = vcombine.low %v3962, %v3970
    %v3988 = vcombine.high %v3962, %v3970
    %v3990 = vunpack.c.l.s4 1934713408
    %v3991 = vunpack.c.0.s8 %v3990
    %v3992 = vlaneseq
    %v3993 = vshrl.u32 %v3992, 7
    %v3994 = vsub.s32 %v3991, %v3993
    %v3995 = vrot.slane %v3987, %v3994
    %v3997 = vunpack.c.l.s4 1934713408
    %v3998 = vunpack.c.0.s8 %v3997
    %v3999 = vlaneseq
    %v4000 = vshrl.u32 %v3999, 7
    %v4001 = vsub.s32 %v3998, %v4000
    %v4002 = vrot.slane %v3988, %v4001
    %v4003 = vcombine.low %v3978, %v3986
    %v4004 = vcombine.high %v3978, %v3986
    %v4006 = vunpack.c.l.s4 1934713408
    %v4007 = vunpack.c.0.s8 %v4006
    %v4008 = vlaneseq
    %v4009 = vshrl.u32 %v4008, 7
    %v4010 = vsub.s32 %v4007, %v4009
    %v4011 = vrot.slane %v4003, %v4010
    %v4013 = vunpack.c.l.s4 1934713408
    %v4014 = vunpack.c.0.s8 %v4013
    %v4015 = vlaneseq
    %v4016 = vshrl.u32 %v4015, 7
    %v4017 = vsub.s32 %v4014, %v4016
    %v4018 = vrot.slane %v4004, %v4017
    %v4019 = vcombine.low %v3995, %v4011
    %v4020 = vcombine.high %v3995, %v4011
    %v4021 = vcombine.low %v4002, %v4018
    %v4022 = vcombine.high %v4002, %v4018
    %v4024 = vsel %vm1089, %v3359, 0
    %v4027 = vsel %vm1089, %v3655, 0
    %4029 = vmatprep.subr.mxu0 0.0
    %4030 = vmatpush1.xpose.msra.mxu0 0.0
    %4031 = vmatprep.subr.mxu0 0.0
    %4032 = vmatpush1.xpose.msra.mxu0 0.0
    %4033 = vmatprep.subr.mxu0 0.0
    %4034 = vmatpush1.xpose.msra.mxu0 0.0
    %4035 = vmatprep.subr.mxu0 0.0
    %4036 = vmatpush1.xpose.msra.mxu0 0.0
    %4037 = vmatprep.subr.mxu0 0.0
    %4038 = vmatpush1.xpose.msra.mxu0 0.0
    %4039 = vmatprep.subr.mxu0 0.0
    %4040 = vmatpush1.xpose.msra.mxu0 0.0
    %4041 = vmatprep.subr.mxu0 0.0
    %4042 = vmatpush1.xpose.msra.mxu0 0.0
    %4043 = vmatprep.subr.mxu0 0.0
    %4044 = vmatpush1.xpose.msra.mxu0 0.0
    %4045 = vmatprep.subr.mxu0 0.0
    %4046 = vmatpush1.xpose.msra.mxu0 0.0
    %4047 = vmatprep.subr.mxu0 0.0
    %4048 = vmatpush1.xpose.msra.mxu0 0.0
    %4049 = vmatprep.subr.mxu0 0.0
    %4050 = vmatpush1.xpose.msra.mxu0 0.0
    %4051 = vmatprep.subr.mxu0 0.0
    %4052 = vmatpush1.xpose.msra.mxu0 0.0
    %4053 = vmatprep.subr.mxu0 0.0
    %4054 = vmatpush1.xpose.msra.mxu0 0.0
    %4055 = vmatprep.subr.mxu0 0.0
    %4056 = vmatpush1.xpose.msra.mxu0 0.0
    %4057 = vmatprep.subr.mxu0 0.0
    %4058 = vmatpush1.xpose.msra.mxu0 0.0
    %4059 = vmatprep.subr.mxu0 0.0
    %4060 = vmatpush1.xpose.msra.mxu0 %v4027
    %4061 = vmatprep.subr.mxu0 0.0
    %4062 = vmatpush2.xpose.msra.mxu0 0.0
    %4063 = vmatprep.subr.mxu0 0.0
    %4064 = vmatpush2.xpose.msra.mxu0 0.0
    %4065 = vmatprep.subr.mxu0 0.0
    %4066 = vmatpush2.xpose.msra.mxu0 0.0
    %4067 = vmatprep.subr.mxu0 0.0
    %4068 = vmatpush2.xpose.msra.mxu0 0.0
    %4069 = vmatprep.subr.mxu0 0.0
    %4070 = vmatpush2.xpose.msra.mxu0 0.0
    %4071 = vmatprep.subr.mxu0 0.0
    %4072 = vmatpush2.xpose.msra.mxu0 0.0
    %4073 = vmatprep.subr.mxu0 0.0
    %4074 = vmatpush2.xpose.msra.mxu0 0.0
    %4075 = vmatprep.subr.mxu0 0.0
    %4076 = vmatpush2.xpose.msra.mxu0 0.0
    %4077 = vmatprep.subr.mxu0 0.0
    %4078 = vmatpush2.xpose.msra.mxu0 0.0
    %4079 = vmatprep.subr.mxu0 0.0
    %4080 = vmatpush2.xpose.msra.mxu0 0.0
    %4081 = vmatprep.subr.mxu0 0.0
    %4082 = vmatpush2.xpose.msra.mxu0 0.0
    %4083 = vmatprep.subr.mxu0 0.0
    %4084 = vmatpush2.xpose.msra.mxu0 0.0
    %4085 = vmatprep.subr.mxu0 0.0
    %4086 = vmatpush2.xpose.msra.mxu0 0.0
    %4087 = vmatprep.subr.mxu0 0.0
    %4088 = vmatpush2.xpose.msra.mxu0 0.0
    %4089 = vmatprep.subr.mxu0 0.0
    %4090 = vmatpush2.xpose.msra.mxu0 0.0
    %4091 = vmatprep.subr.mxu0 0.0
    %4092 = vmatpush2.xpose.msra.mxu0 0.0
    %4093 = vmatprep.mubr.f32.mxu0 0.0
    %4094 = vmatmul.mubr.f32.gmra.mxu0 %v4024
    %v4095 = vpop.f32.mrf.mxu0
    %v4096 = vadd.f32 %v1052, %v4095
    %v4097 = vpop.f32.mrf.mxu0
    %4098 = vdwg.mxu0
    %v4100 = vsel %vm1089, %v3360, 0
    %v4103 = vsel %vm1089, %v3656, 0
    %4105 = vmatprep.subr.mxu0 0.0
    %4106 = vmatpush1.xpose.msra.mxu0 0.0
    %4107 = vmatprep.subr.mxu0 0.0
    %4108 = vmatpush1.xpose.msra.mxu0 0.0
    %4109 = vmatprep.subr.mxu0 0.0
    %4110 = vmatpush1.xpose.msra.mxu0 0.0
    %4111 = vmatprep.subr.mxu0 0.0
    %4112 = vmatpush1.xpose.msra.mxu0 0.0
    %4113 = vmatprep.subr.mxu0 0.0
    %4114 = vmatpush1.xpose.msra.mxu0 0.0
    %4115 = vmatprep.subr.mxu0 0.0
    %4116 = vmatpush1.xpose.msra.mxu0 0.0
    %4117 = vmatprep.subr.mxu0 0.0
    %4118 = vmatpush1.xpose.msra.mxu0 0.0
    %4119 = vmatprep.subr.mxu0 0.0
    %4120 = vmatpush1.xpose.msra.mxu0 0.0
    %4121 = vmatprep.subr.mxu0 0.0
    %4122 = vmatpush1.xpose.msra.mxu0 0.0
    %4123 = vmatprep.subr.mxu0 0.0
    %4124 = vmatpush1.xpose.msra.mxu0 0.0
    %4125 = vmatprep.subr.mxu0 0.0
    %4126 = vmatpush1.xpose.msra.mxu0 0.0
    %4127 = vmatprep.subr.mxu0 0.0
    %4128 = vmatpush1.xpose.msra.mxu0 0.0
    %4129 = vmatprep.subr.mxu0 0.0
    %4130 = vmatpush1.xpose.msra.mxu0 0.0
    %4131 = vmatprep.subr.mxu0 0.0
    %4132 = vmatpush1.xpose.msra.mxu0 0.0
    %4133 = vmatprep.subr.mxu0 0.0
    %4134 = vmatpush1.xpose.msra.mxu0 0.0
    %4135 = vmatprep.subr.mxu0 0.0
    %4136 = vmatpush1.xpose.msra.mxu0 %v4103
    %4137 = vmatprep.subr.mxu0 0.0
    %4138 = vmatpush2.xpose.msra.mxu0 0.0
    %4139 = vmatprep.subr.mxu0 0.0
    %4140 = vmatpush2.xpose.msra.mxu0 0.0
    %4141 = vmatprep.subr.mxu0 0.0
    %4142 = vmatpush2.xpose.msra.mxu0 0.0
    %4143 = vmatprep.subr.mxu0 0.0
    %4144 = vmatpush2.xpose.msra.mxu0 0.0
    %4145 = vmatprep.subr.mxu0 0.0
    %4146 = vmatpush2.xpose.msra.mxu0 0.0
    %4147 = vmatprep.subr.mxu0 0.0
    %4148 = vmatpush2.xpose.msra.mxu0 0.0
    %4149 = vmatprep.subr.mxu0 0.0
    %4150 = vmatpush2.xpose.msra.mxu0 0.0
    %4151 = vmatprep.subr.mxu0 0.0
    %4152 = vmatpush2.xpose.msra.mxu0 0.0
    %4153 = vmatprep.subr.mxu0 0.0
    %4154 = vmatpush2.xpose.msra.mxu0 0.0
    %4155 = vmatprep.subr.mxu0 0.0
    %4156 = vmatpush2.xpose.msra.mxu0 0.0
    %4157 = vmatprep.subr.mxu0 0.0
    %4158 = vmatpush2.xpose.msra.mxu0 0.0
    %4159 = vmatprep.subr.mxu0 0.0
    %4160 = vmatpush2.xpose.msra.mxu0 0.0
    %4161 = vmatprep.subr.mxu0 0.0
    %4162 = vmatpush2.xpose.msra.mxu0 0.0
    %4163 = vmatprep.subr.mxu0 0.0
    %4164 = vmatpush2.xpose.msra.mxu0 0.0
    %4165 = vmatprep.subr.mxu0 0.0
    %4166 = vmatpush2.xpose.msra.mxu0 0.0
    %4167 = vmatprep.subr.mxu0 0.0
    %4168 = vmatpush2.xpose.msra.mxu0 0.0
    %4169 = vmatprep.mubr.f32.mxu0 0.0
    %4170 = vmatmul.mubr.f32.gmra.mxu0 %v4100
    %v4171 = vpop.f32.mrf.mxu0
    %v4172 = vadd.f32 %v1056, %v4171
    %v4173 = vpop.f32.mrf.mxu0
    %4174 = vdwg.mxu0
    %v4176 = vsel %vm1089, %v3361, 0
    %v4179 = vsel %vm1089, %v3657, 0
    %4181 = vmatprep.subr.mxu0 0.0
    %4182 = vmatpush1.xpose.msra.mxu0 0.0
    %4183 = vmatprep.subr.mxu0 0.0
    %4184 = vmatpush1.xpose.msra.mxu0 0.0
    %4185 = vmatprep.subr.mxu0 0.0
    %4186 = vmatpush1.xpose.msra.mxu0 0.0
    %4187 = vmatprep.subr.mxu0 0.0
    %4188 = vmatpush1.xpose.msra.mxu0 0.0
    %4189 = vmatprep.subr.mxu0 0.0
    %4190 = vmatpush1.xpose.msra.mxu0 0.0
    %4191 = vmatprep.subr.mxu0 0.0
    %4192 = vmatpush1.xpose.msra.mxu0 0.0
    %4193 = vmatprep.subr.mxu0 0.0
    %4194 = vmatpush1.xpose.msra.mxu0 0.0
    %4195 = vmatprep.subr.mxu0 0.0
    %4196 = vmatpush1.xpose.msra.mxu0 0.0
    %4197 = vmatprep.subr.mxu0 0.0
    %4198 = vmatpush1.xpose.msra.mxu0 0.0
    %4199 = vmatprep.subr.mxu0 0.0
    %4200 = vmatpush1.xpose.msra.mxu0 0.0
    %4201 = vmatprep.subr.mxu0 0.0
    %4202 = vmatpush1.xpose.msra.mxu0 0.0
    %4203 = vmatprep.subr.mxu0 0.0
    %4204 = vmatpush1.xpose.msra.mxu0 0.0
    %4205 = vmatprep.subr.mxu0 0.0
    %4206 = vmatpush1.xpose.msra.mxu0 0.0
    %4207 = vmatprep.subr.mxu0 0.0
    %4208 = vmatpush1.xpose.msra.mxu0 0.0
    %4209 = vmatprep.subr.mxu0 0.0
    %4210 = vmatpush1.xpose.msra.mxu0 0.0
    %4211 = vmatprep.subr.mxu0 0.0
    %4212 = vmatpush1.xpose.msra.mxu0 %v4179
    %4213 = vmatprep.subr.mxu0 0.0
    %4214 = vmatpush2.xpose.msra.mxu0 0.0
    %4215 = vmatprep.subr.mxu0 0.0
    %4216 = vmatpush2.xpose.msra.mxu0 0.0
    %4217 = vmatprep.subr.mxu0 0.0
    %4218 = vmatpush2.xpose.msra.mxu0 0.0
    %4219 = vmatprep.subr.mxu0 0.0
    %4220 = vmatpush2.xpose.msra.mxu0 0.0
    %4221 = vmatprep.subr.mxu0 0.0
    %4222 = vmatpush2.xpose.msra.mxu0 0.0
    %4223 = vmatprep.subr.mxu0 0.0
    %4224 = vmatpush2.xpose.msra.mxu0 0.0
    %4225 = vmatprep.subr.mxu0 0.0
    %4226 = vmatpush2.xpose.msra.mxu0 0.0
    %4227 = vmatprep.subr.mxu0 0.0
    %4228 = vmatpush2.xpose.msra.mxu0 0.0
    %4229 = vmatprep.subr.mxu0 0.0
    %4230 = vmatpush2.xpose.msra.mxu0 0.0
    %4231 = vmatprep.subr.mxu0 0.0
    %4232 = vmatpush2.xpose.msra.mxu0 0.0
    %4233 = vmatprep.subr.mxu0 0.0
    %4234 = vmatpush2.xpose.msra.mxu0 0.0
    %4235 = vmatprep.subr.mxu0 0.0
    %4236 = vmatpush2.xpose.msra.mxu0 0.0
    %4237 = vmatprep.subr.mxu0 0.0
    %4238 = vmatpush2.xpose.msra.mxu0 0.0
    %4239 = vmatprep.subr.mxu0 0.0
    %4240 = vmatpush2.xpose.msra.mxu0 0.0
    %4241 = vmatprep.subr.mxu0 0.0
    %4242 = vmatpush2.xpose.msra.mxu0 0.0
    %4243 = vmatprep.subr.mxu0 0.0
    %4244 = vmatpush2.xpose.msra.mxu0 0.0
    %4245 = vmatprep.mubr.f32.mxu0 0.0
    %4246 = vmatmul.mubr.f32.gmra.mxu0 %v4176
    %v4247 = vpop.f32.mrf.mxu0
    %v4248 = vadd.f32 %v1060, %v4247
    %v4249 = vpop.f32.mrf.mxu0
    %4250 = vdwg.mxu0
    %v4252 = vsel %vm1089, %v3362, 0
    %v4255 = vsel %vm1089, %v3658, 0
    %4257 = vmatprep.subr.mxu0 0.0
    %4258 = vmatpush1.xpose.msra.mxu0 0.0
    %4259 = vmatprep.subr.mxu0 0.0
    %4260 = vmatpush1.xpose.msra.mxu0 0.0
    %4261 = vmatprep.subr.mxu0 0.0
    %4262 = vmatpush1.xpose.msra.mxu0 0.0
    %4263 = vmatprep.subr.mxu0 0.0
    %4264 = vmatpush1.xpose.msra.mxu0 0.0
    %4265 = vmatprep.subr.mxu0 0.0
    %4266 = vmatpush1.xpose.msra.mxu0 0.0
    %4267 = vmatprep.subr.mxu0 0.0
    %4268 = vmatpush1.xpose.msra.mxu0 0.0
    %4269 = vmatprep.subr.mxu0 0.0
    %4270 = vmatpush1.xpose.msra.mxu0 0.0
    %4271 = vmatprep.subr.mxu0 0.0
    %4272 = vmatpush1.xpose.msra.mxu0 0.0
    %4273 = vmatprep.subr.mxu0 0.0
    %4274 = vmatpush1.xpose.msra.mxu0 0.0
    %4275 = vmatprep.subr.mxu0 0.0
    %4276 = vmatpush1.xpose.msra.mxu0 0.0
    %4277 = vmatprep.subr.mxu0 0.0
    %4278 = vmatpush1.xpose.msra.mxu0 0.0
    %4279 = vmatprep.subr.mxu0 0.0
    %4280 = vmatpush1.xpose.msra.mxu0 0.0
    %4281 = vmatprep.subr.mxu0 0.0
    %4282 = vmatpush1.xpose.msra.mxu0 0.0
    %4283 = vmatprep.subr.mxu0 0.0
    %4284 = vmatpush1.xpose.msra.mxu0 0.0
    %4285 = vmatprep.subr.mxu0 0.0
    %4286 = vmatpush1.xpose.msra.mxu0 0.0
    %4287 = vmatprep.subr.mxu0 0.0
    %4288 = vmatpush1.xpose.msra.mxu0 %v4255
    %4289 = vmatprep.subr.mxu0 0.0
    %4290 = vmatpush2.xpose.msra.mxu0 0.0
    %4291 = vmatprep.subr.mxu0 0.0
    %4292 = vmatpush2.xpose.msra.mxu0 0.0
    %4293 = vmatprep.subr.mxu0 0.0
    %4294 = vmatpush2.xpose.msra.mxu0 0.0
    %4295 = vmatprep.subr.mxu0 0.0
    %4296 = vmatpush2.xpose.msra.mxu0 0.0
    %4297 = vmatprep.subr.mxu0 0.0
    %4298 = vmatpush2.xpose.msra.mxu0 0.0
    %4299 = vmatprep.subr.mxu0 0.0
    %4300 = vmatpush2.xpose.msra.mxu0 0.0
    %4301 = vmatprep.subr.mxu0 0.0
    %4302 = vmatpush2.xpose.msra.mxu0 0.0
    %4303 = vmatprep.subr.mxu0 0.0
    %4304 = vmatpush2.xpose.msra.mxu0 0.0
    %4305 = vmatprep.subr.mxu0 0.0
    %4306 = vmatpush2.xpose.msra.mxu0 0.0
    %4307 = vmatprep.subr.mxu0 0.0
    %4308 = vmatpush2.xpose.msra.mxu0 0.0
    %4309 = vmatprep.subr.mxu0 0.0
    %4310 = vmatpush2.xpose.msra.mxu0 0.0
    %4311 = vmatprep.subr.mxu0 0.0
    %4312 = vmatpush2.xpose.msra.mxu0 0.0
    %4313 = vmatprep.subr.mxu0 0.0
    %4314 = vmatpush2.xpose.msra.mxu0 0.0
    %4315 = vmatprep.subr.mxu0 0.0
    %4316 = vmatpush2.xpose.msra.mxu0 0.0
    %4317 = vmatprep.subr.mxu0 0.0
    %4318 = vmatpush2.xpose.msra.mxu0 0.0
    %4319 = vmatprep.subr.mxu0 0.0
    %4320 = vmatpush2.xpose.msra.mxu0 0.0
    %4321 = vmatprep.mubr.f32.mxu0 0.0
    %4322 = vmatmul.mubr.f32.gmra.mxu0 %v4252
    %v4323 = vpop.f32.mrf.mxu0
    %v4324 = vadd.f32 %v1064, %v4323
    %v4325 = vpop.f32.mrf.mxu0
    %4326 = vdwg.mxu0
    %v4328 = vsel %vm1089, %v3427, 0
    %v4331 = vsel %vm1089, %v3723, 0
    %4333 = vmatprep.subr.mxu0 0.0
    %4334 = vmatpush1.xpose.msra.mxu0 0.0
    %4335 = vmatprep.subr.mxu0 0.0
    %4336 = vmatpush1.xpose.msra.mxu0 0.0
    %4337 = vmatprep.subr.mxu0 0.0
    %4338 = vmatpush1.xpose.msra.mxu0 0.0
    %4339 = vmatprep.subr.mxu0 0.0
    %4340 = vmatpush1.xpose.msra.mxu0 0.0
    %4341 = vmatprep.subr.mxu0 0.0
    %4342 = vmatpush1.xpose.msra.mxu0 0.0
    %4343 = vmatprep.subr.mxu0 0.0
    %4344 = vmatpush1.xpose.msra.mxu0 0.0
    %4345 = vmatprep.subr.mxu0 0.0
    %4346 = vmatpush1.xpose.msra.mxu0 0.0
    %4347 = vmatprep.subr.mxu0 0.0
    %4348 = vmatpush1.xpose.msra.mxu0 0.0
    %4349 = vmatprep.subr.mxu0 0.0
    %4350 = vmatpush1.xpose.msra.mxu0 0.0
    %4351 = vmatprep.subr.mxu0 0.0
    %4352 = vmatpush1.xpose.msra.mxu0 0.0
    %4353 = vmatprep.subr.mxu0 0.0
    %4354 = vmatpush1.xpose.msra.mxu0 0.0
    %4355 = vmatprep.subr.mxu0 0.0
    %4356 = vmatpush1.xpose.msra.mxu0 0.0
    %4357 = vmatprep.subr.mxu0 0.0
    %4358 = vmatpush1.xpose.msra.mxu0 0.0
    %4359 = vmatprep.subr.mxu0 0.0
    %4360 = vmatpush1.xpose.msra.mxu0 0.0
    %4361 = vmatprep.subr.mxu0 0.0
    %4362 = vmatpush1.xpose.msra.mxu0 0.0
    %4363 = vmatprep.subr.mxu0 0.0
    %4364 = vmatpush1.xpose.msra.mxu0 %v4331
    %4365 = vmatprep.subr.mxu0 0.0
    %4366 = vmatpush2.xpose.msra.mxu0 0.0
    %4367 = vmatprep.subr.mxu0 0.0
    %4368 = vmatpush2.xpose.msra.mxu0 0.0
    %4369 = vmatprep.subr.mxu0 0.0
    %4370 = vmatpush2.xpose.msra.mxu0 0.0
    %4371 = vmatprep.subr.mxu0 0.0
    %4372 = vmatpush2.xpose.msra.mxu0 0.0
    %4373 = vmatprep.subr.mxu0 0.0
    %4374 = vmatpush2.xpose.msra.mxu0 0.0
    %4375 = vmatprep.subr.mxu0 0.0
    %4376 = vmatpush2.xpose.msra.mxu0 0.0
    %4377 = vmatprep.subr.mxu0 0.0
    %4378 = vmatpush2.xpose.msra.mxu0 0.0
    %4379 = vmatprep.subr.mxu0 0.0
    %4380 = vmatpush2.xpose.msra.mxu0 0.0
    %4381 = vmatprep.subr.mxu0 0.0
    %4382 = vmatpush2.xpose.msra.mxu0 0.0
    %4383 = vmatprep.subr.mxu0 0.0
    %4384 = vmatpush2.xpose.msra.mxu0 0.0
    %4385 = vmatprep.subr.mxu0 0.0
    %4386 = vmatpush2.xpose.msra.mxu0 0.0
    %4387 = vmatprep.subr.mxu0 0.0
    %4388 = vmatpush2.xpose.msra.mxu0 0.0
    %4389 = vmatprep.subr.mxu0 0.0
    %4390 = vmatpush2.xpose.msra.mxu0 0.0
    %4391 = vmatprep.subr.mxu0 0.0
    %4392 = vmatpush2.xpose.msra.mxu0 0.0
    %4393 = vmatprep.subr.mxu0 0.0
    %4394 = vmatpush2.xpose.msra.mxu0 0.0
    %4395 = vmatprep.subr.mxu0 0.0
    %4396 = vmatpush2.xpose.msra.mxu0 0.0
    %4397 = vmatprep.mubr.f32.mxu0 0.0
    %4398 = vmatmul.mubr.f32.gmra.mxu0 %v4328
    %v4399 = vpop.f32.mrf.mxu0
    %v4400 = vadd.f32 %v1068, %v4399
    %v4401 = vpop.f32.mrf.mxu0
    %4402 = vdwg.mxu0
    %v4404 = vsel %vm1089, %v3428, 0
    %v4407 = vsel %vm1089, %v3724, 0
    %4409 = vmatprep.subr.mxu0 0.0
    %4410 = vmatpush1.xpose.msra.mxu0 0.0
    %4411 = vmatprep.subr.mxu0 0.0
    %4412 = vmatpush1.xpose.msra.mxu0 0.0
    %4413 = vmatprep.subr.mxu0 0.0
    %4414 = vmatpush1.xpose.msra.mxu0 0.0
    %4415 = vmatprep.subr.mxu0 0.0
    %4416 = vmatpush1.xpose.msra.mxu0 0.0
    %4417 = vmatprep.subr.mxu0 0.0
    %4418 = vmatpush1.xpose.msra.mxu0 0.0
    %4419 = vmatprep.subr.mxu0 0.0
    %4420 = vmatpush1.xpose.msra.mxu0 0.0
    %4421 = vmatprep.subr.mxu0 0.0
    %4422 = vmatpush1.xpose.msra.mxu0 0.0
    %4423 = vmatprep.subr.mxu0 0.0
    %4424 = vmatpush1.xpose.msra.mxu0 0.0
    %4425 = vmatprep.subr.mxu0 0.0
    %4426 = vmatpush1.xpose.msra.mxu0 0.0
    %4427 = vmatprep.subr.mxu0 0.0
    %4428 = vmatpush1.xpose.msra.mxu0 0.0
    %4429 = vmatprep.subr.mxu0 0.0
    %4430 = vmatpush1.xpose.msra.mxu0 0.0
    %4431 = vmatprep.subr.mxu0 0.0
    %4432 = vmatpush1.xpose.msra.mxu0 0.0
    %4433 = vmatprep.subr.mxu0 0.0
    %4434 = vmatpush1.xpose.msra.mxu0 0.0
    %4435 = vmatprep.subr.mxu0 0.0
    %4436 = vmatpush1.xpose.msra.mxu0 0.0
    %4437 = vmatprep.subr.mxu0 0.0
    %4438 = vmatpush1.xpose.msra.mxu0 0.0
    %4439 = vmatprep.subr.mxu0 0.0
    %4440 = vmatpush1.xpose.msra.mxu0 %v4407
    %4441 = vmatprep.subr.mxu0 0.0
    %4442 = vmatpush2.xpose.msra.mxu0 0.0
    %4443 = vmatprep.subr.mxu0 0.0
    %4444 = vmatpush2.xpose.msra.mxu0 0.0
    %4445 = vmatprep.subr.mxu0 0.0
    %4446 = vmatpush2.xpose.msra.mxu0 0.0
    %4447 = vmatprep.subr.mxu0 0.0
    %4448 = vmatpush2.xpose.msra.mxu0 0.0
    %4449 = vmatprep.subr.mxu0 0.0
    %4450 = vmatpush2.xpose.msra.mxu0 0.0
    %4451 = vmatprep.subr.mxu0 0.0
    %4452 = vmatpush2.xpose.msra.mxu0 0.0
    %4453 = vmatprep.subr.mxu0 0.0
    %4454 = vmatpush2.xpose.msra.mxu0 0.0
    %4455 = vmatprep.subr.mxu0 0.0
    %4456 = vmatpush2.xpose.msra.mxu0 0.0
    %4457 = vmatprep.subr.mxu0 0.0
    %4458 = vmatpush2.xpose.msra.mxu0 0.0
    %4459 = vmatprep.subr.mxu0 0.0
    %4460 = vmatpush2.xpose.msra.mxu0 0.0
    %4461 = vmatprep.subr.mxu0 0.0
    %4462 = vmatpush2.xpose.msra.mxu0 0.0
    %4463 = vmatprep.subr.mxu0 0.0
    %4464 = vmatpush2.xpose.msra.mxu0 0.0
    %4465 = vmatprep.subr.mxu0 0.0
    %4466 = vmatpush2.xpose.msra.mxu0 0.0
    %4467 = vmatprep.subr.mxu0 0.0
    %4468 = vmatpush2.xpose.msra.mxu0 0.0
    %4469 = vmatprep.subr.mxu0 0.0
    %4470 = vmatpush2.xpose.msra.mxu0 0.0
    %4471 = vmatprep.subr.mxu0 0.0
    %4472 = vmatpush2.xpose.msra.mxu0 0.0
    %4473 = vmatprep.mubr.f32.mxu0 0.0
    %4474 = vmatmul.mubr.f32.gmra.mxu0 %v4404
    %v4475 = vpop.f32.mrf.mxu0
    %v4476 = vadd.f32 %v1072, %v4475
    %v4477 = vpop.f32.mrf.mxu0
    %4478 = vdwg.mxu0
    %v4480 = vsel %vm1089, %v3429, 0
    %v4483 = vsel %vm1089, %v3725, 0
    %4485 = vmatprep.subr.mxu0 0.0
    %4486 = vmatpush1.xpose.msra.mxu0 0.0
    %4487 = vmatprep.subr.mxu0 0.0
    %4488 = vmatpush1.xpose.msra.mxu0 0.0
    %4489 = vmatprep.subr.mxu0 0.0
    %4490 = vmatpush1.xpose.msra.mxu0 0.0
    %4491 = vmatprep.subr.mxu0 0.0
    %4492 = vmatpush1.xpose.msra.mxu0 0.0
    %4493 = vmatprep.subr.mxu0 0.0
    %4494 = vmatpush1.xpose.msra.mxu0 0.0
    %4495 = vmatprep.subr.mxu0 0.0
    %4496 = vmatpush1.xpose.msra.mxu0 0.0
    %4497 = vmatprep.subr.mxu0 0.0
    %4498 = vmatpush1.xpose.msra.mxu0 0.0
    %4499 = vmatprep.subr.mxu0 0.0
    %4500 = vmatpush1.xpose.msra.mxu0 0.0
    %4501 = vmatprep.subr.mxu0 0.0
    %4502 = vmatpush1.xpose.msra.mxu0 0.0
    %4503 = vmatprep.subr.mxu0 0.0
    %4504 = vmatpush1.xpose.msra.mxu0 0.0
    %4505 = vmatprep.subr.mxu0 0.0
    %4506 = vmatpush1.xpose.msra.mxu0 0.0
    %4507 = vmatprep.subr.mxu0 0.0
    %4508 = vmatpush1.xpose.msra.mxu0 0.0
    %4509 = vmatprep.subr.mxu0 0.0
    %4510 = vmatpush1.xpose.msra.mxu0 0.0
    %4511 = vmatprep.subr.mxu0 0.0
    %4512 = vmatpush1.xpose.msra.mxu0 0.0
    %4513 = vmatprep.subr.mxu0 0.0
    %4514 = vmatpush1.xpose.msra.mxu0 0.0
    %4515 = vmatprep.subr.mxu0 0.0
    %4516 = vmatpush1.xpose.msra.mxu0 %v4483
    %4517 = vmatprep.subr.mxu0 0.0
    %4518 = vmatpush2.xpose.msra.mxu0 0.0
    %4519 = vmatprep.subr.mxu0 0.0
    %4520 = vmatpush2.xpose.msra.mxu0 0.0
    %4521 = vmatprep.subr.mxu0 0.0
    %4522 = vmatpush2.xpose.msra.mxu0 0.0
    %4523 = vmatprep.subr.mxu0 0.0
    %4524 = vmatpush2.xpose.msra.mxu0 0.0
    %4525 = vmatprep.subr.mxu0 0.0
    %4526 = vmatpush2.xpose.msra.mxu0 0.0
    %4527 = vmatprep.subr.mxu0 0.0
    %4528 = vmatpush2.xpose.msra.mxu0 0.0
    %4529 = vmatprep.subr.mxu0 0.0
    %4530 = vmatpush2.xpose.msra.mxu0 0.0
    %4531 = vmatprep.subr.mxu0 0.0
    %4532 = vmatpush2.xpose.msra.mxu0 0.0
    %4533 = vmatprep.subr.mxu0 0.0
    %4534 = vmatpush2.xpose.msra.mxu0 0.0
    %4535 = vmatprep.subr.mxu0 0.0
    %4536 = vmatpush2.xpose.msra.mxu0 0.0
    %4537 = vmatprep.subr.mxu0 0.0
    %4538 = vmatpush2.xpose.msra.mxu0 0.0
    %4539 = vmatprep.subr.mxu0 0.0
    %4540 = vmatpush2.xpose.msra.mxu0 0.0
    %4541 = vmatprep.subr.mxu0 0.0
    %4542 = vmatpush2.xpose.msra.mxu0 0.0
    %4543 = vmatprep.subr.mxu0 0.0
    %4544 = vmatpush2.xpose.msra.mxu0 0.0
    %4545 = vmatprep.subr.mxu0 0.0
    %4546 = vmatpush2.xpose.msra.mxu0 0.0
    %4547 = vmatprep.subr.mxu0 0.0
    %4548 = vmatpush2.xpose.msra.mxu0 0.0
    %4549 = vmatprep.mubr.f32.mxu0 0.0
    %4550 = vmatmul.mubr.f32.gmra.mxu0 %v4480
    %v4551 = vpop.f32.mrf.mxu0
    %v4552 = vadd.f32 %v1076, %v4551
    %v4553 = vpop.f32.mrf.mxu0
    %4554 = vdwg.mxu0
    %v4556 = vsel %vm1089, %v3430, 0
    %v4559 = vsel %vm1089, %v3726, 0
    %4561 = vmatprep.subr.mxu0 0.0
    %4562 = vmatpush1.xpose.msra.mxu0 0.0
    %4563 = vmatprep.subr.mxu0 0.0
    %4564 = vmatpush1.xpose.msra.mxu0 0.0
    %4565 = vmatprep.subr.mxu0 0.0
    %4566 = vmatpush1.xpose.msra.mxu0 0.0
    %4567 = vmatprep.subr.mxu0 0.0
    %4568 = vmatpush1.xpose.msra.mxu0 0.0
    %4569 = vmatprep.subr.mxu0 0.0
    %4570 = vmatpush1.xpose.msra.mxu0 0.0
    %4571 = vmatprep.subr.mxu0 0.0
    %4572 = vmatpush1.xpose.msra.mxu0 0.0
    %4573 = vmatprep.subr.mxu0 0.0
    %4574 = vmatpush1.xpose.msra.mxu0 0.0
    %4575 = vmatprep.subr.mxu0 0.0
    %4576 = vmatpush1.xpose.msra.mxu0 0.0
    %4577 = vmatprep.subr.mxu0 0.0
    %4578 = vmatpush1.xpose.msra.mxu0 0.0
    %4579 = vmatprep.subr.mxu0 0.0
    %4580 = vmatpush1.xpose.msra.mxu0 0.0
    %4581 = vmatprep.subr.mxu0 0.0
    %4582 = vmatpush1.xpose.msra.mxu0 0.0
    %4583 = vmatprep.subr.mxu0 0.0
    %4584 = vmatpush1.xpose.msra.mxu0 0.0
    %4585 = vmatprep.subr.mxu0 0.0
    %4586 = vmatpush1.xpose.msra.mxu0 0.0
    %4587 = vmatprep.subr.mxu0 0.0
    %4588 = vmatpush1.xpose.msra.mxu0 0.0
    %4589 = vmatprep.subr.mxu0 0.0
    %4590 = vmatpush1.xpose.msra.mxu0 0.0
    %4591 = vmatprep.subr.mxu0 0.0
    %4592 = vmatpush1.xpose.msra.mxu0 %v4559
    %4593 = vmatprep.subr.mxu0 0.0
    %4594 = vmatpush2.xpose.msra.mxu0 0.0
    %4595 = vmatprep.subr.mxu0 0.0
    %4596 = vmatpush2.xpose.msra.mxu0 0.0
    %4597 = vmatprep.subr.mxu0 0.0
    %4598 = vmatpush2.xpose.msra.mxu0 0.0
    %4599 = vmatprep.subr.mxu0 0.0
    %4600 = vmatpush2.xpose.msra.mxu0 0.0
    %4601 = vmatprep.subr.mxu0 0.0
    %4602 = vmatpush2.xpose.msra.mxu0 0.0
    %4603 = vmatprep.subr.mxu0 0.0
    %4604 = vmatpush2.xpose.msra.mxu0 0.0
    %4605 = vmatprep.subr.mxu0 0.0
    %4606 = vmatpush2.xpose.msra.mxu0 0.0
    %4607 = vmatprep.subr.mxu0 0.0
    %4608 = vmatpush2.xpose.msra.mxu0 0.0
    %4609 = vmatprep.subr.mxu0 0.0
    %4610 = vmatpush2.xpose.msra.mxu0 0.0
    %4611 = vmatprep.subr.mxu0 0.0
    %4612 = vmatpush2.xpose.msra.mxu0 0.0
    %4613 = vmatprep.subr.mxu0 0.0
    %4614 = vmatpush2.xpose.msra.mxu0 0.0
    %4615 = vmatprep.subr.mxu0 0.0
    %4616 = vmatpush2.xpose.msra.mxu0 0.0
    %4617 = vmatprep.subr.mxu0 0.0
    %4618 = vmatpush2.xpose.msra.mxu0 0.0
    %4619 = vmatprep.subr.mxu0 0.0
    %4620 = vmatpush2.xpose.msra.mxu0 0.0
    %4621 = vmatprep.subr.mxu0 0.0
    %4622 = vmatpush2.xpose.msra.mxu0 0.0
    %4623 = vmatprep.subr.mxu0 0.0
    %4624 = vmatpush2.xpose.msra.mxu0 0.0
    %4625 = vmatprep.mubr.f32.mxu0 0.0
    %4626 = vmatmul.mubr.f32.gmra.mxu0 %v4556
    %v4627 = vpop.f32.mrf.mxu0
    %v4628 = vadd.f32 %v1080, %v4627
    %v4629 = vpop.f32.mrf.mxu0
    %4630 = vdwg.mxu0
    %v4631 = vsel %vm1089, %v4096, -inf
    %4632 = vmax.xlane.f32.xlu0 %v4631
    %v4633 = vpop.xlane.xlu0 %4632
    %v4634 = vsel %vm1089, %v4172, -inf
    %4635 = vmax.xlane.f32.xlu0 %v4634
    %v4636 = vpop.xlane.xlu0 %4635
    %v4637 = vsel %vm1089, %v4248, -inf
    %4638 = vmax.xlane.f32.xlu0 %v4637
    %v4639 = vpop.xlane.xlu0 %4638
    %v4640 = vsel %vm1089, %v4324, -inf
    %4641 = vmax.xlane.f32.xlu0 %v4640
    %v4642 = vpop.xlane.xlu0 %4641
    %v4643 = vsel %vm1089, %v4400, -inf
    %4644 = vmax.xlane.f32.xlu0 %v4643
    %v4645 = vpop.xlane.xlu0 %4644
    %v4646 = vsel %vm1089, %v4476, -inf
    %4647 = vmax.xlane.f32.xlu0 %v4646
    %v4648 = vpop.xlane.xlu0 %4647
    %v4649 = vsel %vm1089, %v4552, -inf
    %4650 = vmax.xlane.f32.xlu0 %v4649
    %v4651 = vpop.xlane.xlu0 %4650
    %v4652 = vsel %vm1089, %v4628, -inf
    %4653 = vmax.xlane.f32.xlu0 %v4652
    %v4654 = vpop.xlane.xlu0 %4653
    %v4655 = vsub.f32 %v4096, %v4633
    %v4656 = vsub.f32 %v4172, %v4636
    %v4657 = vsub.f32 %v4248, %v4639
    %v4658 = vsub.f32 %v4324, %v4642
    %v4659 = vsub.f32 %v4400, %v4645
    %v4660 = vsub.f32 %v4476, %v4648
    %v4661 = vsub.f32 %v4552, %v4651
    %v4662 = vsub.f32 %v4628, %v4654
    %v4663 = vmul.f32 %v4655, 1.442695
    %v4664 = vpow.pop %v4663
    %v4665 = vmul.f32 %v4656, 1.442695
    %v4666 = vpow.pop %v4665
    %v4667 = vmul.f32 %v4657, 1.442695
    %v4668 = vpow.pop %v4667
    %v4669 = vmul.f32 %v4658, 1.442695
    %v4670 = vpow.pop %v4669
    %v4671 = vmul.f32 %v4659, 1.442695
    %v4672 = vpow.pop %v4671
    %v4673 = vmul.f32 %v4660, 1.442695
    %v4674 = vpow.pop %v4673
    %v4675 = vmul.f32 %v4661, 1.442695
    %v4676 = vpow.pop %v4675
    %v4677 = vmul.f32 %v4662, 1.442695
    %v4678 = vpow.pop %v4677
    %v4679 = vsel %vm1089, %v4664, 0.0
    %4680 = vadd.xlane.f32.xlu0 %v4679
    %v4681 = vpop.xlane.xlu0 %4680
    %v4682 = vsel %vm1089, %v4666, 0.0
    %4683 = vadd.xlane.f32.xlu0 %v4682
    %v4684 = vpop.xlane.xlu0 %4683
    %v4685 = vsel %vm1089, %v4668, 0.0
    %4686 = vadd.xlane.f32.xlu0 %v4685
    %v4687 = vpop.xlane.xlu0 %4686
    %v4688 = vsel %vm1089, %v4670, 0.0
    %4689 = vadd.xlane.f32.xlu0 %v4688
    %v4690 = vpop.xlane.xlu0 %4689
    %v4691 = vsel %vm1089, %v4672, 0.0
    %4692 = vadd.xlane.f32.xlu0 %v4691
    %v4693 = vpop.xlane.xlu0 %4692
    %v4694 = vsel %vm1089, %v4674, 0.0
    %4695 = vadd.xlane.f32.xlu0 %v4694
    %v4696 = vpop.xlane.xlu0 %4695
    %v4697 = vsel %vm1089, %v4676, 0.0
    %4698 = vadd.xlane.f32.xlu0 %v4697
    %v4699 = vpop.xlane.xlu0 %4698
    %v4700 = vsel %vm1089, %v4678, 0.0
    %4701 = vadd.xlane.f32.xlu0 %v4700
    %v4702 = vpop.xlane.xlu0 %4701
    %v4703 = vrcp.pop %v4681
    %v4704 = vmul.f32 %v4664, %v4703
    %v4705 = vrcp.pop %v4684
    %v4706 = vmul.f32 %v4666, %v4705
    %v4707 = vrcp.pop %v4687
    %v4708 = vmul.f32 %v4668, %v4707
    %v4709 = vrcp.pop %v4690
    %v4710 = vmul.f32 %v4670, %v4709
    %v4711 = vrcp.pop %v4693
    %v4712 = vmul.f32 %v4672, %v4711
    %v4713 = vrcp.pop %v4696
    %v4714 = vmul.f32 %v4674, %v4713
    %v4715 = vrcp.pop %v4699
    %v4716 = vmul.f32 %v4676, %v4715
    %v4717 = vrcp.pop %v4702
    %v4718 = vmul.f32 %v4678, %v4717
    %v4720 = vsel %vm1089, %v4704, 0
    %4722 = vmatprep.subr.mxu0 0.0
    %4723 = vmatpush1.msra.mxu0 0.0
    %4724 = vmatprep.subr.mxu0 0.0
    %4725 = vmatpush1.msra.mxu0 0.0
    %4726 = vmatprep.subr.mxu0 0.0
    %4727 = vmatpush1.msra.mxu0 0.0
    %4728 = vmatprep.subr.mxu0 0.0
    %4729 = vmatpush1.msra.mxu0 0.0
    %4730 = vmatprep.subr.mxu0 0.0
    %4731 = vmatpush1.msra.mxu0 0.0
    %4732 = vmatprep.subr.mxu0 0.0
    %4733 = vmatpush1.msra.mxu0 0.0
    %4734 = vmatprep.subr.mxu0 0.0
    %4735 = vmatpush1.msra.mxu0 0.0
    %4736 = vmatprep.subr.mxu0 0.0
    %4737 = vmatpush1.msra.mxu0 0.0
    %4738 = vmatprep.subr.mxu0 0.0
    %4739 = vmatpush1.msra.mxu0 0.0
    %4740 = vmatprep.subr.mxu0 0.0
    %4741 = vmatpush1.msra.mxu0 0.0
    %4742 = vmatprep.subr.mxu0 0.0
    %4743 = vmatpush1.msra.mxu0 0.0
    %4744 = vmatprep.subr.mxu0 0.0
    %4745 = vmatpush1.msra.mxu0 0.0
    %4746 = vmatprep.subr.mxu0 0.0
    %4747 = vmatpush1.msra.mxu0 0.0
    %4748 = vmatprep.subr.mxu0 0.0
    %4749 = vmatpush1.msra.mxu0 0.0
    %4750 = vmatprep.subr.mxu0 0.0
    %4751 = vmatpush1.msra.mxu0 0.0
    %4752 = vmatprep.subr.mxu0 0.0
    %4753 = vmatpush1.msra.mxu0 %v3951
    %4754 = vmatprep.subr.mxu0 0.0
    %4755 = vmatpush2.msra.mxu0 0.0
    %4756 = vmatprep.subr.mxu0 0.0
    %4757 = vmatpush2.msra.mxu0 0.0
    %4758 = vmatprep.subr.mxu0 0.0
    %4759 = vmatpush2.msra.mxu0 0.0
    %4760 = vmatprep.subr.mxu0 0.0
    %4761 = vmatpush2.msra.mxu0 0.0
    %4762 = vmatprep.subr.mxu0 0.0
    %4763 = vmatpush2.msra.mxu0 0.0
    %4764 = vmatprep.subr.mxu0 0.0
    %4765 = vmatpush2.msra.mxu0 0.0
    %4766 = vmatprep.subr.mxu0 0.0
    %4767 = vmatpush2.msra.mxu0 0.0
    %4768 = vmatprep.subr.mxu0 0.0
    %4769 = vmatpush2.msra.mxu0 0.0
    %4770 = vmatprep.subr.mxu0 0.0
    %4771 = vmatpush2.msra.mxu0 0.0
    %4772 = vmatprep.subr.mxu0 0.0
    %4773 = vmatpush2.msra.mxu0 0.0
    %4774 = vmatprep.subr.mxu0 0.0
    %4775 = vmatpush2.msra.mxu0 0.0
    %4776 = vmatprep.subr.mxu0 0.0
    %4777 = vmatpush2.msra.mxu0 0.0
    %4778 = vmatprep.subr.mxu0 0.0
    %4779 = vmatpush2.msra.mxu0 0.0
    %4780 = vmatprep.subr.mxu0 0.0
    %4781 = vmatpush2.msra.mxu0 0.0
    %4782 = vmatprep.subr.mxu0 0.0
    %4783 = vmatpush2.msra.mxu0 0.0
    %4784 = vmatprep.subr.mxu0 0.0
    %4785 = vmatpush2.msra.mxu0 0.0
    %4786 = vmatprep.mubr.f32.mxu0 0.0
    %4787 = vmatmul.mubr.f32.gmra.mxu0 %v4720
    %v4788 = vpop.f32.mrf.mxu0
    %v4789 = vadd.f32 0.0, %v4788
    %v4790 = vpop.f32.mrf.mxu0
    %4791 = vdwg.mxu0
    %v4793 = vsel %vm1089, %v4706, 0
    %4795 = vmatprep.subr.mxu0 0.0
    %4796 = vmatpush1.msra.mxu0 0.0
    %4797 = vmatprep.subr.mxu0 0.0
    %4798 = vmatpush1.msra.mxu0 0.0
    %4799 = vmatprep.subr.mxu0 0.0
    %4800 = vmatpush1.msra.mxu0 0.0
    %4801 = vmatprep.subr.mxu0 0.0
    %4802 = vmatpush1.msra.mxu0 0.0
    %4803 = vmatprep.subr.mxu0 0.0
    %4804 = vmatpush1.msra.mxu0 0.0
    %4805 = vmatprep.subr.mxu0 0.0
    %4806 = vmatpush1.msra.mxu0 0.0
    %4807 = vmatprep.subr.mxu0 0.0
    %4808 = vmatpush1.msra.mxu0 0.0
    %4809 = vmatprep.subr.mxu0 0.0
    %4810 = vmatpush1.msra.mxu0 0.0
    %4811 = vmatprep.subr.mxu0 0.0
    %4812 = vmatpush1.msra.mxu0 0.0
    %4813 = vmatprep.subr.mxu0 0.0
    %4814 = vmatpush1.msra.mxu0 0.0
    %4815 = vmatprep.subr.mxu0 0.0
    %4816 = vmatpush1.msra.mxu0 0.0
    %4817 = vmatprep.subr.mxu0 0.0
    %4818 = vmatpush1.msra.mxu0 0.0
    %4819 = vmatprep.subr.mxu0 0.0
    %4820 = vmatpush1.msra.mxu0 0.0
    %4821 = vmatprep.subr.mxu0 0.0
    %4822 = vmatpush1.msra.mxu0 0.0
    %4823 = vmatprep.subr.mxu0 0.0
    %4824 = vmatpush1.msra.mxu0 0.0
    %4825 = vmatprep.subr.mxu0 0.0
    %4826 = vmatpush1.msra.mxu0 %v3952
    %4827 = vmatprep.subr.mxu0 0.0
    %4828 = vmatpush2.msra.mxu0 0.0
    %4829 = vmatprep.subr.mxu0 0.0
    %4830 = vmatpush2.msra.mxu0 0.0
    %4831 = vmatprep.subr.mxu0 0.0
    %4832 = vmatpush2.msra.mxu0 0.0
    %4833 = vmatprep.subr.mxu0 0.0
    %4834 = vmatpush2.msra.mxu0 0.0
    %4835 = vmatprep.subr.mxu0 0.0
    %4836 = vmatpush2.msra.mxu0 0.0
    %4837 = vmatprep.subr.mxu0 0.0
    %4838 = vmatpush2.msra.mxu0 0.0
    %4839 = vmatprep.subr.mxu0 0.0
    %4840 = vmatpush2.msra.mxu0 0.0
    %4841 = vmatprep.subr.mxu0 0.0
    %4842 = vmatpush2.msra.mxu0 0.0
    %4843 = vmatprep.subr.mxu0 0.0
    %4844 = vmatpush2.msra.mxu0 0.0
    %4845 = vmatprep.subr.mxu0 0.0
    %4846 = vmatpush2.msra.mxu0 0.0
    %4847 = vmatprep.subr.mxu0 0.0
    %4848 = vmatpush2.msra.mxu0 0.0
    %4849 = vmatprep.subr.mxu0 0.0
    %4850 = vmatpush2.msra.mxu0 0.0
    %4851 = vmatprep.subr.mxu0 0.0
    %4852 = vmatpush2.msra.mxu0 0.0
    %4853 = vmatprep.subr.mxu0 0.0
    %4854 = vmatpush2.msra.mxu0 0.0
    %4855 = vmatprep.subr.mxu0 0.0
    %4856 = vmatpush2.msra.mxu0 0.0
    %4857 = vmatprep.subr.mxu0 0.0
    %4858 = vmatpush2.msra.mxu0 0.0
    %4859 = vmatprep.mubr.f32.mxu0 0.0
    %4860 = vmatmul.mubr.f32.gmra.mxu0 %v4793
    %v4861 = vpop.f32.mrf.mxu0
    %v4862 = vadd.f32 0.0, %v4861
    %v4863 = vpop.f32.mrf.mxu0
    %4864 = vdwg.mxu0
    %v4866 = vsel %vm1089, %v4708, 0
    %4868 = vmatprep.subr.mxu0 0.0
    %4869 = vmatpush1.msra.mxu0 0.0
    %4870 = vmatprep.subr.mxu0 0.0
    %4871 = vmatpush1.msra.mxu0 0.0
    %4872 = vmatprep.subr.mxu0 0.0
    %4873 = vmatpush1.msra.mxu0 0.0
    %4874 = vmatprep.subr.mxu0 0.0
    %4875 = vmatpush1.msra.mxu0 0.0
    %4876 = vmatprep.subr.mxu0 0.0
    %4877 = vmatpush1.msra.mxu0 0.0
    %4878 = vmatprep.subr.mxu0 0.0
    %4879 = vmatpush1.msra.mxu0 0.0
    %4880 = vmatprep.subr.mxu0 0.0
    %4881 = vmatpush1.msra.mxu0 0.0
    %4882 = vmatprep.subr.mxu0 0.0
    %4883 = vmatpush1.msra.mxu0 0.0
    %4884 = vmatprep.subr.mxu0 0.0
    %4885 = vmatpush1.msra.mxu0 0.0
    %4886 = vmatprep.subr.mxu0 0.0
    %4887 = vmatpush1.msra.mxu0 0.0
    %4888 = vmatprep.subr.mxu0 0.0
    %4889 = vmatpush1.msra.mxu0 0.0
    %4890 = vmatprep.subr.mxu0 0.0
    %4891 = vmatpush1.msra.mxu0 0.0
    %4892 = vmatprep.subr.mxu0 0.0
    %4893 = vmatpush1.msra.mxu0 0.0
    %4894 = vmatprep.subr.mxu0 0.0
    %4895 = vmatpush1.msra.mxu0 0.0
    %4896 = vmatprep.subr.mxu0 0.0
    %4897 = vmatpush1.msra.mxu0 0.0
    %4898 = vmatprep.subr.mxu0 0.0
    %4899 = vmatpush1.msra.mxu0 %v3953
    %4900 = vmatprep.subr.mxu0 0.0
    %4901 = vmatpush2.msra.mxu0 0.0
    %4902 = vmatprep.subr.mxu0 0.0
    %4903 = vmatpush2.msra.mxu0 0.0
    %4904 = vmatprep.subr.mxu0 0.0
    %4905 = vmatpush2.msra.mxu0 0.0
    %4906 = vmatprep.subr.mxu0 0.0
    %4907 = vmatpush2.msra.mxu0 0.0
    %4908 = vmatprep.subr.mxu0 0.0
    %4909 = vmatpush2.msra.mxu0 0.0
    %4910 = vmatprep.subr.mxu0 0.0
    %4911 = vmatpush2.msra.mxu0 0.0
    %4912 = vmatprep.subr.mxu0 0.0
    %4913 = vmatpush2.msra.mxu0 0.0
    %4914 = vmatprep.subr.mxu0 0.0
    %4915 = vmatpush2.msra.mxu0 0.0
    %4916 = vmatprep.subr.mxu0 0.0
    %4917 = vmatpush2.msra.mxu0 0.0
    %4918 = vmatprep.subr.mxu0 0.0
    %4919 = vmatpush2.msra.mxu0 0.0
    %4920 = vmatprep.subr.mxu0 0.0
    %4921 = vmatpush2.msra.mxu0 0.0
    %4922 = vmatprep.subr.mxu0 0.0
    %4923 = vmatpush2.msra.mxu0 0.0
    %4924 = vmatprep.subr.mxu0 0.0
    %4925 = vmatpush2.msra.mxu0 0.0
    %4926 = vmatprep.subr.mxu0 0.0
    %4927 = vmatpush2.msra.mxu0 0.0
    %4928 = vmatprep.subr.mxu0 0.0
    %4929 = vmatpush2.msra.mxu0 0.0
    %4930 = vmatprep.subr.mxu0 0.0
    %4931 = vmatpush2.msra.mxu0 0.0
    %4932 = vmatprep.mubr.f32.mxu0 0.0
    %4933 = vmatmul.mubr.f32.gmra.mxu0 %v4866
    %v4934 = vpop.f32.mrf.mxu0
    %v4935 = vadd.f32 0.0, %v4934
    %v4936 = vpop.f32.mrf.mxu0
    %4937 = vdwg.mxu0
    %v4939 = vsel %vm1089, %v4710, 0
    %4941 = vmatprep.subr.mxu0 0.0
    %4942 = vmatpush1.msra.mxu0 0.0
    %4943 = vmatprep.subr.mxu0 0.0
    %4944 = vmatpush1.msra.mxu0 0.0
    %4945 = vmatprep.subr.mxu0 0.0
    %4946 = vmatpush1.msra.mxu0 0.0
    %4947 = vmatprep.subr.mxu0 0.0
    %4948 = vmatpush1.msra.mxu0 0.0
    %4949 = vmatprep.subr.mxu0 0.0
    %4950 = vmatpush1.msra.mxu0 0.0
    %4951 = vmatprep.subr.mxu0 0.0
    %4952 = vmatpush1.msra.mxu0 0.0
    %4953 = vmatprep.subr.mxu0 0.0
    %4954 = vmatpush1.msra.mxu0 0.0
    %4955 = vmatprep.subr.mxu0 0.0
    %4956 = vmatpush1.msra.mxu0 0.0
    %4957 = vmatprep.subr.mxu0 0.0
    %4958 = vmatpush1.msra.mxu0 0.0
    %4959 = vmatprep.subr.mxu0 0.0
    %4960 = vmatpush1.msra.mxu0 0.0
    %4961 = vmatprep.subr.mxu0 0.0
    %4962 = vmatpush1.msra.mxu0 0.0
    %4963 = vmatprep.subr.mxu0 0.0
    %4964 = vmatpush1.msra.mxu0 0.0
    %4965 = vmatprep.subr.mxu0 0.0
    %4966 = vmatpush1.msra.mxu0 0.0
    %4967 = vmatprep.subr.mxu0 0.0
    %4968 = vmatpush1.msra.mxu0 0.0
    %4969 = vmatprep.subr.mxu0 0.0
    %4970 = vmatpush1.msra.mxu0 0.0
    %4971 = vmatprep.subr.mxu0 0.0
    %4972 = vmatpush1.msra.mxu0 %v3954
    %4973 = vmatprep.subr.mxu0 0.0
    %4974 = vmatpush2.msra.mxu0 0.0
    %4975 = vmatprep.subr.mxu0 0.0
    %4976 = vmatpush2.msra.mxu0 0.0
    %4977 = vmatprep.subr.mxu0 0.0
    %4978 = vmatpush2.msra.mxu0 0.0
    %4979 = vmatprep.subr.mxu0 0.0
    %4980 = vmatpush2.msra.mxu0 0.0
    %4981 = vmatprep.subr.mxu0 0.0
    %4982 = vmatpush2.msra.mxu0 0.0
    %4983 = vmatprep.subr.mxu0 0.0
    %4984 = vmatpush2.msra.mxu0 0.0
    %4985 = vmatprep.subr.mxu0 0.0
    %4986 = vmatpush2.msra.mxu0 0.0
    %4987 = vmatprep.subr.mxu0 0.0
    %4988 = vmatpush2.msra.mxu0 0.0
    %4989 = vmatprep.subr.mxu0 0.0
    %4990 = vmatpush2.msra.mxu0 0.0
    %4991 = vmatprep.subr.mxu0 0.0
    %4992 = vmatpush2.msra.mxu0 0.0
    %4993 = vmatprep.subr.mxu0 0.0
    %4994 = vmatpush2.msra.mxu0 0.0
    %4995 = vmatprep.subr.mxu0 0.0
    %4996 = vmatpush2.msra.mxu0 0.0
    %4997 = vmatprep.subr.mxu0 0.0
    %4998 = vmatpush2.msra.mxu0 0.0
    %4999 = vmatprep.subr.mxu0 0.0
    %5000 = vmatpush2.msra.mxu0 0.0
    %5001 = vmatprep.subr.mxu0 0.0
    %5002 = vmatpush2.msra.mxu0 0.0
    %5003 = vmatprep.subr.mxu0 0.0
    %5004 = vmatpush2.msra.mxu0 0.0
    %5005 = vmatprep.mubr.f32.mxu0 0.0
    %5006 = vmatmul.mubr.f32.gmra.mxu0 %v4939
    %v5007 = vpop.f32.mrf.mxu0
    %v5008 = vadd.f32 0.0, %v5007
    %v5009 = vpop.f32.mrf.mxu0
    %5010 = vdwg.mxu0
    %v5012 = vsel %vm1089, %v4712, 0
    %5014 = vmatprep.subr.mxu0 0.0
    %5015 = vmatpush1.msra.mxu0 0.0
    %5016 = vmatprep.subr.mxu0 0.0
    %5017 = vmatpush1.msra.mxu0 0.0
    %5018 = vmatprep.subr.mxu0 0.0
    %5019 = vmatpush1.msra.mxu0 0.0
    %5020 = vmatprep.subr.mxu0 0.0
    %5021 = vmatpush1.msra.mxu0 0.0
    %5022 = vmatprep.subr.mxu0 0.0
    %5023 = vmatpush1.msra.mxu0 0.0
    %5024 = vmatprep.subr.mxu0 0.0
    %5025 = vmatpush1.msra.mxu0 0.0
    %5026 = vmatprep.subr.mxu0 0.0
    %5027 = vmatpush1.msra.mxu0 0.0
    %5028 = vmatprep.subr.mxu0 0.0
    %5029 = vmatpush1.msra.mxu0 0.0
    %5030 = vmatprep.subr.mxu0 0.0
    %5031 = vmatpush1.msra.mxu0 0.0
    %5032 = vmatprep.subr.mxu0 0.0
    %5033 = vmatpush1.msra.mxu0 0.0
    %5034 = vmatprep.subr.mxu0 0.0
    %5035 = vmatpush1.msra.mxu0 0.0
    %5036 = vmatprep.subr.mxu0 0.0
    %5037 = vmatpush1.msra.mxu0 0.0
    %5038 = vmatprep.subr.mxu0 0.0
    %5039 = vmatpush1.msra.mxu0 0.0
    %5040 = vmatprep.subr.mxu0 0.0
    %5041 = vmatpush1.msra.mxu0 0.0
    %5042 = vmatprep.subr.mxu0 0.0
    %5043 = vmatpush1.msra.mxu0 0.0
    %5044 = vmatprep.subr.mxu0 0.0
    %5045 = vmatpush1.msra.mxu0 %v4019
    %5046 = vmatprep.subr.mxu0 0.0
    %5047 = vmatpush2.msra.mxu0 0.0
    %5048 = vmatprep.subr.mxu0 0.0
    %5049 = vmatpush2.msra.mxu0 0.0
    %5050 = vmatprep.subr.mxu0 0.0
    %5051 = vmatpush2.msra.mxu0 0.0
    %5052 = vmatprep.subr.mxu0 0.0
    %5053 = vmatpush2.msra.mxu0 0.0
    %5054 = vmatprep.subr.mxu0 0.0
    %5055 = vmatpush2.msra.mxu0 0.0
    %5056 = vmatprep.subr.mxu0 0.0
    %5057 = vmatpush2.msra.mxu0 0.0
    %5058 = vmatprep.subr.mxu0 0.0
    %5059 = vmatpush2.msra.mxu0 0.0
    %5060 = vmatprep.subr.mxu0 0.0
    %5061 = vmatpush2.msra.mxu0 0.0
    %5062 = vmatprep.subr.mxu0 0.0
    %5063 = vmatpush2.msra.mxu0 0.0
    %5064 = vmatprep.subr.mxu0 0.0
    %5065 = vmatpush2.msra.mxu0 0.0
    %5066 = vmatprep.subr.mxu0 0.0
    %5067 = vmatpush2.msra.mxu0 0.0
    %5068 = vmatprep.subr.mxu0 0.0
    %5069 = vmatpush2.msra.mxu0 0.0
    %5070 = vmatprep.subr.mxu0 0.0
    %5071 = vmatpush2.msra.mxu0 0.0
    %5072 = vmatprep.subr.mxu0 0.0
    %5073 = vmatpush2.msra.mxu0 0.0
    %5074 = vmatprep.subr.mxu0 0.0
    %5075 = vmatpush2.msra.mxu0 0.0
    %5076 = vmatprep.subr.mxu0 0.0
    %5077 = vmatpush2.msra.mxu0 0.0
    %5078 = vmatprep.mubr.f32.mxu0 0.0
    %5079 = vmatmul.mubr.f32.gmra.mxu0 %v5012
    %v5080 = vpop.f32.mrf.mxu0
    %v5081 = vadd.f32 0.0, %v5080
    %v5082 = vpop.f32.mrf.mxu0
    %5083 = vdwg.mxu0
    %v5085 = vsel %vm1089, %v4714, 0
    %5087 = vmatprep.subr.mxu0 0.0
    %5088 = vmatpush1.msra.mxu0 0.0
    %5089 = vmatprep.subr.mxu0 0.0
    %5090 = vmatpush1.msra.mxu0 0.0
    %5091 = vmatprep.subr.mxu0 0.0
    %5092 = vmatpush1.msra.mxu0 0.0
    %5093 = vmatprep.subr.mxu0 0.0
    %5094 = vmatpush1.msra.mxu0 0.0
    %5095 = vmatprep.subr.mxu0 0.0
    %5096 = vmatpush1.msra.mxu0 0.0
    %5097 = vmatprep.subr.mxu0 0.0
    %5098 = vmatpush1.msra.mxu0 0.0
    %5099 = vmatprep.subr.mxu0 0.0
    %5100 = vmatpush1.msra.mxu0 0.0
    %5101 = vmatprep.subr.mxu0 0.0
    %5102 = vmatpush1.msra.mxu0 0.0
    %5103 = vmatprep.subr.mxu0 0.0
    %5104 = vmatpush1.msra.mxu0 0.0
    %5105 = vmatprep.subr.mxu0 0.0
    %5106 = vmatpush1.msra.mxu0 0.0
    %5107 = vmatprep.subr.mxu0 0.0
    %5108 = vmatpush1.msra.mxu0 0.0
    %5109 = vmatprep.subr.mxu0 0.0
    %5110 = vmatpush1.msra.mxu0 0.0
    %5111 = vmatprep.subr.mxu0 0.0
    %5112 = vmatpush1.msra.mxu0 0.0
    %5113 = vmatprep.subr.mxu0 0.0
    %5114 = vmatpush1.msra.mxu0 0.0
    %5115 = vmatprep.subr.mxu0 0.0
    %5116 = vmatpush1.msra.mxu0 0.0
    %5117 = vmatprep.subr.mxu0 0.0
    %5118 = vmatpush1.msra.mxu0 %v4020
    %5119 = vmatprep.subr.mxu0 0.0
    %5120 = vmatpush2.msra.mxu0 0.0
    %5121 = vmatprep.subr.mxu0 0.0
    %5122 = vmatpush2.msra.mxu0 0.0
    %5123 = vmatprep.subr.mxu0 0.0
    %5124 = vmatpush2.msra.mxu0 0.0
    %5125 = vmatprep.subr.mxu0 0.0
    %5126 = vmatpush2.msra.mxu0 0.0
    %5127 = vmatprep.subr.mxu0 0.0
    %5128 = vmatpush2.msra.mxu0 0.0
    %5129 = vmatprep.subr.mxu0 0.0
    %5130 = vmatpush2.msra.mxu0 0.0
    %5131 = vmatprep.subr.mxu0 0.0
    %5132 = vmatpush2.msra.mxu0 0.0
    %5133 = vmatprep.subr.mxu0 0.0
    %5134 = vmatpush2.msra.mxu0 0.0
    %5135 = vmatprep.subr.mxu0 0.0
    %5136 = vmatpush2.msra.mxu0 0.0
    %5137 = vmatprep.subr.mxu0 0.0
    %5138 = vmatpush2.msra.mxu0 0.0
    %5139 = vmatprep.subr.mxu0 0.0
    %5140 = vmatpush2.msra.mxu0 0.0
    %5141 = vmatprep.subr.mxu0 0.0
    %5142 = vmatpush2.msra.mxu0 0.0
    %5143 = vmatprep.subr.mxu0 0.0
    %5144 = vmatpush2.msra.mxu0 0.0
    %5145 = vmatprep.subr.mxu0 0.0
    %5146 = vmatpush2.msra.mxu0 0.0
    %5147 = vmatprep.subr.mxu0 0.0
    %5148 = vmatpush2.msra.mxu0 0.0
    %5149 = vmatprep.subr.mxu0 0.0
    %5150 = vmatpush2.msra.mxu0 0.0
    %5151 = vmatprep.mubr.f32.mxu0 0.0
    %5152 = vmatmul.mubr.f32.gmra.mxu0 %v5085
    %v5153 = vpop.f32.mrf.mxu0
    %v5154 = vadd.f32 0.0, %v5153
    %v5155 = vpop.f32.mrf.mxu0
    %5156 = vdwg.mxu0
    %v5158 = vsel %vm1089, %v4716, 0
    %5160 = vmatprep.subr.mxu0 0.0
    %5161 = vmatpush1.msra.mxu0 0.0
    %5162 = vmatprep.subr.mxu0 0.0
    %5163 = vmatpush1.msra.mxu0 0.0
    %5164 = vmatprep.subr.mxu0 0.0
    %5165 = vmatpush1.msra.mxu0 0.0
    %5166 = vmatprep.subr.mxu0 0.0
    %5167 = vmatpush1.msra.mxu0 0.0
    %5168 = vmatprep.subr.mxu0 0.0
    %5169 = vmatpush1.msra.mxu0 0.0
    %5170 = vmatprep.subr.mxu0 0.0
    %5171 = vmatpush1.msra.mxu0 0.0
    %5172 = vmatprep.subr.mxu0 0.0
    %5173 = vmatpush1.msra.mxu0 0.0
    %5174 = vmatprep.subr.mxu0 0.0
    %5175 = vmatpush1.msra.mxu0 0.0
    %5176 = vmatprep.subr.mxu0 0.0
    %5177 = vmatpush1.msra.mxu0 0.0
    %5178 = vmatprep.subr.mxu0 0.0
    %5179 = vmatpush1.msra.mxu0 0.0
    %5180 = vmatprep.subr.mxu0 0.0
    %5181 = vmatpush1.msra.mxu0 0.0
    %5182 = vmatprep.subr.mxu0 0.0
    %5183 = vmatpush1.msra.mxu0 0.0
    %5184 = vmatprep.subr.mxu0 0.0
    %5185 = vmatpush1.msra.mxu0 0.0
    %5186 = vmatprep.subr.mxu0 0.0
    %5187 = vmatpush1.msra.mxu0 0.0
    %5188 = vmatprep.subr.mxu0 0.0
    %5189 = vmatpush1.msra.mxu0 0.0
    %5190 = vmatprep.subr.mxu0 0.0
    %5191 = vmatpush1.msra.mxu0 %v4021
    %5192 = vmatprep.subr.mxu0 0.0
    %5193 = vmatpush2.msra.mxu0 0.0
    %5194 = vmatprep.subr.mxu0 0.0
    %5195 = vmatpush2.msra.mxu0 0.0
    %5196 = vmatprep.subr.mxu0 0.0
    %5197 = vmatpush2.msra.mxu0 0.0
    %5198 = vmatprep.subr.mxu0 0.0
    %5199 = vmatpush2.msra.mxu0 0.0
    %5200 = vmatprep.subr.mxu0 0.0
    %5201 = vmatpush2.msra.mxu0 0.0
    %5202 = vmatprep.subr.mxu0 0.0
    %5203 = vmatpush2.msra.mxu0 0.0
    %5204 = vmatprep.subr.mxu0 0.0
    %5205 = vmatpush2.msra.mxu0 0.0
    %5206 = vmatprep.subr.mxu0 0.0
    %5207 = vmatpush2.msra.mxu0 0.0
    %5208 = vmatprep.subr.mxu0 0.0
    %5209 = vmatpush2.msra.mxu0 0.0
    %5210 = vmatprep.subr.mxu0 0.0
    %5211 = vmatpush2.msra.mxu0 0.0
    %5212 = vmatprep.subr.mxu0 0.0
    %5213 = vmatpush2.msra.mxu0 0.0
    %5214 = vmatprep.subr.mxu0 0.0
    %5215 = vmatpush2.msra.mxu0 0.0
    %5216 = vmatprep.subr.mxu0 0.0
    %5217 = vmatpush2.msra.mxu0 0.0
    %5218 = vmatprep.subr.mxu0 0.0
    %5219 = vmatpush2.msra.mxu0 0.0
    %5220 = vmatprep.subr.mxu0 0.0
    %5221 = vmatpush2.msra.mxu0 0.0
    %5222 = vmatprep.subr.mxu0 0.0
    %5223 = vmatpush2.msra.mxu0 0.0
    %5224 = vmatprep.mubr.f32.mxu0 0.0
    %5225 = vmatmul.mubr.f32.gmra.mxu0 %v5158
    %v5226 = vpop.f32.mrf.mxu0
    %v5227 = vadd.f32 0.0, %v5226
    %v5228 = vpop.f32.mrf.mxu0
    %5229 = vdwg.mxu0
    %v5231 = vsel %vm1089, %v4718, 0
    %5233 = vmatprep.subr.mxu0 0.0
    %5234 = vmatpush1.msra.mxu0 0.0
    %5235 = vmatprep.subr.mxu0 0.0
    %5236 = vmatpush1.msra.mxu0 0.0
    %5237 = vmatprep.subr.mxu0 0.0
    %5238 = vmatpush1.msra.mxu0 0.0
    %5239 = vmatprep.subr.mxu0 0.0
    %5240 = vmatpush1.msra.mxu0 0.0
    %5241 = vmatprep.subr.mxu0 0.0
    %5242 = vmatpush1.msra.mxu0 0.0
    %5243 = vmatprep.subr.mxu0 0.0
    %5244 = vmatpush1.msra.mxu0 0.0
    %5245 = vmatprep.subr.mxu0 0.0
    %5246 = vmatpush1.msra.mxu0 0.0
    %5247 = vmatprep.subr.mxu0 0.0
    %5248 = vmatpush1.msra.mxu0 0.0
    %5249 = vmatprep.subr.mxu0 0.0
    %5250 = vmatpush1.msra.mxu0 0.0
    %5251 = vmatprep.subr.mxu0 0.0
    %5252 = vmatpush1.msra.mxu0 0.0
    %5253 = vmatprep.subr.mxu0 0.0
    %5254 = vmatpush1.msra.mxu0 0.0
    %5255 = vmatprep.subr.mxu0 0.0
    %5256 = vmatpush1.msra.mxu0 0.0
    %5257 = vmatprep.subr.mxu0 0.0
    %5258 = vmatpush1.msra.mxu0 0.0
    %5259 = vmatprep.subr.mxu0 0.0
    %5260 = vmatpush1.msra.mxu0 0.0
    %5261 = vmatprep.subr.mxu0 0.0
    %5262 = vmatpush1.msra.mxu0 0.0
    %5263 = vmatprep.subr.mxu0 0.0
    %5264 = vmatpush1.msra.mxu0 %v4022
    %5265 = vmatprep.subr.mxu0 0.0
    %5266 = vmatpush2.msra.mxu0 0.0
    %5267 = vmatprep.subr.mxu0 0.0
    %5268 = vmatpush2.msra.mxu0 0.0
    %5269 = vmatprep.subr.mxu0 0.0
    %5270 = vmatpush2.msra.mxu0 0.0
    %5271 = vmatprep.subr.mxu0 0.0
    %5272 = vmatpush2.msra.mxu0 0.0
    %5273 = vmatprep.subr.mxu0 0.0
    %5274 = vmatpush2.msra.mxu0 0.0
    %5275 = vmatprep.subr.mxu0 0.0
    %5276 = vmatpush2.msra.mxu0 0.0
    %5277 = vmatprep.subr.mxu0 0.0
    %5278 = vmatpush2.msra.mxu0 0.0
    %5279 = vmatprep.subr.mxu0 0.0
    %5280 = vmatpush2.msra.mxu0 0.0
    %5281 = vmatprep.subr.mxu0 0.0
    %5282 = vmatpush2.msra.mxu0 0.0
    %5283 = vmatprep.subr.mxu0 0.0
    %5284 = vmatpush2.msra.mxu0 0.0
    %5285 = vmatprep.subr.mxu0 0.0
    %5286 = vmatpush2.msra.mxu0 0.0
    %5287 = vmatprep.subr.mxu0 0.0
    %5288 = vmatpush2.msra.mxu0 0.0
    %5289 = vmatprep.subr.mxu0 0.0
    %5290 = vmatpush2.msra.mxu0 0.0
    %5291 = vmatprep.subr.mxu0 0.0
    %5292 = vmatpush2.msra.mxu0 0.0
    %5293 = vmatprep.subr.mxu0 0.0
    %5294 = vmatpush2.msra.mxu0 0.0
    %5295 = vmatprep.subr.mxu0 0.0
    %5296 = vmatpush2.msra.mxu0 0.0
    %5297 = vmatprep.mubr.f32.mxu0 0.0
    %5298 = vmatmul.mubr.f32.gmra.mxu0 %v5231
    %v5299 = vpop.f32.mrf.mxu0
    %v5300 = vadd.f32 0.0, %v5299
    %v5301 = vpop.f32.mrf.mxu0
    %5302 = vdwg.mxu0
    %v5303 = vcombine.low %v4789, %v4935
    %v5304 = vcombine.high %v4789, %v4935
    %v5306 = vunpack.c.l.s4 1983009808
    %v5307 = vunpack.c.0.s8 %v5306
    %v5308 = vlaneseq
    %v5309 = vshrl.u32 %v5308, 7
    %v5310 = vsub.s32 %v5307, %v5309
    %v5311 = vrot.slane %v5303, %v5310
    %v5313 = vunpack.c.l.s4 1983009808
    %v5314 = vunpack.c.0.s8 %v5313
    %v5315 = vlaneseq
    %v5316 = vshrl.u32 %v5315, 7
    %v5317 = vsub.s32 %v5314, %v5316
    %v5318 = vrot.slane %v5304, %v5317
    %v5319 = vcombine.low %v4862, %v5008
    %v5320 = vcombine.high %v4862, %v5008
    %v5322 = vunpack.c.l.s4 1983009808
    %v5323 = vunpack.c.0.s8 %v5322
    %v5324 = vlaneseq
    %v5325 = vshrl.u32 %v5324, 7
    %v5326 = vsub.s32 %v5323, %v5325
    %v5327 = vrot.slane %v5319, %v5326
    %v5329 = vunpack.c.l.s4 1983009808
    %v5330 = vunpack.c.0.s8 %v5329
    %v5331 = vlaneseq
    %v5332 = vshrl.u32 %v5331, 7
    %v5333 = vsub.s32 %v5330, %v5332
    %v5334 = vrot.slane %v5320, %v5333
    %v5335 = vcombine.low %v5311, %v5327
    %v5336 = vcombine.high %v5311, %v5327
    %v5338 = vunpack.c.l.s4 1934713408
    %v5339 = vunpack.c.0.s8 %v5338
    %v5340 = vlaneseq
    %v5341 = vshrl.u32 %v5340, 7
    %v5342 = vsub.s32 %v5339, %v5341
    %v5343 = vrot.slane %v5335, %v5342
    %v5345 = vunpack.c.l.s4 1934713408
    %v5346 = vunpack.c.0.s8 %v5345
    %v5347 = vlaneseq
    %v5348 = vshrl.u32 %v5347, 7
    %v5349 = vsub.s32 %v5346, %v5348
    %v5350 = vrot.slane %v5336, %v5349
    %v5351 = vcombine.low %v5318, %v5334
    %v5352 = vcombine.high %v5318, %v5334
    %v5354 = vunpack.c.l.s4 1934713408
    %v5355 = vunpack.c.0.s8 %v5354
    %v5356 = vlaneseq
    %v5357 = vshrl.u32 %v5356, 7
    %v5358 = vsub.s32 %v5355, %v5357
    %v5359 = vrot.slane %v5351, %v5358
    %v5361 = vunpack.c.l.s4 1934713408
    %v5362 = vunpack.c.0.s8 %v5361
    %v5363 = vlaneseq
    %v5364 = vshrl.u32 %v5363, 7
    %v5365 = vsub.s32 %v5362, %v5364
    %v5366 = vrot.slane %v5352, %v5365
    %v5367 = vcombine.high %v5343, 0.0
    %v5368 = vcombine.high %v5350, 0.0
    %v5369 = vcombine.high %v5359, 0.0
    %v5370 = vcombine.high %v5366, 0.0
    %v5371 = vcombine.low %v5081, %v5227
    %v5372 = vcombine.high %v5081, %v5227
    %v5374 = vunpack.c.l.s4 1983009808
    %v5375 = vunpack.c.0.s8 %v5374
    %v5376 = vlaneseq
    %v5377 = vshrl.u32 %v5376, 7
    %v5378 = vsub.s32 %v5375, %v5377
    %v5379 = vrot.slane %v5371, %v5378
    %v5381 = vunpack.c.l.s4 1983009808
    %v5382 = vunpack.c.0.s8 %v5381
    %v5383 = vlaneseq
    %v5384 = vshrl.u32 %v5383, 7
    %v5385 = vsub.s32 %v5382, %v5384
    %v5386 = vrot.slane %v5372, %v5385
    %v5387 = vcombine.low %v5154, %v5300
    %v5388 = vcombine.high %v5154, %v5300
    %v5390 = vunpack.c.l.s4 1983009808
    %v5391 = vunpack.c.0.s8 %v5390
    %v5392 = vlaneseq
    %v5393 = vshrl.u32 %v5392, 7
    %v5394 = vsub.s32 %v5391, %v5393
    %v5395 = vrot.slane %v5387, %v5394
    %v5397 = vunpack.c.l.s4 1983009808
    %v5398 = vunpack.c.0.s8 %v5397
    %v5399 = vlaneseq
    %v5400 = vshrl.u32 %v5399, 7
    %v5401 = vsub.s32 %v5398, %v5400
    %v5402 = vrot.slane %v5388, %v5401
    %v5403 = vcombine.low %v5379, %v5395
    %v5404 = vcombine.high %v5379, %v5395
    %v5406 = vunpack.c.l.s4 1934713408
    %v5407 = vunpack.c.0.s8 %v5406
    %v5408 = vlaneseq
    %v5409 = vshrl.u32 %v5408, 7
    %v5410 = vsub.s32 %v5407, %v5409
    %v5411 = vrot.slane %v5403, %v5410
    %v5413 = vunpack.c.l.s4 1934713408
    %v5414 = vunpack.c.0.s8 %v5413
    %v5415 = vlaneseq
    %v5416 = vshrl.u32 %v5415, 7
    %v5417 = vsub.s32 %v5414, %v5416
    %v5418 = vrot.slane %v5404, %v5417
    %v5419 = vcombine.low %v5386, %v5402
    %v5420 = vcombine.high %v5386, %v5402
    %v5422 = vunpack.c.l.s4 1934713408
    %v5423 = vunpack.c.0.s8 %v5422
    %v5424 = vlaneseq
    %v5425 = vshrl.u32 %v5424, 7
    %v5426 = vsub.s32 %v5423, %v5425
    %v5427 = vrot.slane %v5419, %v5426
    %v5429 = vunpack.c.l.s4 1934713408
    %v5430 = vunpack.c.0.s8 %v5429
    %v5431 = vlaneseq
    %v5432 = vshrl.u32 %v5431, 7
    %v5433 = vsub.s32 %v5430, %v5432
    %v5434 = vrot.slane %v5420, %v5433
    %v5435 = vcombine.high %v5411, 0.0
    %v5436 = vcombine.high %v5418, 0.0
    %v5437 = vcombine.high %v5427, 0.0
    %v5438 = vcombine.high %v5434, 0.0
    %v5439 = vcombine.low %v5343, %v5350
    %v5441 = vunpack.c.l.s4 1983009808
    %v5442 = vunpack.c.0.s8 %v5441
    %v5443 = vlaneseq
    %v5444 = vshrl.u32 %v5443, 7
    %v5445 = vsub.s32 %v5442, %v5444
    %v5446 = vrot.slane %v5439, %v5445
    %v5447 = vcombine.low %v5367, %v5368
    %v5449 = vunpack.c.l.s4 1983009808
    %v5450 = vunpack.c.0.s8 %v5449
    %v5451 = vlaneseq
    %v5452 = vshrl.u32 %v5451, 7
    %v5453 = vsub.s32 %v5450, %v5452
    %v5454 = vrot.slane %v5447, %v5453
    %v5455 = vcombine.low %v5359, %v5366
    %v5457 = vunpack.c.l.s4 1983009808
    %v5458 = vunpack.c.0.s8 %v5457
    %v5459 = vlaneseq
    %v5460 = vshrl.u32 %v5459, 7
    %v5461 = vsub.s32 %v5458, %v5460
    %v5462 = vrot.slane %v5455, %v5461
    %v5463 = vcombine.low %v5369, %v5370
    %v5465 = vunpack.c.l.s4 1983009808
    %v5466 = vunpack.c.0.s8 %v5465
    %v5467 = vlaneseq
    %v5468 = vshrl.u32 %v5467, 7
    %v5469 = vsub.s32 %v5466, %v5468
    %v5470 = vrot.slane %v5463, %v5469
    %v5471 = vcombine.low %v5446, %v5454
    %v5472 = vcombine.high %v5446, %v5454
    %v5474 = vunpack.c.l.s4 1934713408
    %v5475 = vunpack.c.0.s8 %v5474
    %v5476 = vlaneseq
    %v5477 = vshrl.u32 %v5476, 7
    %v5478 = vsub.s32 %v5475, %v5477
    %v5479 = vrot.slane %v5471, %v5478
    %v5481 = vunpack.c.l.s4 1934713408
    %v5482 = vunpack.c.0.s8 %v5481
    %v5483 = vlaneseq
    %v5484 = vshrl.u32 %v5483, 7
    %v5485 = vsub.s32 %v5482, %v5484
    %v5486 = vrot.slane %v5472, %v5485
    %v5487 = vcombine.low %v5462, %v5470
    %v5488 = vcombine.high %v5462, %v5470
    %v5490 = vunpack.c.l.s4 1934713408
    %v5491 = vunpack.c.0.s8 %v5490
    %v5492 = vlaneseq
    %v5493 = vshrl.u32 %v5492, 7
    %v5494 = vsub.s32 %v5491, %v5493
    %v5495 = vrot.slane %v5487, %v5494
    %v5497 = vunpack.c.l.s4 1934713408
    %v5498 = vunpack.c.0.s8 %v5497
    %v5499 = vlaneseq
    %v5500 = vshrl.u32 %v5499, 7
    %v5501 = vsub.s32 %v5498, %v5500
    %v5502 = vrot.slane %v5488, %v5501
    %v5503 = vcombine.low %v5479, %v5495
    %v5504 = vcombine.high %v5479, %v5495
    %v5505 = vcombine.low %v5486, %v5502
    %v5506 = vcombine.high %v5486, %v5502
    %v5507 = vcombine.low %v5411, %v5418
    %v5509 = vunpack.c.l.s4 1983009808
    %v5510 = vunpack.c.0.s8 %v5509
    %v5511 = vlaneseq
    %v5512 = vshrl.u32 %v5511, 7
    %v5513 = vsub.s32 %v5510, %v5512
    %v5514 = vrot.slane %v5507, %v5513
    %v5515 = vcombine.low %v5435, %v5436
    %v5517 = vunpack.c.l.s4 1983009808
    %v5518 = vunpack.c.0.s8 %v5517
    %v5519 = vlaneseq
    %v5520 = vshrl.u32 %v5519, 7
    %v5521 = vsub.s32 %v5518, %v5520
    %v5522 = vrot.slane %v5515, %v5521
    %v5523 = vcombine.low %v5427, %v5434
    %v5525 = vunpack.c.l.s4 1983009808
    %v5526 = vunpack.c.0.s8 %v5525
    %v5527 = vlaneseq
    %v5528 = vshrl.u32 %v5527, 7
    %v5529 = vsub.s32 %v5526, %v5528
    %v5530 = vrot.slane %v5523, %v5529
    %v5531 = vcombine.low %v5437, %v5438
    %v5533 = vunpack.c.l.s4 1983009808
    %v5534 = vunpack.c.0.s8 %v5533
    %v5535 = vlaneseq
    %v5536 = vshrl.u32 %v5535, 7
    %v5537 = vsub.s32 %v5534, %v5536
    %v5538 = vrot.slane %v5531, %v5537
    %v5539 = vcombine.low %v5514, %v5522
    %v5540 = vcombine.high %v5514, %v5522
    %v5542 = vunpack.c.l.s4 1934713408
    %v5543 = vunpack.c.0.s8 %v5542
    %v5544 = vlaneseq
    %v5545 = vshrl.u32 %v5544, 7
    %v5546 = vsub.s32 %v5543, %v5545
    %v5547 = vrot.slane %v5539, %v5546
    %v5549 = vunpack.c.l.s4 1934713408
    %v5550 = vunpack.c.0.s8 %v5549
    %v5551 = vlaneseq
    %v5552 = vshrl.u32 %v5551, 7
    %v5553 = vsub.s32 %v5550, %v5552
    %v5554 = vrot.slane %v5540, %v5553
    %v5555 = vcombine.low %v5530, %v5538
    %v5556 = vcombine.high %v5530, %v5538
    %v5558 = vunpack.c.l.s4 1934713408
    %v5559 = vunpack.c.0.s8 %v5558
    %v5560 = vlaneseq
    %v5561 = vshrl.u32 %v5560, 7
    %v5562 = vsub.s32 %v5559, %v5561
    %v5563 = vrot.slane %v5555, %v5562
    %v5565 = vunpack.c.l.s4 1934713408
    %v5566 = vunpack.c.0.s8 %v5565
    %v5567 = vlaneseq
    %v5568 = vshrl.u32 %v5567, 7
    %v5569 = vsub.s32 %v5566, %v5568
    %v5570 = vrot.slane %v5556, %v5569
    %v5571 = vcombine.low %v5547, %v5563
    %v5572 = vcombine.high %v5547, %v5563
    %v5573 = vcombine.low %v5554, %v5570
    %v5574 = vcombine.high %v5554, %v5570
    %5577 = vrot.lane.b32.xlu0 %v5504, 8
    %v5578 = vpop.permute.xlu0 %5577
    %5579 = vrot.lane.b32.xlu0 %v5572, 8
    %v5580 = vpop.permute.xlu0 %5579
    %5585 = vrot.lane.b32.xlu0 %v5505, 16
    %v5586 = vpop.permute.xlu0 %5585
    %5587 = vrot.lane.b32.xlu0 %v5573, 16
    %v5588 = vpop.permute.xlu0 %5587
    %5593 = vrot.lane.b32.xlu0 %v5506, 24
    %v5594 = vpop.permute.xlu0 %5593
    %5595 = vrot.lane.b32.xlu0 %v5574, 24
    %v5596 = vpop.permute.xlu0 %5595
    %v5599 = vsel %vm1089, %v5503, %v5578
    %v5600 = vsel %vm1089, %v5571, %v5580
    %v5601 = vsel %vm2668, %v5599, %v5586
    %v5602 = vsel %vm2668, %v5600, %v5588
    %v5603 = vsel %vm2671, %v5601, %v5594
    %v5604 = vsel %vm2671, %v5602, %v5596
    %s5605 = scalar_lea.vmem %s4, 32
    %v5606 = vld [vmem:[%s5605] sm:$0xff]
    %v5607 = vld [vmem:[%s5605 + $0x8] sm:$0xff]
    %v5608 = vld [vmem:[%s5605 + $0x10] sm:$0xff]
    %v5609 = vld [vmem:[%s5605 + $0x18] sm:$0xff]
    %s5610 = scalar_lea.vmem %s5, 1
    %v5611 = vld [vmem:[%s5610] sm:$0x1]
    %v5613 = vlaneseq
    %v5614 = vshrl.u32 %v5613, 7
    %v5615 = vsub.s32 0, %v5614
    %v5616 = vrot.slane %v5611, %v5615
    %v5619 = vsel %vm75, %v5603, 0
    %v5622 = vsel %vm75, %v5604, 0
    %5624 = vmatprep.subr.mxu0 0.0
    %5625 = vmatpush1.msra.mxu0 0.0
    %5626 = vmatprep.subr.mxu0 0.0
    %5627 = vmatpush1.msra.mxu0 0.0
    %5628 = vmatprep.subr.mxu0 0.0
    %5629 = vmatpush1.msra.mxu0 0.0
    %5630 = vmatprep.subr.mxu0 0.0
    %5631 = vmatpush1.msra.mxu0 0.0
    %5632 = vmatprep.subr.mxu0 0.0
    %5633 = vmatpush1.msra.mxu0 0.0
    %5634 = vmatprep.subr.mxu0 0.0
    %5635 = vmatpush1.msra.mxu0 0.0
    %5636 = vmatprep.subr.mxu0 0.0
    %5637 = vmatpush1.msra.mxu0 0.0
    %5638 = vmatprep.subr.mxu0 0.0
    %5639 = vmatpush1.msra.mxu0 0.0
    %5640 = vmatprep.subr.mxu0 0.0
    %5641 = vmatpush1.msra.mxu0 0.0
    %5642 = vmatprep.subr.mxu0 0.0
    %5643 = vmatpush1.msra.mxu0 0.0
    %5644 = vmatprep.subr.mxu0 0.0
    %5645 = vmatpush1.msra.mxu0 0.0
    %5646 = vmatprep.subr.mxu0 0.0
    %5647 = vmatpush1.msra.mxu0 0.0
    %5648 = vmatprep.subr.mxu0 0.0
    %5649 = vmatpush1.msra.mxu0 %v5609
    %5650 = vmatprep.subr.mxu0 0.0
    %5651 = vmatpush1.msra.mxu0 %v5608
    %5652 = vmatprep.subr.mxu0 0.0
    %5653 = vmatpush1.msra.mxu0 %v5607
    %5654 = vmatprep.subr.mxu0 0.0
    %5655 = vmatpush1.msra.mxu0 %v5606
    %5656 = vmatprep.subr.mxu0 0.0
    %5657 = vmatpush2.msra.mxu0 0.0
    %5658 = vmatprep.subr.mxu0 0.0
    %5659 = vmatpush2.msra.mxu0 0.0
    %5660 = vmatprep.subr.mxu0 0.0
    %5661 = vmatpush2.msra.mxu0 0.0
    %5662 = vmatprep.subr.mxu0 0.0
    %5663 = vmatpush2.msra.mxu0 0.0
    %5664 = vmatprep.subr.mxu0 0.0
    %5665 = vmatpush2.msra.mxu0 0.0
    %5666 = vmatprep.subr.mxu0 0.0
    %5667 = vmatpush2.msra.mxu0 0.0
    %5668 = vmatprep.subr.mxu0 0.0
    %5669 = vmatpush2.msra.mxu0 0.0
    %5670 = vmatprep.subr.mxu0 0.0
    %5671 = vmatpush2.msra.mxu0 0.0
    %5672 = vmatprep.subr.mxu0 0.0
    %5673 = vmatpush2.msra.mxu0 0.0
    %5674 = vmatprep.subr.mxu0 0.0
    %5675 = vmatpush2.msra.mxu0 0.0
    %5676 = vmatprep.subr.mxu0 0.0
    %5677 = vmatpush2.msra.mxu0 0.0
    %5678 = vmatprep.subr.mxu0 0.0
    %5679 = vmatpush2.msra.mxu0 0.0
    %5680 = vmatprep.subr.mxu0 0.0
    %5681 = vmatpush2.msra.mxu0 0.0
    %5682 = vmatprep.subr.mxu0 0.0
    %5683 = vmatpush2.msra.mxu0 0.0
    %5684 = vmatprep.subr.mxu0 0.0
    %5685 = vmatpush2.msra.mxu0 0.0
    %5686 = vmatprep.subr.mxu0 0.0
    %5687 = vmatpush2.msra.mxu0 0.0
    %5688 = vmatprep.mubr.f32.mxu0 0.0
    %5689 = vmatmul.mubr.f32.gmra.mxu0 %v5619
    %v5690 = vpop.f32.mrf.mxu0
    %v5691 = vadd.f32 %v5616, %v5690
    %v5692 = vpop.f32.mrf.mxu0
    %5693 = vmatprep.mubr.f32.mxu0 0.0
    %5694 = vmatmul.mubr.f32.gmra.mxu0 %v5622
    %v5695 = vpop.f32.mrf.mxu0
    %v5696 = vadd.f32 %v5616, %v5695
    %v5697 = vpop.f32.mrf.mxu0
    %5698 = vdwg.mxu0
    %s5699 = scalar_lea.vmem %s6, 1
    %v5700 = vld [vmem:[%s5699] sm:$0x1]
    %s5701 = scalar_lea.vmem %s7, 1
    %v5702 = vld [vmem:[%s5701] sm:$0x1]
    %v5703 = vadd.f32 %v5691, %v3043
    %v5704 = vadd.f32 %v5696, %v3044
    %v5705 = vsel %vm75, %v5703, 0.0
    %5706 = vadd.xlane.f32.xlu0 %v5705
    %v5707 = vpop.xlane.xlu0 %5706
    %v5708 = vsel %vm75, %v5704, 0.0
    %5709 = vadd.xlane.f32.xlu0 %v5708
    %v5710 = vpop.xlane.xlu0 %5709
    %v5711 = vmul.f32 %v5707, %v2776
    %v5712 = vmul.f32 %v5710, %v2776
    %v5713 = vsub.f32 %v5703, %v5711
    %v5714 = vsub.f32 %v5704, %v5712
    %v5715 = vmul.f32 %v5713, %v5713
    %v5716 = vmul.f32 %v5714, %v5714
    %v5717 = vsel %vm75, %v5715, 0.0
    %5718 = vadd.xlane.f32.xlu0 %v5717
    %v5719 = vpop.xlane.xlu0 %5718
    %v5720 = vsel %vm75, %v5716, 0.0
    %5721 = vadd.xlane.f32.xlu0 %v5720
    %v5722 = vpop.xlane.xlu0 %5721
    %v5723 = vmul.f32 %v5719, %v2776
    %v5724 = vmul.f32 %v5722, %v2776
    %v5725 = vadd.f32 %v5723, 1e-05
    %v5726 = vadd.f32 %v5724, 1e-05
    %v5727 = vrsqrt.pop %v5725
    %v5728 = vrsqrt.pop %v5726
    %v5729 = vmul.f32 %v5713, %v5727
    %v5730 = vmul.f32 %v5714, %v5728
    %v5732 = vlaneseq
    %v5733 = vshrl.u32 %v5732, 7
    %v5734 = vsub.s32 0, %v5733
    %v5735 = vrot.slane %v5700, %v5734
    %v5737 = vmul.f32 %v5729, %v5735
    %v5738 = vmul.f32 %v5730, %v5735
    %v5740 = vlaneseq
    %v5741 = vshrl.u32 %v5740, 7
    %v5742 = vsub.s32 0, %v5741
    %v5743 = vrot.slane %v5702, %v5742
    %v5745 = vadd.f32 %v5737, %v5743
    %v5746 = vadd.f32 %v5738, %v5743
    %s5747 = scalar_lea.vmem %s8, 32
    %v5748 = vld [vmem:[%s5747] sm:$0xff]
    %v5749 = vld [vmem:[%s5747 + $0x8] sm:$0xff]
    %v5750 = vld [vmem:[%s5747 + $0x10] sm:$0xff]
    %v5751 = vld [vmem:[%s5747 + $0x18] sm:$0xff]
    %s5752 = scalar_lea.vmem %s9, 1
    %v5753 = vld [vmem:[%s5752] sm:$0x1]
    %v5755 = vlaneseq
    %v5756 = vshrl.u32 %v5755, 7
    %v5757 = vsub.s32 0, %v5756
    %v5758 = vrot.slane %v5753, %v5757
    %v5761 = vsel %vm75, %v5745, 0
    %v5764 = vsel %vm75, %v5746, 0
    %5766 = vmatprep.subr.mxu0 0.0
    %5767 = vmatpush1.msra.mxu0 0.0
    %5768 = vmatprep.subr.mxu0 0.0
    %5769 = vmatpush1.msra.mxu0 0.0
    %5770 = vmatprep.subr.mxu0 0.0
    %5771 = vmatpush1.msra.mxu0 0.0
    %5772 = vmatprep.subr.mxu0 0.0
    %5773 = vmatpush1.msra.mxu0 0.0
    %5774 = vmatprep.subr.mxu0 0.0
    %5775 = vmatpush1.msra.mxu0 0.0
    %5776 = vmatprep.subr.mxu0 0.0
    %5777 = vmatpush1.msra.mxu0 0.0
    %5778 = vmatprep.subr.mxu0 0.0
    %5779 = vmatpush1.msra.mxu0 0.0
    %5780 = vmatprep.subr.mxu0 0.0
    %5781 = vmatpush1.msra.mxu0 0.0
    %5782 = vmatprep.subr.mxu0 0.0
    %5783 = vmatpush1.msra.mxu0 0.0
    %5784 = vmatprep.subr.mxu0 0.0
    %5785 = vmatpush1.msra.mxu0 0.0
    %5786 = vmatprep.subr.mxu0 0.0
    %5787 = vmatpush1.msra.mxu0 0.0
    %5788 = vmatprep.subr.mxu0 0.0
    %5789 = vmatpush1.msra.mxu0 0.0
    %5790 = vmatprep.subr.mxu0 0.0
    %5791 = vmatpush1.msra.mxu0 %v5751
    %5792 = vmatprep.subr.mxu0 0.0
    %5793 = vmatpush1.msra.mxu0 %v5750
    %5794 = vmatprep.subr.mxu0 0.0
    %5795 = vmatpush1.msra.mxu0 %v5749
    %5796 = vmatprep.subr.mxu0 0.0
    %5797 = vmatpush1.msra.mxu0 %v5748
    %5798 = vmatprep.subr.mxu0 0.0
    %5799 = vmatpush2.msra.mxu0 0.0
    %5800 = vmatprep.subr.mxu0 0.0
    %5801 = vmatpush2.msra.mxu0 0.0
    %5802 = vmatprep.subr.mxu0 0.0
    %5803 = vmatpush2.msra.mxu0 0.0
    %5804 = vmatprep.subr.mxu0 0.0
    %5805 = vmatpush2.msra.mxu0 0.0
    %5806 = vmatprep.subr.mxu0 0.0
    %5807 = vmatpush2.msra.mxu0 0.0
    %5808 = vmatprep.subr.mxu0 0.0
    %5809 = vmatpush2.msra.mxu0 0.0
    %5810 = vmatprep.subr.mxu0 0.0
    %5811 = vmatpush2.msra.mxu0 0.0
    %5812 = vmatprep.subr.mxu0 0.0
    %5813 = vmatpush2.msra.mxu0 0.0
    %5814 = vmatprep.subr.mxu0 0.0
    %5815 = vmatpush2.msra.mxu0 0.0
    %5816 = vmatprep.subr.mxu0 0.0
    %5817 = vmatpush2.msra.mxu0 0.0
    %5818 = vmatprep.subr.mxu0 0.0
    %5819 = vmatpush2.msra.mxu0 0.0
    %5820 = vmatprep.subr.mxu0 0.0
    %5821 = vmatpush2.msra.mxu0 0.0
    %5822 = vmatprep.subr.mxu0 0.0
    %5823 = vmatpush2.msra.mxu0 0.0
    %5824 = vmatprep.subr.mxu0 0.0
    %5825 = vmatpush2.msra.mxu0 0.0
    %5826 = vmatprep.subr.mxu0 0.0
    %5827 = vmatpush2.msra.mxu0 0.0
    %5828 = vmatprep.subr.mxu0 0.0
    %5829 = vmatpush2.msra.mxu0 0.0
    %5830 = vmatprep.mubr.f32.mxu0 0.0
    %5831 = vmatmul.mubr.f32.gmra.mxu0 %v5761
    %v5832 = vpop.f32.mrf.mxu0
    %v5833 = vadd.f32 %v5758, %v5832
    %v5834 = vpop.f32.mrf.mxu0
    %5835 = vmatprep.mubr.f32.mxu0 0.0
    %5836 = vmatmul.mubr.f32.gmra.mxu0 %v5764
    %v5837 = vpop.f32.mrf.mxu0
    %v5838 = vadd.f32 %v5758, %v5837
    %v5839 = vpop.f32.mrf.mxu0
    %5840 = vdwg.mxu0
    %v5841 = vmul.f32 %v5833, 0.5
    %v5842 = vmul.f32 %v5838, 0.5
    %v5843 = vmul.f32 %v5833, 0.70710677
    %v5844 = vmul.f32 %v5838, 0.70710677
    %v5845 = verf.f32.pop %v5843
    %v5846 = verf.f32.pop %v5844
    %v5847 = vadd.f32 %v5845, 1.0
    %v5848 = vadd.f32 %v5846, 1.0
    %v5849 = vmul.f32 %v5841, %v5847
    %v5850 = vmul.f32 %v5842, %v5848
    %s5851 = scalar_lea.vmem %s10, 128
    %v5852 = vld [vmem:[%s5851] sm:$0xff]
    %v5853 = vld [vmem:[%s5851 + $0x8] sm:$0xff]
    %v5854 = vld [vmem:[%s5851 + $0x10] sm:$0xff]
    %v5855 = vld [vmem:[%s5851 + $0x18] sm:$0xff]
    %v5856 = vld [vmem:[%s5851 + $0x20] sm:$0xff]
    %v5857 = vld [vmem:[%s5851 + $0x28] sm:$0xff]
    %v5858 = vld [vmem:[%s5851 + $0x30] sm:$0xff]
    %v5859 = vld [vmem:[%s5851 + $0x38] sm:$0xff]
    %v5860 = vld [vmem:[%s5851 + $0x40] sm:$0xff]
    %v5861 = vld [vmem:[%s5851 + $0x48] sm:$0xff]
    %v5862 = vld [vmem:[%s5851 + $0x50] sm:$0xff]
    %v5863 = vld [vmem:[%s5851 + $0x58] sm:$0xff]
    %v5864 = vld [vmem:[%s5851 + $0x60] sm:$0xff]
    %v5865 = vld [vmem:[%s5851 + $0x68] sm:$0xff]
    %v5866 = vld [vmem:[%s5851 + $0x70] sm:$0xff]
    %v5867 = vld [vmem:[%s5851 + $0x78] sm:$0xff]
    %s5868 = scalar_lea.vmem %s11, 1
    %v5869 = vld [vmem:[%s5868] sm:$0x1]
    %v5871 = vlaneseq
    %v5872 = vshrl.u32 %v5871, 7
    %v5873 = vsub.s32 0, %v5872
    %v5874 = vrot.slane %v5869, %v5873
    %5876 = vmatprep.subr.mxu0 0.0
    %5877 = vmatpush1.msra.mxu0 %v5867
    %5878 = vmatprep.subr.mxu0 0.0
    %5879 = vmatpush1.msra.mxu0 %v5866
    %5880 = vmatprep.subr.mxu0 0.0
    %5881 = vmatpush1.msra.mxu0 %v5865
    %5882 = vmatprep.subr.mxu0 0.0
    %5883 = vmatpush1.msra.mxu0 %v5864
    %5884 = vmatprep.subr.mxu0 0.0
    %5885 = vmatpush1.msra.mxu0 %v5863
    %5886 = vmatprep.subr.mxu0 0.0
    %5887 = vmatpush1.msra.mxu0 %v5862
    %5888 = vmatprep.subr.mxu0 0.0
    %5889 = vmatpush1.msra.mxu0 %v5861
    %5890 = vmatprep.subr.mxu0 0.0
    %5891 = vmatpush1.msra.mxu0 %v5860
    %5892 = vmatprep.subr.mxu0 0.0
    %5893 = vmatpush1.msra.mxu0 %v5859
    %5894 = vmatprep.subr.mxu0 0.0
    %5895 = vmatpush1.msra.mxu0 %v5858
    %5896 = vmatprep.subr.mxu0 0.0
    %5897 = vmatpush1.msra.mxu0 %v5857
    %5898 = vmatprep.subr.mxu0 0.0
    %5899 = vmatpush1.msra.mxu0 %v5856
    %5900 = vmatprep.subr.mxu0 0.0
    %5901 = vmatpush1.msra.mxu0 %v5855
    %5902 = vmatprep.subr.mxu0 0.0
    %5903 = vmatpush1.msra.mxu0 %v5854
    %5904 = vmatprep.subr.mxu0 0.0
    %5905 = vmatpush1.msra.mxu0 %v5853
    %5906 = vmatprep.subr.mxu0 0.0
    %5907 = vmatpush1.msra.mxu0 %v5852
    %5908 = vmatprep.subr.mxu0 0.0
    %5909 = vmatpush2.msra.mxu0 0.0
    %5910 = vmatprep.subr.mxu0 0.0
    %5911 = vmatpush2.msra.mxu0 0.0
    %5912 = vmatprep.subr.mxu0 0.0
    %5913 = vmatpush2.msra.mxu0 0.0
    %5914 = vmatprep.subr.mxu0 0.0
    %5915 = vmatpush2.msra.mxu0 0.0
    %5916 = vmatprep.subr.mxu0 0.0
    %5917 = vmatpush2.msra.mxu0 0.0
    %5918 = vmatprep.subr.mxu0 0.0
    %5919 = vmatpush2.msra.mxu0 0.0
    %5920 = vmatprep.subr.mxu0 0.0
    %5921 = vmatpush2.msra.mxu0 0.0
    %5922 = vmatprep.subr.mxu0 0.0
    %5923 = vmatpush2.msra.mxu0 0.0
    %5924 = vmatprep.subr.mxu0 0.0
    %5925 = vmatpush2.msra.mxu0 0.0
    %5926 = vmatprep.subr.mxu0 0.0
    %5927 = vmatpush2.msra.mxu0 0.0
    %5928 = vmatprep.subr.mxu0 0.0
    %5929 = vmatpush2.msra.mxu0 0.0
    %5930 = vmatprep.subr.mxu0 0.0
    %5931 = vmatpush2.msra.mxu0 0.0
    %5932 = vmatprep.subr.mxu0 0.0
    %5933 = vmatpush2.msra.mxu0 0.0
    %5934 = vmatprep.subr.mxu0 0.0
    %5935 = vmatpush2.msra.mxu0 0.0
    %5936 = vmatprep.subr.mxu0 0.0
    %5937 = vmatpush2.msra.mxu0 0.0
    %5938 = vmatprep.subr.mxu0 0.0
    %5939 = vmatpush2.msra.mxu0 0.0
    %5940 = vmatprep.mubr.f32.mxu0 0.0
    %5941 = vmatmul.mubr.f32.gmra.mxu0 %v5849
    %v5942 = vpop.f32.mrf.mxu0
    %v5943 = vadd.f32 %v5874, %v5942
    %v5944 = vpop.f32.mrf.mxu0
    %5945 = vmatprep.mubr.f32.mxu0 0.0
    %5946 = vmatmul.mubr.f32.gmra.mxu0 %v5850
    %v5947 = vpop.f32.mrf.mxu0
    %v5948 = vadd.f32 %v5874, %v5947
    %v5949 = vpop.f32.mrf.mxu0
    %5950 = vdwg.mxu0
    %v5951 = vadd.f32 %v5943, %v3043
    %v5952 = vadd.f32 %v5948, %v3044
    %v5953 = vsel %vm75, %v5951, 0.0
    %5954 = vadd.xlane.f32.xlu0 %v5953
    %v5955 = vpop.xlane.xlu0 %5954
    %v5956 = vsel %vm75, %v5952, 0.0
    %5957 = vadd.xlane.f32.xlu0 %v5956
    %v5958 = vpop.xlane.xlu0 %5957
    %v5959 = vmul.f32 %v5955, %v2776
    %v5960 = vmul.f32 %v5958, %v2776
    %v5961 = vsub.f32 %v5951, %v5959
    %v5962 = vsub.f32 %v5952, %v5960
    %v5963 = vmul.f32 %v5961, %v5961
    %v5964 = vmul.f32 %v5962, %v5962
    %v5965 = vsel %vm75, %v5963, 0.0
    %5966 = vadd.xlane.f32.xlu0 %v5965
    %v5967 = vpop.xlane.xlu0 %5966
    %v5968 = vsel %vm75, %v5964, 0.0
    %5969 = vadd.xlane.f32.xlu0 %v5968
    %v5970 = vpop.xlane.xlu0 %5969
    %v5971 = vmul.f32 %v5967, %v2776
    %v5972 = vmul.f32 %v5970, %v2776
    %v5973 = vadd.f32 %v5971, 1e-05
    %v5974 = vadd.f32 %v5972, 1e-05
    %v5975 = vrsqrt.pop %v5973
    %v5976 = vrsqrt.pop %v5974
    %v5977 = vmul.f32 %v5961, %v5975
    %v5978 = vmul.f32 %v5962, %v5976
    %v5979 = vmul.f32 %v5977, %v5735
    %v5980 = vmul.f32 %v5978, %v5735
    %v5981 = vadd.f32 %v5979, %v5743
    %v5982 = vadd.f32 %v5980, %v5743
    %v5983 = vld [vmem:[%s12] sm:$0x1]
    %v5984 = vld [vmem:[%s13] sm:$0x1]
    %v5987 = vrot.slane %v5982, 7
    %vm5988 = vcmask 1041409
    %v5989 = vsel %vm5988, %v5987, %v5981
    %vm5991 = vcmask 254976
    %v5992 = vsel %vm5991, %v5989, 0.0
    %5993 = vadd.xlane.f32.xlu0 %v5992
    %v5994 = vpop.xlane.xlu0 %5993
    %v5995 = vmul.f32 %v5994, %v2776
    %v5997 = vrot.slane %v5995, 1
    %v6000 = vsub.f32 %v5981, %v5995
    %v6001 = vsub.f32 %v5982, %v5997
    %v6002 = vmul.f32 %v6000, %v6000
    %v6003 = vmul.f32 %v6001, %v6001
    %v6006 = vrot.slane %v6003, 7
    %v6007 = vsel %vm5988, %v6006, %v6002
    %v6009 = vsel %vm5991, %v6007, 0.0
    %6010 = vadd.xlane.f32.xlu0 %v6009
    %v6011 = vpop.xlane.xlu0 %6010
    %v6012 = vmul.f32 %v6011, %v2776
    %v6013 = vadd.f32 %v6012, 1e-05
    %v6014 = vrsqrt.pop %v6013
    %v6016 = vrot.slane %v6014, 1
    %v6019 = vmul.f32 %v6000, %v6014
    %v6020 = vmul.f32 %v6001, %v6016
    %v6022 = vlaneseq
    %v6023 = vshrl.u32 %v6022, 7
    %v6024 = vsub.s32 0, %v6023
    %v6025 = vrot.slane %v5983, %v6024
    %v6027 = vmul.f32 %v6019, %v6025
    %v6028 = vmul.f32 %v6020, %v6025
    %v6030 = vlaneseq
    %v6031 = vshrl.u32 %v6030, 7
    %v6032 = vsub.s32 0, %v6031
    %v6033 = vrot.slane %v5984, %v6032
    %v6035 = vadd.f32 %v6027, %v6033
    %v6036 = vadd.f32 %v6028, %v6033
    %v6037 = vld [vmem:[%s14] sm:$0xff]
    %v6038 = vld [vmem:[%s14 + $0x8] sm:$0xff]
    %v6039 = vld [vmem:[%s14 + $0x10] sm:$0xff]
    %v6040 = vld [vmem:[%s14 + $0x18] sm:$0xff]
    %v6041 = vld [vmem:[%s15] sm:$0x1]
    %v6043 = vlaneseq
    %v6044 = vshrl.u32 %v6043, 7
    %v6045 = vsub.s32 0, %v6044
    %v6046 = vrot.slane %v6041, %v6045
    %v6050 = vrot.slane %v6036, 7
    %v6051 = vsel %vm5988, %v6050, %v6035
    %v6052 = vsel %vm75, %v6051, 0
    %6054 = vmatprep.subr.mxu0 0.0
    %6055 = vmatpush1.msra.mxu0 0.0
    %6056 = vmatprep.subr.mxu0 0.0
    %6057 = vmatpush1.msra.mxu0 0.0
    %6058 = vmatprep.subr.mxu0 0.0
    %6059 = vmatpush1.msra.mxu0 0.0
    %6060 = vmatprep.subr.mxu0 0.0
    %6061 = vmatpush1.msra.mxu0 0.0
    %6062 = vmatprep.subr.mxu0 0.0
    %6063 = vmatpush1.msra.mxu0 0.0
    %6064 = vmatprep.subr.mxu0 0.0
    %6065 = vmatpush1.msra.mxu0 0.0
    %6066 = vmatprep.subr.mxu0 0.0
    %6067 = vmatpush1.msra.mxu0 0.0
    %6068 = vmatprep.subr.mxu0 0.0
    %6069 = vmatpush1.msra.mxu0 0.0
    %6070 = vmatprep.subr.mxu0 0.0
    %6071 = vmatpush1.msra.mxu0 0.0
    %6072 = vmatprep.subr.mxu0 0.0
    %6073 = vmatpush1.msra.mxu0 0.0
    %6074 = vmatprep.subr.mxu0 0.0
    %6075 = vmatpush1.msra.mxu0 0.0
    %6076 = vmatprep.subr.mxu0 0.0
    %6077 = vmatpush1.msra.mxu0 0.0
    %6078 = vmatprep.subr.mxu0 0.0
    %6079 = vmatpush1.msra.mxu0 %v6040
    %6080 = vmatprep.subr.mxu0 0.0
    %6081 = vmatpush1.msra.mxu0 %v6039
    %6082 = vmatprep.subr.mxu0 0.0
    %6083 = vmatpush1.msra.mxu0 %v6038
    %6084 = vmatprep.subr.mxu0 0.0
    %6085 = vmatpush1.msra.mxu0 %v6037
    %6086 = vmatprep.subr.mxu0 0.0
    %6087 = vmatpush2.msra.mxu0 0.0
    %6088 = vmatprep.subr.mxu0 0.0
    %6089 = vmatpush2.msra.mxu0 0.0
    %6090 = vmatprep.subr.mxu0 0.0
    %6091 = vmatpush2.msra.mxu0 0.0
    %6092 = vmatprep.subr.mxu0 0.0
    %6093 = vmatpush2.msra.mxu0 0.0
    %6094 = vmatprep.subr.mxu0 0.0
    %6095 = vmatpush2.msra.mxu0 0.0
    %6096 = vmatprep.subr.mxu0 0.0
    %6097 = vmatpush2.msra.mxu0 0.0
    %6098 = vmatprep.subr.mxu0 0.0
    %6099 = vmatpush2.msra.mxu0 0.0
    %6100 = vmatprep.subr.mxu0 0.0
    %6101 = vmatpush2.msra.mxu0 0.0
    %6102 = vmatprep.subr.mxu0 0.0
    %6103 = vmatpush2.msra.mxu0 0.0
    %6104 = vmatprep.subr.mxu0 0.0
    %6105 = vmatpush2.msra.mxu0 0.0
    %6106 = vmatprep.subr.mxu0 0.0
    %6107 = vmatpush2.msra.mxu0 0.0
    %6108 = vmatprep.subr.mxu0 0.0
    %6109 = vmatpush2.msra.mxu0 0.0
    %6110 = vmatprep.subr.mxu0 0.0
    %6111 = vmatpush2.msra.mxu0 0.0
    %6112 = vmatprep.subr.mxu0 0.0
    %6113 = vmatpush2.msra.mxu0 0.0
    %6114 = vmatprep.subr.mxu0 0.0
    %6115 = vmatpush2.msra.mxu0 0.0
    %6116 = vmatprep.subr.mxu0 0.0
    %6117 = vmatpush2.msra.mxu0 0.0
    %6118 = vmatprep.mubr.f32.mxu0 0.0
    %6119 = vmatmul.mubr.f32.gmra.mxu0 %v6052
    %v6120 = vpop.f32.mrf.mxu0
    %v6121 = vadd.f32 %v6046, %v6120
    %v6122 = vpop.f32.mrf.mxu0
    %6123 = vdwg.mxu0
    %6124 = vst [vmem:[#allocation2] sm:$0x3] %v6121
    // Predicated region
    $region66: #{transformer_forward.1} parent=1 // pred_check
      _
    $region67: #{transformer_forward.1} parent=1 // pred_check_branch
      %6126 = sbr.rel (0) target = $region69
    $region68: #{transformer_forward.1} parent=1 // pred_region
      %s6128 = ssub.s32 32, 32
      %6129 = vsyncadd [#allocation3], %s6128
      %s6131 = sshll.u32 [#allocation2], 4
      %s6132 = int_to_ptr.vmem [resolvable:$true] %s6131
      %6134 = dma.vmem_to_hbm [thread:$0]  %s6132, 32, %s16, [#allocation3]
    $region69: #{transformer_forward.1} parent=1 // pred_fallthru
      _
    // Predicated region
    $region70: #{transformer_forward.1} parent=1 // pred_check
      _
    $region71: #{transformer_forward.1} parent=1 // pred_check_branch
      %6136 = sbr.rel (0) target = $region73
    $region72: #{transformer_forward.1} parent=1 // pred_region
      %6137 = dma.done [#allocation3], 32
    $region73: #{transformer_forward.1} parent=1 // pred_fallthru
      _
    %6138 = vsyncpa [#allocation3], 1

</llo_original>
